<compile_context>
chip_gen: v6e
topology: v6e:2x2x1
jax: 0.10.0
libtpu: 0.0.40
codegen_flags: <defaults>
</compile_context>

<pallas_src>
import functools

import jax
import jax.numpy as jnp
from jax import lax
from jax.experimental import pallas as pl
from jax.experimental.pallas import tpu as pltpu


# ----------------------------- helpers -----------------------------

def _pick_batch_tile(B, N, target_rows=256):
    """Events per grid step: aim for Bb*N ~ target_rows matmul rows, Bb must divide B."""
    bb = max(1, min(B, target_rows // max(N, 1)))
    while B % bb:
        bb -= 1
    return bb


# ----------------------------- Pallas kernels -----------------------------

def _encode_quantize_kernel(xp_ref, w1_ref, b1_ref, w2_ref, b2_ref,
                            cb_ref, cbsq_ref, pos_ref, o_ref,
                            *, subtract_by, multiply_by):
    """Bb events: preprocess part_pt -> frozen encoder MLP -> VQ quantize -> + pos embed."""
    xp = xp_ref[...]                                            # [Bb, N, F] particle-major
    Bb, N, F = xp.shape
    x2 = xp.reshape(Bb * N, F)                                  # flatten events: M = Bb*N rows

    # preprocessing of feature 0 (part_pt) only:
    #   nan_to_num(log(pt) - subtract_by * multiply_by, nan=0, posinf=0, neginf=0)
    v = jnp.log(x2[:, 0:1]) - subtract_by * multiply_by
    v = jnp.where(jnp.abs(v) < jnp.inf, v, 0.0)                 # NaN / +inf / -inf -> 0.0
    col = lax.broadcasted_iota(jnp.int32, x2.shape, 1)
    x2 = jnp.where(col == 0, v, x2)

    cdt = w1_ref.dtype                                          # bf16 MXU operand dtype

    # frozen VQ-VAE encoder (2-layer GELU MLP), f32 accumulation
    z = jax.nn.gelu(jnp.dot(x2.astype(cdt), w1_ref[...],
                            preferred_element_type=jnp.float32) + b1_ref[...],
                    approximate=True)
    z = jnp.dot(z.astype(cdt), w2_ref[...],
                preferred_element_type=jnp.float32) + b2_ref[...]           # [M, D] f32

    # nearest-codebook quantization: argmin_k ||z - cb_k||^2 (||z||^2 constant per row)
    cb = cb_ref[...]                                            # [Kp, D] bf16 (padded)
    Kp = cb.shape[0]
    zc = lax.dot_general(z.astype(cdt), cb, (((1,), (1,)), ((), ())),
                         preferred_element_type=jnp.float32)    # [M, Kp]
    d = cbsq_ref[...] - 2.0 * zc                                # padded entries carry 1e30 norm
    ki = lax.broadcasted_iota(jnp.int32, d.shape, 1)
    dmin = jnp.min(d, axis=-1, keepdims=True)
    idx = jnp.min(jnp.where(d <= dmin, ki, Kp), axis=-1, keepdims=True)     # first argmin
    onehot = (ki == idx).astype(cdt)                            # bf16 one-hot: exact row gather
    q = jnp.dot(onehot, cb, preferred_element_type=jnp.float32)             # [M, D]

    D = q.shape[-1]
    o_ref[...] = (q.reshape(Bb, N, D) + pos_ref[...]).astype(o_ref.dtype)


def _gpt_stack_kernel(h0_ref, kbias_ref, cmask_ref,
                      ln1g_ref, ln1b_ref, wqkv_ref, bqkv_ref,
                      wo_ref, bo_ref, ln2g_ref, ln2b_ref,
                      w1_ref, b1_ref, w2_ref, b2_ref,
                      lnfg_ref, lnfb_ref, o_ref, h_acc,
                      *, n_heads, eps):
    """One GPT block per grid step; h stays resident in VMEM scratch across all blocks."""
    l = pl.program_id(1)
    n_blocks = pl.num_programs(1)

    @pl.when(l == 0)
    def _():
        h_acc[...] = h0_ref[...].astype(jnp.float32)            # load residual stream once

    h = h_acc[...]                                              # [Bb, N, D] f32
    Bb, N, D = h.shape
    Dh = D // n_heads
    M = Bb * N
    cdt = wqkv_ref.dtype                                        # bf16 MXU operand dtype

    def ln(x, g, b):
        mu = jnp.mean(x, axis=-1, keepdims=True)
        xc = x - mu
        var = jnp.mean(xc * xc, axis=-1, keepdims=True)
        return xc * lax.rsqrt(var + eps) * g + b

    # --- attention (fused QKV; 1/sqrt(Dh) already folded into the Q weight columns) ---
    hn = ln(h, ln1g_ref[...], ln1b_ref[...]).reshape(M, D)
    qkv = jnp.dot(hn.astype(cdt), wqkv_ref[...],
                  preferred_element_type=jnp.float32) + bqkv_ref[...]       # [M, 3D] f32
    qkv = qkv.reshape(Bb, N, 3 * D)
    kbias = kbias_ref[...]                                      # [Bb, 1, N] additive mask

    heads = []
    for hd in range(n_heads):                                   # heads stay in the lane dim
        q_h = qkv[:, :, hd * Dh:(hd + 1) * Dh].astype(cdt)                  # [Bb, N, Dh]
        k_h = qkv[:, :, D + hd * Dh:D + (hd + 1) * Dh].astype(cdt)
        v_h = qkv[:, :, 2 * D + hd * Dh:2 * D + (hd + 1) * Dh].astype(cdt)
        s = jnp.einsum('bnd,bmd->bnm', q_h, k_h,
                       preferred_element_type=jnp.float32) + kbias          # [Bb, N, N]
        s = s - jnp.max(s, axis=-1, keepdims=True)
        p = jnp.exp(s)
        p = p * pl.reciprocal(jnp.sum(p, axis=-1, keepdims=True), approx=True)
        heads.append(jnp.einsum('bnm,bmd->bnd', p.astype(cdt), v_h,
                                preferred_element_type=jnp.float32))         # [Bb, N, Dh]
    attn = jnp.concatenate(heads, axis=-1).reshape(M, D)        # head concat (lane dim)
    h = h + (jnp.dot(attn.astype(cdt), wo_ref[...],
                     preferred_element_type=jnp.float32) + bo_ref[...]).reshape(Bb, N, D)

    # --- MLP ---
    hn = ln(h, ln2g_ref[...], ln2b_ref[...]).reshape(M, D)
    m1 = jax.nn.gelu(jnp.dot(hn.astype(cdt), w1_ref[...],
                             preferred_element_type=jnp.float32) + b1_ref[...],
                     approximate=True)
    h = h + (jnp.dot(m1.astype(cdt), w2_ref[...],
                     preferred_element_type=jnp.float32) + b2_ref[...]).reshape(Bb, N, D)

    h_acc[...] = h

    # --- final LayerNorm + zero padded particles, fused into the last block iteration ---
    @pl.when(l == n_blocks - 1)
    def _():
        y = ln(h, lnfg_ref[...], lnfb_ref[...])
        o_ref[...] = (y * cmask_ref[...]).astype(o_ref.dtype)


# ----------------------------- pallas_call wrappers -----------------------------

def encode_quantize(xp, params, pos, *, subtract_by, multiply_by, block_batch=None):
    B, N, F = xp.shape
    D = params["enc_w2"].shape[1]
    Bb = block_batch or _pick_batch_tile(B, N)
    weights = (params["enc_w1"], params["enc_b1"], params["enc_w2"], params["enc_b2"],
               params["codebook_p"], params["cb_sq"], pos)       # all 2-D, resident in VMEM
    return pl.pallas_call(
        functools.partial(_encode_quantize_kernel,
                          subtract_by=subtract_by, multiply_by=multiply_by),
        out_shape=jax.ShapeDtypeStruct((B, N, D), jnp.float32),
        grid=(B // Bb,),
        in_specs=[pl.BlockSpec((Bb, N, F), lambda b: (b, 0, 0))]
                 + [pl.BlockSpec(w.shape, lambda b: (0, 0)) for w in weights],
        out_specs=pl.BlockSpec((Bb, N, D), lambda b: (b, 0, 0)),
        compiler_params=pltpu.CompilerParams(dimension_semantics=("parallel",)),
    )(xp, *weights)


def gpt_stack(h0, key_bias, col_mask, params, *, n_heads, eps=1e-5, block_batch=None):
    B, N, D = h0.shape
    blk = params["blk"]
    L = blk["w_qkv"].shape[0]                                    # n_GPT_blocks
    Bb = block_batch or _pick_batch_tile(B, N)
    # NOTE: on v7x pick Bb so B // Bb stays >= 2 (and even) when B allows it, so both
    #       TensorCores get grid work along the "parallel" batch axis.

    def batch_spec(shape):
        return pl.BlockSpec((Bb,) + tuple(shape[1:]), lambda bt, l: (bt, 0, 0))

    def stacked_spec(arr):                                       # one block's weights per step
        return pl.BlockSpec((None,) + tuple(arr.shape[1:]), lambda bt, l: (l, 0, 0))

    def const_spec(arr):                                         # 2-D, resident
        return pl.BlockSpec(arr.shape, lambda bt, l: (0, 0))

    stacked = [blk[k] for k in ("ln1_g", "ln1_b", "w_qkv", "b_qkv", "wo", "bo",
                                "ln2_g", "ln2_b", "w_mlp1", "b_mlp1", "w_mlp2", "b_mlp2")]

    return pl.pallas_call(
        functools.partial(_gpt_stack_kernel, n_heads=n_heads, eps=eps),
        out_shape=jax.ShapeDtypeStruct((B, N, D), jnp.float32),
        grid=(B // Bb, L),                                       # block axis last, "arbitrary"
        in_specs=[batch_spec(h0.shape), batch_spec(key_bias.shape), batch_spec(col_mask.shape)]
                 + [stacked_spec(w) for w in stacked]
                 + [const_spec(params["lnf_g"]), const_spec(params["lnf_b"])],
        out_specs=pl.BlockSpec((Bb, N, D), lambda bt, l: (bt, 0, 0)),   # resident across l
        scratch_shapes=[pltpu.VMEM((Bb, N, D), jnp.float32)],           # residual stream h
        compiler_params=pltpu.CompilerParams(
            dimension_semantics=("parallel", "arbitrary")),
    )(h0, key_bias, col_mask, *stacked, params["lnf_g"], params["lnf_b"])


# ----------------------------- parameters / forward -----------------------------

def init_params(key, F, D, H_enc, K, n_blocks, max_seq, n_heads,
                compute_dtype=jnp.bfloat16):
    """Deterministic stand-in for the frozen VQ-VAE + pretrained BackboneModel weights.

    Matmul weights are stored in `compute_dtype` (bf16: MXU-native on v6e/v7x, halves weight
    DMA/VMEM everywhere); biases / LN params / positional embeddings stay f32.
    """
    def nrm(k, shape, scale=0.02):
        return (scale * jax.random.normal(k, shape)).astype(jnp.float32)

    keys = iter(jax.random.split(key, 32))
    Dh = D // n_heads

    # frozen codebook: pad K up to a multiple of 128 (lane-dense distances), precompute norms
    codebook = nrm(next(keys), (K, D), 1.0).astype(compute_dtype)
    Kp = ((K + 127) // 128) * 128
    cb_sq = jnp.sum(codebook.astype(jnp.float32) ** 2, axis=-1)[None, :]     # [1, K] f32
    codebook_p = jnp.pad(codebook, ((0, Kp - K), (0, 0)))
    cb_sq = jnp.pad(cb_sq, ((0, 0), (0, Kp - K)), constant_values=1e30)      # pads never win

    # fused QKV weight with 1/sqrt(Dh) folded into the Q columns (bias is zero here; if it
    # were not, its first D entries would be scaled identically)
    w_qkv = nrm(next(keys), (n_blocks, D, 3 * D))
    w_qkv = w_qkv.at[:, :, :D].multiply(1.0 / (Dh ** 0.5))

    p = {
        # frozen VQ-VAE encoder / codebook
        "enc_w1": nrm(next(keys), (F, H_enc), 0.2).astype(compute_dtype),
        "enc_b1": jnp.zeros((1, H_enc), jnp.float32),
        "enc_w2": nrm(next(keys), (H_enc, D), 0.2).astype(compute_dtype),
        "enc_b2": jnp.zeros((1, D), jnp.float32),
        "codebook_p": codebook_p, "cb_sq": cb_sq,
        # GPT backbone
        "pos": nrm(next(keys), (max_seq, D), 0.02),
        "lnf_g": jnp.ones((1, D), jnp.float32), "lnf_b": jnp.zeros((1, D), jnp.float32),
        # per-block weights stacked along a leading n_blocks dim (selected by index_map)
        "blk": {
            "ln1_g": jnp.ones((n_blocks, 1, D), jnp.float32),
            "ln1_b": jnp.zeros((n_blocks, 1, D), jnp.float32),
            "w_qkv": w_qkv.astype(compute_dtype),
            "b_qkv": jnp.zeros((n_blocks, 1, 3 * D), jnp.float32),
            "wo": nrm(next(keys), (n_blocks, D, D)).astype(compute_dtype),
            "bo": jnp.zeros((n_blocks, 1, D), jnp.float32),
            "ln2_g": jnp.ones((n_blocks, 1, D), jnp.float32),
            "ln2_b": jnp.zeros((n_blocks, 1, D), jnp.float32),
            "w_mlp1": nrm(next(keys), (n_blocks, D, 4 * D)).astype(compute_dtype),
            "b_mlp1": jnp.zeros((n_blocks, 1, 4 * D), jnp.float32),
            "w_mlp2": nrm(next(keys), (n_blocks, 4 * D, D)).astype(compute_dtype),
            "b_mlp2": jnp.zeros((n_blocks, 1, D), jnp.float32),
        },
    }
    return p


def embed_part_forward(params, cand_omni_kinematics, cand_mask, *, n_heads,
                       pp_subtract_by, pp_multiply_by):
    B, F, N = cand_omni_kinematics.shape

    # cheap boundary plumbing in the wrapper: particle-major permute of the tiny [B,F,N] input,
    # additive key mask (0 valid / -1e9 padded) and column mask for the final zeroing
    xp = jnp.transpose(cand_omni_kinematics, (0, 2, 1))          # [B, N, F]
    mask = cand_mask.reshape(B, 1, N).astype(jnp.float32)
    key_bias = (mask - 1.0) * 1e9                                # [B, 1, N]
    col_mask = jnp.transpose(mask, (0, 2, 1))                    # [B, N, 1]
    pos = params["pos"][:N]                                      # [N, D]

    # 1) fused: preprocess part_pt -> frozen encoder -> codebook quantize (vq_out['q']) -> +pos
    h0 = encode_quantize(xp, params, pos,
                         subtract_by=pp_subtract_by, multiply_by=pp_multiply_by)

    # 2) BackboneModel: all GPT blocks + final LN + padding-mask zeroing in ONE pallas_call,
    #    h resident in VMEM across the block axis
    return gpt_stack(h0, key_bias, col_mask, params, n_heads=n_heads)


if __name__ == "__main__":
    B, F, N = 2, 4, 8             # batch, kinematic features, particles (seq)
    D, H_enc, K = 128, 64, 64     # embed dim (scaled from 256), encoder hidden, codebook size
    n_heads, n_blocks, max_seq = 4, 3, 128

    key = jax.random.PRNGKey(0)
    k1, k2, k3 = jax.random.split(key, 3)
    kin = jax.random.normal(k1, (B, F, N), dtype=jnp.float32)
    # feature 0 is part_pt (log is taken in the preprocessing) -> make it positive
    kin = kin.at[:, 0, :].set(jnp.exp(jax.random.normal(k2, (B, N))) + 0.1)
    mask = (jax.random.uniform(k3, (B, 1, N)) > 0.2).astype(jnp.float32)

    params = init_params(jax.random.PRNGKey(0), F, D, H_enc, K, n_blocks, max_seq, n_heads)

    fwd = jax.jit(functools.partial(embed_part_forward, n_heads=n_heads,
                                    pp_subtract_by=1.7, pp_multiply_by=0.7))
    out = jax.block_until_ready(fwd(params, kin, mask))
    assert out.shape == (B, N, D)
    assert bool(jnp.all(jnp.isfinite(out)))
    print("KERNEL_OK")
</pallas_src>

<mosaic_0001>
module attributes {stable_mosaic.version = 11 : i64} {
  func.func @_encode_quantize_kernel(%arg0: i32, %arg1: memref<2x8x4xf32, #tpu.memory_space<vmem>>, %arg2: memref<4x64xbf16, #tpu.memory_space<vmem>>, %arg3: memref<1x64xf32, #tpu.memory_space<vmem>>, %arg4: memref<64x128xbf16, #tpu.memory_space<vmem>>, %arg5: memref<1x128xf32, #tpu.memory_space<vmem>>, %arg6: memref<128x128xbf16, #tpu.memory_space<vmem>>, %arg7: memref<1x128xf32, #tpu.memory_space<vmem>>, %arg8: memref<8x128xf32, #tpu.memory_space<vmem>>, %arg9: memref<2x8x128xf32, #tpu.memory_space<vmem>>) attributes {dimension_semantics = [#tpu.dimension_semantics<parallel>], iteration_bounds = array<i64: 1>, scalar_prefetch = 0 : i64, scratch_operands = 0 : i64, tpu.core_type = #tpu.core_type<tc>, window_params = [{transform_indices = @transform_0, window_bounds = array<i64: 2, 8, 4>}, {pipeline_mode = #tpu.pipeline_mode<synchronous>, transform_indices = @transform_1, window_bounds = array<i64: 4, 64>}, {pipeline_mode = #tpu.pipeline_mode<synchronous>, transform_indices = @transform_2, window_bounds = array<i64: 1, 64>}, {pipeline_mode = #tpu.pipeline_mode<synchronous>, transform_indices = @transform_3, window_bounds = array<i64: 64, 128>}, {pipeline_mode = #tpu.pipeline_mode<synchronous>, transform_indices = @transform_4, window_bounds = array<i64: 1, 128>}, {pipeline_mode = #tpu.pipeline_mode<synchronous>, transform_indices = @transform_5, window_bounds = array<i64: 128, 128>}, {pipeline_mode = #tpu.pipeline_mode<synchronous>, transform_indices = @transform_6, window_bounds = array<i64: 1, 128>}, {pipeline_mode = #tpu.pipeline_mode<synchronous>, transform_indices = @transform_7, window_bounds = array<i64: 8, 128>}, {transform_indices = @transform_8, window_bounds = array<i64: 2, 8, 128>}]} {
    %c0 = arith.constant 0 : index
    %c0_0 = arith.constant 0 : index
    %c0_1 = arith.constant 0 : index
    %0 = vector.load %arg1[%c0, %c0_0, %c0_1] : memref<2x8x4xf32, #tpu.memory_space<vmem>>, vector<2x8x4xf32>
    %1 = vector.shape_cast %0 : vector<2x8x4xf32> to vector<16x4xf32>
    %2 = vector.extract_strided_slice %1 {offsets = [0, 0], sizes = [16, 1], strides = [1, 1]} : vector<16x4xf32> to vector<16x1xf32>
    %3 = math.log %2 : vector<16x1xf32>
    %cst = arith.constant 1.190000e+00 : f32
    %4 = vector.broadcast %cst : f32 to vector<16x1xf32>
    %5 = arith.subf %3, %4 : vector<16x1xf32>
    %6 = math.absf %5 : vector<16x1xf32>
    %cst_2 = arith.constant 0x7F800000 : f32
    %7 = vector.broadcast %cst_2 : f32 to vector<16x1xf32>
    %8 = arith.cmpf olt, %6, %7 : vector<16x1xf32>
    %cst_3 = arith.constant 0.000000e+00 : f32
    %9 = vector.broadcast %cst_3 : f32 to vector<16x1xf32>
    %10 = arith.select %8, %5, %9 : vector<16x1xi1>, vector<16x1xf32>
    %11 = tpu.iota {dimensions = array<i32: 1>} : vector<16x4xi32>
    %c0_i32 = arith.constant 0 : i32
    %12 = vector.broadcast %c0_i32 : i32 to vector<16x4xi32>
    %13 = arith.cmpi eq, %11, %12 : vector<16x4xi32>
    %14 = vector.shape_cast %10 : vector<16x1xf32> to vector<16x1xf32>
    %15 = vector.broadcast %14 : vector<16x1xf32> to vector<16x4xf32>
    %16 = arith.select %13, %15, %1 : vector<16x4xi1>, vector<16x4xf32>
    %17 = arith.truncf %16 : vector<16x4xf32> to vector<16x4xbf16>
    %c0_4 = arith.constant 0 : index
    %c0_5 = arith.constant 0 : index
    %18 = vector.load %arg2[%c0_4, %c0_5] : memref<4x64xbf16, #tpu.memory_space<vmem>>, vector<4x64xbf16>
    %cst_6 = arith.constant dense<0.000000e+00> : vector<16x64xf32>
    %19 = tpu.matmul %17, %18, %cst_6 {dimension_numbers = #tpu.dot_dimension_numbers<[1], [0], [0], [1], [0, 0, 1, 1], [], []>} : vector<16x4xbf16>, vector<4x64xbf16>, vector<16x64xf32> -> vector<16x64xf32>
    %c0_7 = arith.constant 0 : index
    %c0_8 = arith.constant 0 : index
    %20 = vector.load %arg3[%c0_7, %c0_8] : memref<1x64xf32, #tpu.memory_space<vmem>>, vector<1x64xf32>
    %21 = vector.broadcast %20 : vector<1x64xf32> to vector<16x64xf32>
    %22 = arith.addf %19, %21 : vector<16x64xf32>
    %23 = arith.mulf %22, %22 : vector<16x64xf32>
    %24 = arith.mulf %22, %23 : vector<16x64xf32>
    %cst_9 = arith.constant 4.471500e-02 : f32
    %25 = vector.broadcast %cst_9 : f32 to vector<16x64xf32>
    %26 = arith.mulf %25, %24 : vector<16x64xf32>
    %27 = arith.addf %22, %26 : vector<16x64xf32>
    %cst_10 = arith.constant 0.797884583 : f32
    %28 = vector.broadcast %cst_10 : f32 to vector<16x64xf32>
    %29 = arith.mulf %28, %27 : vector<16x64xf32>
    %30 = math.tanh %29 : vector<16x64xf32>
    %cst_11 = arith.constant 1.000000e+00 : f32
    %31 = vector.broadcast %cst_11 : f32 to vector<16x64xf32>
    %32 = arith.addf %31, %30 : vector<16x64xf32>
    %cst_12 = arith.constant 5.000000e-01 : f32
    %33 = vector.broadcast %cst_12 : f32 to vector<16x64xf32>
    %34 = arith.mulf %33, %32 : vector<16x64xf32>
    %35 = arith.mulf %22, %34 : vector<16x64xf32>
    %36 = arith.truncf %35 : vector<16x64xf32> to vector<16x64xbf16>
    %c0_13 = arith.constant 0 : index
    %c0_14 = arith.constant 0 : index
    %37 = vector.load %arg4[%c0_13, %c0_14] : memref<64x128xbf16, #tpu.memory_space<vmem>>, vector<64x128xbf16>
    %cst_15 = arith.constant dense<0.000000e+00> : vector<16x128xf32>
    %38 = tpu.matmul %36, %37, %cst_15 {dimension_numbers = #tpu.dot_dimension_numbers<[1], [0], [0], [1], [0, 0, 1, 1], [], []>} : vector<16x64xbf16>, vector<64x128xbf16>, vector<16x128xf32> -> vector<16x128xf32>
    %c0_16 = arith.constant 0 : index
    %c0_17 = arith.constant 0 : index
    %39 = vector.load %arg5[%c0_16, %c0_17] : memref<1x128xf32, #tpu.memory_space<vmem>>, vector<1x128xf32>
    %40 = vector.broadcast %39 : vector<1x128xf32> to vector<16x128xf32>
    %41 = arith.addf %38, %40 : vector<16x128xf32>
    %c0_18 = arith.constant 0 : index
    %c0_19 = arith.constant 0 : index
    %42 = vector.load %arg6[%c0_18, %c0_19] : memref<128x128xbf16, #tpu.memory_space<vmem>>, vector<128x128xbf16>
    %43 = arith.truncf %41 : vector<16x128xf32> to vector<16x128xbf16>
    %cst_20 = arith.constant dense<0.000000e+00> : vector<16x128xf32>
    %44 = tpu.matmul %43, %42, %cst_20 {dimension_numbers = #tpu.dot_dimension_numbers<[1], [1], [0], [0], [0, 0, 1, 0], [], []>} : vector<16x128xbf16>, vector<128x128xbf16>, vector<16x128xf32> -> vector<16x128xf32>
    %c0_21 = arith.constant 0 : index
    %c0_22 = arith.constant 0 : index
    %45 = vector.load %arg7[%c0_21, %c0_22] : memref<1x128xf32, #tpu.memory_space<vmem>>, vector<1x128xf32>
    %cst_23 = arith.constant 2.000000e+00 : f32
    %46 = vector.broadcast %cst_23 : f32 to vector<16x128xf32>
    %47 = arith.mulf %46, %44 : vector<16x128xf32>
    %48 = vector.broadcast %45 : vector<1x128xf32> to vector<16x128xf32>
    %49 = arith.subf %48, %47 : vector<16x128xf32>
    %50 = tpu.iota {dimensions = array<i32: 1>} : vector<16x128xi32>
    %cst_24 = arith.constant dense<0x7F800000> : vector<16xf32>
    %51 = vector.multi_reduction <minimumf>, %49, %cst_24 [1] : vector<16x128xf32> to vector<16xf32>
    %52 = vector.shape_cast %51 : vector<16xf32> to vector<16x1xf32>
    %53 = vector.broadcast %52 : vector<16x1xf32> to vector<16x128xf32>
    %54 = arith.cmpf ole, %49, %53 : vector<16x128xf32>
    %c128_i32 = arith.constant 128 : i32
    %55 = vector.broadcast %c128_i32 : i32 to vector<16x128xi32>
    %56 = arith.select %54, %50, %55 : vector<16x128xi1>, vector<16x128xi32>
    %cst_25 = arith.constant dense<2147483647> : vector<16xi32>
    %57 = vector.multi_reduction <minsi>, %56, %cst_25 [1] : vector<16x128xi32> to vector<16xi32>
    %58 = vector.shape_cast %57 : vector<16xi32> to vector<16x1xi32>
    %59 = vector.broadcast %58 : vector<16x1xi32> to vector<16x128xi32>
    %60 = arith.cmpi eq, %50, %59 : vector<16x128xi32>
    %61 = arith.extui %60 : vector<16x128xi1> to vector<16x128xi32>
    %62 = arith.sitofp %61 : vector<16x128xi32> to vector<16x128xf32>
    %63 = arith.truncf %62 : vector<16x128xf32> to vector<16x128xbf16>
    %cst_26 = arith.constant dense<0.000000e+00> : vector<16x128xf32>
    %64 = tpu.matmul %63, %42, %cst_26 {dimension_numbers = #tpu.dot_dimension_numbers<[1], [0], [0], [1], [0, 0, 1, 1], [], []>} : vector<16x128xbf16>, vector<128x128xbf16>, vector<16x128xf32> -> vector<16x128xf32>
    %65 = vector.shape_cast %64 : vector<16x128xf32> to vector<2x8x128xf32>
    %c0_27 = arith.constant 0 : index
    %c0_28 = arith.constant 0 : index
    %66 = vector.load %arg8[%c0_27, %c0_28] : memref<8x128xf32, #tpu.memory_space<vmem>>, vector<8x128xf32>
    %67 = vector.shape_cast %66 : vector<8x128xf32> to vector<1x8x128xf32>
    %68 = vector.broadcast %67 : vector<1x8x128xf32> to vector<2x8x128xf32>
    %69 = arith.addf %65, %68 : vector<2x8x128xf32>
    %c0_29 = arith.constant 0 : index
    %c0_30 = arith.constant 0 : index
    %c0_31 = arith.constant 0 : index
    %70 = vector.load %arg9[%c0_29, %c0_30, %c0_31] : memref<2x8x128xf32, #tpu.memory_space<vmem>>, vector<2x8x128xf32>
    tpu.vector_store %arg9[%c0_29, %c0_30, %c0_31], %69 {strides = array<i32>} : memref<2x8x128xf32, #tpu.memory_space<vmem>>, vector<2x8x128xf32>,
    return
  }
  func.func @transform_0(%arg0: i32) -> (i32, i32, i32) {
    %c0_i32 = arith.constant 0 : i32
    %c0_i32_0 = arith.constant 0 : i32
    %c0_i32_1 = arith.constant 0 : i32
    return %arg0, %c0_i32, %c0_i32_0 : i32, i32, i32
  }
  func.func @transform_1(%arg0: i32) -> (i32, i32) {
    %c0_i32 = arith.constant 0 : i32
    %c0_i32_0 = arith.constant 0 : i32
    %c0_i32_1 = arith.constant 0 : i32
    return %c0_i32, %c0_i32_0 : i32, i32
  }
  func.func @transform_2(%arg0: i32) -> (i32, i32) {
    %c0_i32 = arith.constant 0 : i32
    %c0_i32_0 = arith.constant 0 : i32
    %c0_i32_1 = arith.constant 0 : i32
    return %c0_i32, %c0_i32_0 : i32, i32
  }
  func.func @transform_3(%arg0: i32) -> (i32, i32) {
    %c0_i32 = arith.constant 0 : i32
    %c0_i32_0 = arith.constant 0 : i32
    %c0_i32_1 = arith.constant 0 : i32
    return %c0_i32, %c0_i32_0 : i32, i32
  }
  func.func @transform_4(%arg0: i32) -> (i32, i32) {
    %c0_i32 = arith.constant 0 : i32
    %c0_i32_0 = arith.constant 0 : i32
    %c0_i32_1 = arith.constant 0 : i32
    return %c0_i32, %c0_i32_0 : i32, i32
  }
  func.func @transform_5(%arg0: i32) -> (i32, i32) {
    %c0_i32 = arith.constant 0 : i32
    %c0_i32_0 = arith.constant 0 : i32
    %c0_i32_1 = arith.constant 0 : i32
    return %c0_i32, %c0_i32_0 : i32, i32
  }
  func.func @transform_6(%arg0: i32) -> (i32, i32) {
    %c0_i32 = arith.constant 0 : i32
    %c0_i32_0 = arith.constant 0 : i32
    %c0_i32_1 = arith.constant 0 : i32
    return %c0_i32, %c0_i32_0 : i32, i32
  }
  func.func @transform_7(%arg0: i32) -> (i32, i32) {
    %c0_i32 = arith.constant 0 : i32
    %c0_i32_0 = arith.constant 0 : i32
    %c0_i32_1 = arith.constant 0 : i32
    return %c0_i32, %c0_i32_0 : i32, i32
  }
  func.func @transform_8(%arg0: i32) -> (i32, i32, i32) {
    %c0_i32 = arith.constant 0 : i32
    %c0_i32_0 = arith.constant 0 : i32
    %c0_i32_1 = arith.constant 0 : i32
    return %arg0, %c0_i32, %c0_i32_0 : i32, i32, i32
  }
}

module attributes {stable_mosaic.version = 11 : i64} {
  func.func @_gpt_stack_kernel(%arg0: i32, %arg1: i32, %arg2: memref<2x8x128xf32, #tpu.memory_space<vmem>>, %arg3: memref<2x1x8xf32, #tpu.memory_space<vmem>>, %arg4: memref<2x8x1xf32, #tpu.memory_space<vmem>>, %arg5: memref<1x1x128xf32, #tpu.memory_space<vmem>>, %arg6: memref<1x1x128xf32, #tpu.memory_space<vmem>>, %arg7: memref<1x128x384xbf16, #tpu.memory_space<vmem>>, %arg8: memref<1x1x384xf32, #tpu.memory_space<vmem>>, %arg9: memref<1x128x128xbf16, #tpu.memory_space<vmem>>, %arg10: memref<1x1x128xf32, #tpu.memory_space<vmem>>, %arg11: memref<1x1x128xf32, #tpu.memory_space<vmem>>, %arg12: memref<1x1x128xf32, #tpu.memory_space<vmem>>, %arg13: memref<1x128x512xbf16, #tpu.memory_space<vmem>>, %arg14: memref<1x1x512xf32, #tpu.memory_space<vmem>>, %arg15: memref<1x512x128xbf16, #tpu.memory_space<vmem>>, %arg16: memref<1x1x128xf32, #tpu.memory_space<vmem>>, %arg17: memref<1x128xf32, #tpu.memory_space<vmem>>, %arg18: memref<1x128xf32, #tpu.memory_space<vmem>>, %arg19: memref<2x8x128xf32, #tpu.memory_space<vmem>>, %arg20: memref<2x8x128xf32, #tpu.memory_space<vmem>>) attributes {dimension_semantics = [#tpu.dimension_semantics<parallel>, #tpu.dimension_semantics<arbitrary>], iteration_bounds = array<i64: 1, 3>, scalar_prefetch = 0 : i64, scratch_operands = 1 : i64, tpu.core_type = #tpu.core_type<tc>, window_params = [{transform_indices = @transform_0, window_bounds = array<i64: 2, 8, 128>}, {transform_indices = @transform_1, window_bounds = array<i64: 2, 1, 8>}, {transform_indices = @transform_2, window_bounds = array<i64: 2, 8, 1>}, {transform_indices = @transform_3, window_bounds = array<i64: 1, 1, 128>}, {transform_indices = @transform_4, window_bounds = array<i64: 1, 1, 128>}, {transform_indices = @transform_5, window_bounds = array<i64: 1, 128, 384>}, {transform_indices = @transform_6, window_bounds = array<i64: 1, 1, 384>}, {transform_indices = @transform_7, window_bounds = array<i64: 1, 128, 128>}, {transform_indices = @transform_8, window_bounds = array<i64: 1, 1, 128>}, {transform_indices = @transform_9, window_bounds = array<i64: 1, 1, 128>}, {transform_indices = @transform_10, window_bounds = array<i64: 1, 1, 128>}, {transform_indices = @transform_11, window_bounds = array<i64: 1, 128, 512>}, {transform_indices = @transform_12, window_bounds = array<i64: 1, 1, 512>}, {transform_indices = @transform_13, window_bounds = array<i64: 1, 512, 128>}, {transform_indices = @transform_14, window_bounds = array<i64: 1, 1, 128>}, {pipeline_mode = #tpu.pipeline_mode<synchronous>, transform_indices = @transform_15, window_bounds = array<i64: 1, 128>}, {pipeline_mode = #tpu.pipeline_mode<synchronous>, transform_indices = @transform_16, window_bounds = array<i64: 1, 128>}, {transform_indices = @transform_17, window_bounds = array<i64: 2, 8, 128>}]} {
    %c0_i32 = arith.constant 0 : i32
    %0 = arith.cmpi eq, %arg1, %c0_i32 : i32
    %1 = arith.extui %0 : i1 to i32
    %c0_i32_0 = arith.constant 0 : i32
    %2 = arith.cmpi ne, %1, %c0_i32_0 : i32
    scf.if %2 {
      %c0_79 = arith.constant 0 : index
      %c0_80 = arith.constant 0 : index
      %c0_81 = arith.constant 0 : index
      %199 = vector.load %arg2[%c0_79, %c0_80, %c0_81] : memref<2x8x128xf32, #tpu.memory_space<vmem>>, vector<2x8x128xf32>
      %c0_82 = arith.constant 0 : index
      %c0_83 = arith.constant 0 : index
      %c0_84 = arith.constant 0 : index
      %200 = vector.load %arg20[%c0_82, %c0_83, %c0_84] : memref<2x8x128xf32, #tpu.memory_space<vmem>>, vector<2x8x128xf32>
      tpu.vector_store %arg20[%c0_82, %c0_83, %c0_84], %199 {strides = array<i32>} : memref<2x8x128xf32, #tpu.memory_space<vmem>>, vector<2x8x128xf32>,
    } else {
    }
    %c0 = arith.constant 0 : index
    %c0_1 = arith.constant 0 : index
    %c0_2 = arith.constant 0 : index
    %3 = vector.load %arg20[%c0, %c0_1, %c0_2] : memref<2x8x128xf32, #tpu.memory_space<vmem>>, vector<2x8x128xf32>
    %c0_3 = arith.constant 0 : index
    %c0_4 = arith.constant 0 : index
    %c0_5 = arith.constant 0 : index
    %4 = vector.load %arg5[%c0_3, %c0_4, %c0_5] : memref<1x1x128xf32, #tpu.memory_space<vmem>>, vector<1x1x128xf32>
    %5 = vector.shape_cast %4 : vector<1x1x128xf32> to vector<1x128xf32>
    %c0_6 = arith.constant 0 : index
    %c0_7 = arith.constant 0 : index
    %c0_8 = arith.constant 0 : index
    %6 = vector.load %arg6[%c0_6, %c0_7, %c0_8] : memref<1x1x128xf32, #tpu.memory_space<vmem>>, vector<1x1x128xf32>
    %7 = vector.shape_cast %6 : vector<1x1x128xf32> to vector<1x128xf32>
    %cst = arith.constant dense<0.000000e+00> : vector<2x8xf32>
    %8 = vector.multi_reduction <add>, %3, %cst [2] : vector<2x8x128xf32> to vector<2x8xf32>
    %9 = vector.shape_cast %8 : vector<2x8xf32> to vector<2x8x1xf32>
    %cst_9 = arith.constant 1.280000e+02 : f32
    %10 = vector.broadcast %cst_9 : f32 to vector<2x8x1xf32>
    %11 = arith.divf %9, %10 : vector<2x8x1xf32>
    %12 = vector.broadcast %11 : vector<2x8x1xf32> to vector<2x8x128xf32>
    %13 = arith.subf %3, %12 : vector<2x8x128xf32>
    %14 = arith.mulf %13, %13 : vector<2x8x128xf32>
    %cst_10 = arith.constant dense<0.000000e+00> : vector<2x8xf32>
    %15 = vector.multi_reduction <add>, %14, %cst_10 [2] : vector<2x8x128xf32> to vector<2x8xf32>
    %16 = vector.shape_cast %15 : vector<2x8xf32> to vector<2x8x1xf32>
    %cst_11 = arith.constant 1.280000e+02 : f32
    %17 = vector.broadcast %cst_11 : f32 to vector<2x8x1xf32>
    %18 = arith.divf %16, %17 : vector<2x8x1xf32>
    %cst_12 = arith.constant 9.99999974E-6 : f32
    %19 = vector.broadcast %cst_12 : f32 to vector<2x8x1xf32>
    %20 = arith.addf %18, %19 : vector<2x8x1xf32>
    %21 = math.rsqrt %20 : vector<2x8x1xf32>
    %22 = vector.broadcast %21 : vector<2x8x1xf32> to vector<2x8x128xf32>
    %23 = arith.mulf %13, %22 : vector<2x8x128xf32>
    %24 = vector.shape_cast %5 : vector<1x128xf32> to vector<1x1x128xf32>
    %25 = vector.broadcast %24 : vector<1x1x128xf32> to vector<2x8x128xf32>
    %26 = arith.mulf %23, %25 : vector<2x8x128xf32>
    %27 = vector.shape_cast %7 : vector<1x128xf32> to vector<1x1x128xf32>
    %28 = vector.broadcast %27 : vector<1x1x128xf32> to vector<2x8x128xf32>
    %29 = arith.addf %26, %28 : vector<2x8x128xf32>
    %30 = vector.shape_cast %29 : vector<2x8x128xf32> to vector<16x128xf32>
    %31 = arith.truncf %30 : vector<16x128xf32> to vector<16x128xbf16>
    %c0_13 = arith.constant 0 : index
    %c0_14 = arith.constant 0 : index
    %c0_15 = arith.constant 0 : index
    %32 = vector.load %arg7[%c0_13, %c0_14, %c0_15] : memref<1x128x384xbf16, #tpu.memory_space<vmem>>, vector<1x128x384xbf16>
    %33 = vector.shape_cast %32 : vector<1x128x384xbf16> to vector<128x384xbf16>
    %cst_16 = arith.constant dense<0.000000e+00> : vector<16x384xf32>
    %34 = tpu.matmul %31, %33, %cst_16 {dimension_numbers = #tpu.dot_dimension_numbers<[1], [0], [0], [1], [0, 0, 1, 1], [], []>} : vector<16x128xbf16>, vector<128x384xbf16>, vector<16x384xf32> -> vector<16x384xf32>
    %c0_17 = arith.constant 0 : index
    %c0_18 = arith.constant 0 : index
    %c0_19 = arith.constant 0 : index
    %35 = vector.load %arg8[%c0_17, %c0_18, %c0_19] : memref<1x1x384xf32, #tpu.memory_space<vmem>>, vector<1x1x384xf32>
    %36 = vector.shape_cast %35 : vector<1x1x384xf32> to vector<1x384xf32>
    %37 = vector.broadcast %36 : vector<1x384xf32> to vector<16x384xf32>
    %38 = arith.addf %34, %37 : vector<16x384xf32>
    %39 = vector.shape_cast %38 : vector<16x384xf32> to vector<2x8x384xf32>
    %c0_20 = arith.constant 0 : index
    %c0_21 = arith.constant 0 : index
    %c0_22 = arith.constant 0 : index
    %40 = vector.load %arg3[%c0_20, %c0_21, %c0_22] : memref<2x1x8xf32, #tpu.memory_space<vmem>>, vector<2x1x8xf32>
    %41 = vector.extract_strided_slice %39 {offsets = [0, 0, 0], sizes = [2, 8, 32], strides = [1, 1, 1]} : vector<2x8x384xf32> to vector<2x8x32xf32>
    %42 = arith.truncf %41 : vector<2x8x32xf32> to vector<2x8x32xbf16>
    %43 = vector.extract_strided_slice %39 {offsets = [0, 0, 128], sizes = [2, 8, 32], strides = [1, 1, 1]} : vector<2x8x384xf32> to vector<2x8x32xf32>
    %44 = arith.truncf %43 : vector<2x8x32xf32> to vector<2x8x32xbf16>
    %45 = vector.extract_strided_slice %39 {offsets = [0, 0, 256], sizes = [2, 8, 32], strides = [1, 1, 1]} : vector<2x8x384xf32> to vector<2x8x32xf32>
    %46 = arith.truncf %45 : vector<2x8x32xf32> to vector<2x8x32xbf16>
    "tpu.trace_start"() <{level = 10 : i32, message = "bnd,bmd->bnm"}> : () -> ()
    %cst_23 = arith.constant dense<0.000000e+00> : vector<2x8x8xf32>
    %47 = tpu.matmul %42, %44, %cst_23 {dimension_numbers = #tpu.dot_dimension_numbers<[2], [2], [1], [1], [0, 0, 0, 1, 1, 1], [0], [0]>} : vector<2x8x32xbf16>, vector<2x8x32xbf16>, vector<2x8x8xf32> -> vector<2x8x8xf32>
    "tpu.trace_stop"() : () -> ()
    %48 = vector.broadcast %40 : vector<2x1x8xf32> to vector<2x8x8xf32>
    %49 = arith.addf %47, %48 : vector<2x8x8xf32>
    %cst_24 = arith.constant dense<0xFF800000> : vector<2x8xf32>
    %50 = vector.multi_reduction <maximumf>, %49, %cst_24 [2] : vector<2x8x8xf32> to vector<2x8xf32>
    %51 = vector.shape_cast %50 : vector<2x8xf32> to vector<2x8x1xf32>
    %52 = vector.broadcast %51 : vector<2x8x1xf32> to vector<2x8x8xf32>
    %53 = arith.subf %49, %52 : vector<2x8x8xf32>
    %54 = math.exp %53 : vector<2x8x8xf32>
    %cst_25 = arith.constant dense<0.000000e+00> : vector<2x8xf32>
    %55 = vector.multi_reduction <add>, %54, %cst_25 [2] : vector<2x8x8xf32> to vector<2x8xf32>
    %56 = vector.shape_cast %55 : vector<2x8xf32> to vector<2x8x1xf32>
    %57 = tpu.reciprocal %56 {approx = true} : vector<2x8x1xf32> -> vector<2x8x1xf32>
    %58 = vector.broadcast %57 : vector<2x8x1xf32> to vector<2x8x8xf32>
    %59 = arith.mulf %54, %58 : vector<2x8x8xf32>
    %60 = arith.truncf %59 : vector<2x8x8xf32> to vector<2x8x8xbf16>
    "tpu.trace_start"() <{level = 10 : i32, message = "bnm,bmd->bnd"}> : () -> ()
    %cst_26 = arith.constant dense<0.000000e+00> : vector<2x8x32xf32>
    %61 = tpu.matmul %60, %46, %cst_26 {dimension_numbers = #tpu.dot_dimension_numbers<[2], [1], [1], [2], [0, 0, 0, 1, 1, 2], [0], [0]>} : vector<2x8x8xbf16>, vector<2x8x32xbf16>, vector<2x8x32xf32> -> vector<2x8x32xf32>
    "tpu.trace_stop"() : () -> ()
    %62 = vector.extract_strided_slice %39 {offsets = [0, 0, 32], sizes = [2, 8, 32], strides = [1, 1, 1]} : vector<2x8x384xf32> to vector<2x8x32xf32>
    %63 = arith.truncf %62 : vector<2x8x32xf32> to vector<2x8x32xbf16>
    %64 = vector.extract_strided_slice %39 {offsets = [0, 0, 160], sizes = [2, 8, 32], strides = [1, 1, 1]} : vector<2x8x384xf32> to vector<2x8x32xf32>
    %65 = arith.truncf %64 : vector<2x8x32xf32> to vector<2x8x32xbf16>
    %66 = vector.extract_strided_slice %39 {offsets = [0, 0, 288], sizes = [2, 8, 32], strides = [1, 1, 1]} : vector<2x8x384xf32> to vector<2x8x32xf32>
    %67 = arith.truncf %66 : vector<2x8x32xf32> to vector<2x8x32xbf16>
    "tpu.trace_start"() <{level = 10 : i32, message = "bnd,bmd->bnm"}> : () -> ()
    %cst_27 = arith.constant dense<0.000000e+00> : vector<2x8x8xf32>
    %68 = tpu.matmul %63, %65, %cst_27 {dimension_numbers = #tpu.dot_dimension_numbers<[2], [2], [1], [1], [0, 0, 0, 1, 1, 1], [0], [0]>} : vector<2x8x32xbf16>, vector<2x8x32xbf16>, vector<2x8x8xf32> -> vector<2x8x8xf32>
    "tpu.trace_stop"() : () -> ()
    %69 = vector.broadcast %40 : vector<2x1x8xf32> to vector<2x8x8xf32>
    %70 = arith.addf %68, %69 : vector<2x8x8xf32>
    %cst_28 = arith.constant dense<0xFF800000> : vector<2x8xf32>
    %71 = vector.multi_reduction <maximumf>, %70, %cst_28 [2] : vector<2x8x8xf32> to vector<2x8xf32>
    %72 = vector.shape_cast %71 : vector<2x8xf32> to vector<2x8x1xf32>
    %73 = vector.broadcast %72 : vector<2x8x1xf32> to vector<2x8x8xf32>
    %74 = arith.subf %70, %73 : vector<2x8x8xf32>
    %75 = math.exp %74 : vector<2x8x8xf32>
    %cst_29 = arith.constant dense<0.000000e+00> : vector<2x8xf32>
    %76 = vector.multi_reduction <add>, %75, %cst_29 [2] : vector<2x8x8xf32> to vector<2x8xf32>
    %77 = vector.shape_cast %76 : vector<2x8xf32> to vector<2x8x1xf32>
    %78 = tpu.reciprocal %77 {approx = true} : vector<2x8x1xf32> -> vector<2x8x1xf32>
    %79 = vector.broadcast %78 : vector<2x8x1xf32> to vector<2x8x8xf32>
    %80 = arith.mulf %75, %79 : vector<2x8x8xf32>
    %81 = arith.truncf %80 : vector<2x8x8xf32> to vector<2x8x8xbf16>
    "tpu.trace_start"() <{level = 10 : i32, message = "bnm,bmd->bnd"}> : () -> ()
    %cst_30 = arith.constant dense<0.000000e+00> : vector<2x8x32xf32>
    %82 = tpu.matmul %81, %67, %cst_30 {dimension_numbers = #tpu.dot_dimension_numbers<[2], [1], [1], [2], [0, 0, 0, 1, 1, 2], [0], [0]>} : vector<2x8x8xbf16>, vector<2x8x32xbf16>, vector<2x8x32xf32> -> vector<2x8x32xf32>
    "tpu.trace_stop"() : () -> ()
    %83 = vector.extract_strided_slice %39 {offsets = [0, 0, 64], sizes = [2, 8, 32], strides = [1, 1, 1]} : vector<2x8x384xf32> to vector<2x8x32xf32>
    %84 = arith.truncf %83 : vector<2x8x32xf32> to vector<2x8x32xbf16>
    %85 = vector.extract_strided_slice %39 {offsets = [0, 0, 192], sizes = [2, 8, 32], strides = [1, 1, 1]} : vector<2x8x384xf32> to vector<2x8x32xf32>
    %86 = arith.truncf %85 : vector<2x8x32xf32> to vector<2x8x32xbf16>
    %87 = vector.extract_strided_slice %39 {offsets = [0, 0, 320], sizes = [2, 8, 32], strides = [1, 1, 1]} : vector<2x8x384xf32> to vector<2x8x32xf32>
    %88 = arith.truncf %87 : vector<2x8x32xf32> to vector<2x8x32xbf16>
    "tpu.trace_start"() <{level = 10 : i32, message = "bnd,bmd->bnm"}> : () -> ()
    %cst_31 = arith.constant dense<0.000000e+00> : vector<2x8x8xf32>
    %89 = tpu.matmul %84, %86, %cst_31 {dimension_numbers = #tpu.dot_dimension_numbers<[2], [2], [1], [1], [0, 0, 0, 1, 1, 1], [0], [0]>} : vector<2x8x32xbf16>, vector<2x8x32xbf16>, vector<2x8x8xf32> -> vector<2x8x8xf32>
    "tpu.trace_stop"() : () -> ()
    %90 = vector.broadcast %40 : vector<2x1x8xf32> to vector<2x8x8xf32>
    %91 = arith.addf %89, %90 : vector<2x8x8xf32>
    %cst_32 = arith.constant dense<0xFF800000> : vector<2x8xf32>
    %92 = vector.multi_reduction <maximumf>, %91, %cst_32 [2] : vector<2x8x8xf32> to vector<2x8xf32>
    %93 = vector.shape_cast %92 : vector<2x8xf32> to vector<2x8x1xf32>
    %94 = vector.broadcast %93 : vector<2x8x1xf32> to vector<2x8x8xf32>
    %95 = arith.subf %91, %94 : vector<2x8x8xf32>
    %96 = math.exp %95 : vector<2x8x8xf32>
    %cst_33 = arith.constant dense<0.000000e+00> : vector<2x8xf32>
    %97 = vector.multi_reduction <add>, %96, %cst_33 [2] : vector<2x8x8xf32> to vector<2x8xf32>
    %98 = vector.shape_cast %97 : vector<2x8xf32> to vector<2x8x1xf32>
    %99 = tpu.reciprocal %98 {approx = true} : vector<2x8x1xf32> -> vector<2x8x1xf32>
    %100 = vector.broadcast %99 : vector<2x8x1xf32> to vector<2x8x8xf32>
    %101 = arith.mulf %96, %100 : vector<2x8x8xf32>
    %102 = arith.truncf %101 : vector<2x8x8xf32> to vector<2x8x8xbf16>
    "tpu.trace_start"() <{level = 10 : i32, message = "bnm,bmd->bnd"}> : () -> ()
    %cst_34 = arith.constant dense<0.000000e+00> : vector<2x8x32xf32>
    %103 = tpu.matmul %102, %88, %cst_34 {dimension_numbers = #tpu.dot_dimension_numbers<[2], [1], [1], [2], [0, 0, 0, 1, 1, 2], [0], [0]>} : vector<2x8x8xbf16>, vector<2x8x32xbf16>, vector<2x8x32xf32> -> vector<2x8x32xf32>
    "tpu.trace_stop"() : () -> ()
    %104 = vector.extract_strided_slice %39 {offsets = [0, 0, 96], sizes = [2, 8, 32], strides = [1, 1, 1]} : vector<2x8x384xf32> to vector<2x8x32xf32>
    %105 = arith.truncf %104 : vector<2x8x32xf32> to vector<2x8x32xbf16>
    %106 = vector.extract_strided_slice %39 {offsets = [0, 0, 224], sizes = [2, 8, 32], strides = [1, 1, 1]} : vector<2x8x384xf32> to vector<2x8x32xf32>
    %107 = arith.truncf %106 : vector<2x8x32xf32> to vector<2x8x32xbf16>
    %108 = vector.extract_strided_slice %39 {offsets = [0, 0, 352], sizes = [2, 8, 32], strides = [1, 1, 1]} : vector<2x8x384xf32> to vector<2x8x32xf32>
    %109 = arith.truncf %108 : vector<2x8x32xf32> to vector<2x8x32xbf16>
    "tpu.trace_start"() <{level = 10 : i32, message = "bnd,bmd->bnm"}> : () -> ()
    %cst_35 = arith.constant dense<0.000000e+00> : vector<2x8x8xf32>
    %110 = tpu.matmul %105, %107, %cst_35 {dimension_numbers = #tpu.dot_dimension_numbers<[2], [2], [1], [1], [0, 0, 0, 1, 1, 1], [0], [0]>} : vector<2x8x32xbf16>, vector<2x8x32xbf16>, vector<2x8x8xf32> -> vector<2x8x8xf32>
    "tpu.trace_stop"() : () -> ()
    %111 = vector.broadcast %40 : vector<2x1x8xf32> to vector<2x8x8xf32>
    %112 = arith.addf %110, %111 : vector<2x8x8xf32>
    %cst_36 = arith.constant dense<0xFF800000> : vector<2x8xf32>
    %113 = vector.multi_reduction <maximumf>, %112, %cst_36 [2] : vector<2x8x8xf32> to vector<2x8xf32>
    %114 = vector.shape_cast %113 : vector<2x8xf32> to vector<2x8x1xf32>
    %115 = vector.broadcast %114 : vector<2x8x1xf32> to vector<2x8x8xf32>
    %116 = arith.subf %112, %115 : vector<2x8x8xf32>
    %117 = math.exp %116 : vector<2x8x8xf32>
    %cst_37 = arith.constant dense<0.000000e+00> : vector<2x8xf32>
    %118 = vector.multi_reduction <add>, %117, %cst_37 [2] : vector<2x8x8xf32> to vector<2x8xf32>
    %119 = vector.shape_cast %118 : vector<2x8xf32> to vector<2x8x1xf32>
    %120 = tpu.reciprocal %119 {approx = true} : vector<2x8x1xf32> -> vector<2x8x1xf32>
    %121 = vector.broadcast %120 : vector<2x8x1xf32> to vector<2x8x8xf32>
    %122 = arith.mulf %117, %121 : vector<2x8x8xf32>
    %123 = arith.truncf %122 : vector<2x8x8xf32> to vector<2x8x8xbf16>
    "tpu.trace_start"() <{level = 10 : i32, message = "bnm,bmd->bnd"}> : () -> ()
    %cst_38 = arith.constant dense<0.000000e+00> : vector<2x8x32xf32>
    %124 = tpu.matmul %123, %109, %cst_38 {dimension_numbers = #tpu.dot_dimension_numbers<[2], [1], [1], [2], [0, 0, 0, 1, 1, 2], [0], [0]>} : vector<2x8x8xbf16>, vector<2x8x32xbf16>, vector<2x8x32xf32> -> vector<2x8x32xf32>
    "tpu.trace_stop"() : () -> ()
    %125 = tpu.concatenate %61, %82, %103, %124 in 2 : vector<2x8x32xf32>, vector<2x8x32xf32>, vector<2x8x32xf32>, vector<2x8x32xf32> -> vector<2x8x128xf32>
    %126 = vector.shape_cast %125 : vector<2x8x128xf32> to vector<16x128xf32>
    %127 = arith.truncf %126 : vector<16x128xf32> to vector<16x128xbf16>
    %c0_39 = arith.constant 0 : index
    %c0_40 = arith.constant 0 : index
    %c0_41 = arith.constant 0 : index
    %128 = vector.load %arg9[%c0_39, %c0_40, %c0_41] : memref<1x128x128xbf16, #tpu.memory_space<vmem>>, vector<1x128x128xbf16>
    %129 = vector.shape_cast %128 : vector<1x128x128xbf16> to vector<128x128xbf16>
    %cst_42 = arith.constant dense<0.000000e+00> : vector<16x128xf32>
    %130 = tpu.matmul %127, %129, %cst_42 {dimension_numbers = #tpu.dot_dimension_numbers<[1], [0], [0], [1], [0, 0, 1, 1], [], []>} : vector<16x128xbf16>, vector<128x128xbf16>, vector<16x128xf32> -> vector<16x128xf32>
    %c0_43 = arith.constant 0 : index
    %c0_44 = arith.constant 0 : index
    %c0_45 = arith.constant 0 : index
    %131 = vector.load %arg10[%c0_43, %c0_44, %c0_45] : memref<1x1x128xf32, #tpu.memory_space<vmem>>, vector<1x1x128xf32>
    %132 = vector.shape_cast %131 : vector<1x1x128xf32> to vector<1x128xf32>
    %133 = vector.broadcast %132 : vector<1x128xf32> to vector<16x128xf32>
    %134 = arith.addf %130, %133 : vector<16x128xf32>
    %135 = vector.shape_cast %134 : vector<16x128xf32> to vector<2x8x128xf32>
    %136 = arith.addf %3, %135 : vector<2x8x128xf32>
    %c0_46 = arith.constant 0 : index
    %c0_47 = arith.constant 0 : index
    %c0_48 = arith.constant 0 : index
    %137 = vector.load %arg11[%c0_46, %c0_47, %c0_48] : memref<1x1x128xf32, #tpu.memory_space<vmem>>, vector<1x1x128xf32>
    %138 = vector.shape_cast %137 : vector<1x1x128xf32> to vector<1x128xf32>
    %c0_49 = arith.constant 0 : index
    %c0_50 = arith.constant 0 : index
    %c0_51 = arith.constant 0 : index
    %139 = vector.load %arg12[%c0_49, %c0_50, %c0_51] : memref<1x1x128xf32, #tpu.memory_space<vmem>>, vector<1x1x128xf32>
    %140 = vector.shape_cast %139 : vector<1x1x128xf32> to vector<1x128xf32>
    %cst_52 = arith.constant dense<0.000000e+00> : vector<2x8xf32>
    %141 = vector.multi_reduction <add>, %136, %cst_52 [2] : vector<2x8x128xf32> to vector<2x8xf32>
    %142 = vector.shape_cast %141 : vector<2x8xf32> to vector<2x8x1xf32>
    %cst_53 = arith.constant 1.280000e+02 : f32
    %143 = vector.broadcast %cst_53 : f32 to vector<2x8x1xf32>
    %144 = arith.divf %142, %143 : vector<2x8x1xf32>
    %145 = vector.broadcast %144 : vector<2x8x1xf32> to vector<2x8x128xf32>
    %146 = arith.subf %136, %145 : vector<2x8x128xf32>
    %147 = arith.mulf %146, %146 : vector<2x8x128xf32>
    %cst_54 = arith.constant dense<0.000000e+00> : vector<2x8xf32>
    %148 = vector.multi_reduction <add>, %147, %cst_54 [2] : vector<2x8x128xf32> to vector<2x8xf32>
    %149 = vector.shape_cast %148 : vector<2x8xf32> to vector<2x8x1xf32>
    %cst_55 = arith.constant 1.280000e+02 : f32
    %150 = vector.broadcast %cst_55 : f32 to vector<2x8x1xf32>
    %151 = arith.divf %149, %150 : vector<2x8x1xf32>
    %cst_56 = arith.constant 9.99999974E-6 : f32
    %152 = vector.broadcast %cst_56 : f32 to vector<2x8x1xf32>
    %153 = arith.addf %151, %152 : vector<2x8x1xf32>
    %154 = math.rsqrt %153 : vector<2x8x1xf32>
    %155 = vector.broadcast %154 : vector<2x8x1xf32> to vector<2x8x128xf32>
    %156 = arith.mulf %146, %155 : vector<2x8x128xf32>
    %157 = vector.shape_cast %138 : vector<1x128xf32> to vector<1x1x128xf32>
    %158 = vector.broadcast %157 : vector<1x1x128xf32> to vector<2x8x128xf32>
    %159 = arith.mulf %156, %158 : vector<2x8x128xf32>
    %160 = vector.shape_cast %140 : vector<1x128xf32> to vector<1x1x128xf32>
    %161 = vector.broadcast %160 : vector<1x1x128xf32> to vector<2x8x128xf32>
    %162 = arith.addf %159, %161 : vector<2x8x128xf32>
    %163 = vector.shape_cast %162 : vector<2x8x128xf32> to vector<16x128xf32>
    %164 = arith.truncf %163 : vector<16x128xf32> to vector<16x128xbf16>
    %c0_57 = arith.constant 0 : index
    %c0_58 = arith.constant 0 : index
    %c0_59 = arith.constant 0 : index
    %165 = vector.load %arg13[%c0_57, %c0_58, %c0_59] : memref<1x128x512xbf16, #tpu.memory_space<vmem>>, vector<1x128x512xbf16>
    %166 = vector.shape_cast %165 : vector<1x128x512xbf16> to vector<128x512xbf16>
    %cst_60 = arith.constant dense<0.000000e+00> : vector<16x512xf32>
    %167 = tpu.matmul %164, %166, %cst_60 {dimension_numbers = #tpu.dot_dimension_numbers<[1], [0], [0], [1], [0, 0, 1, 1], [], []>} : vector<16x128xbf16>, vector<128x512xbf16>, vector<16x512xf32> -> vector<16x512xf32>
    %c0_61 = arith.constant 0 : index
    %c0_62 = arith.constant 0 : index
    %c0_63 = arith.constant 0 : index
    %168 = vector.load %arg14[%c0_61, %c0_62, %c0_63] : memref<1x1x512xf32, #tpu.memory_space<vmem>>, vector<1x1x512xf32>
    %169 = vector.shape_cast %168 : vector<1x1x512xf32> to vector<1x512xf32>
    %170 = vector.broadcast %169 : vector<1x512xf32> to vector<16x512xf32>
    %171 = arith.addf %167, %170 : vector<16x512xf32>
    %172 = arith.mulf %171, %171 : vector<16x512xf32>
    %173 = arith.mulf %171, %172 : vector<16x512xf32>
    %cst_64 = arith.constant 4.471500e-02 : f32
    %174 = vector.broadcast %cst_64 : f32 to vector<16x512xf32>
    %175 = arith.mulf %174, %173 : vector<16x512xf32>
    %176 = arith.addf %171, %175 : vector<16x512xf32>
    %cst_65 = arith.constant 0.797884583 : f32
    %177 = vector.broadcast %cst_65 : f32 to vector<16x512xf32>
    %178 = arith.mulf %177, %176 : vector<16x512xf32>
    %179 = math.tanh %178 : vector<16x512xf32>
    %cst_66 = arith.constant 1.000000e+00 : f32
    %180 = vector.broadcast %cst_66 : f32 to vector<16x512xf32>
    %181 = arith.addf %180, %179 : vector<16x512xf32>
    %cst_67 = arith.constant 5.000000e-01 : f32
    %182 = vector.broadcast %cst_67 : f32 to vector<16x512xf32>
    %183 = arith.mulf %182, %181 : vector<16x512xf32>
    %184 = arith.mulf %171, %183 : vector<16x512xf32>
    %185 = arith.truncf %184 : vector<16x512xf32> to vector<16x512xbf16>
    %c0_68 = arith.constant 0 : index
    %c0_69 = arith.constant 0 : index
    %c0_70 = arith.constant 0 : index
    %186 = vector.load %arg15[%c0_68, %c0_69, %c0_70] : memref<1x512x128xbf16, #tpu.memory_space<vmem>>, vector<1x512x128xbf16>
    %187 = vector.shape_cast %186 : vector<1x512x128xbf16> to vector<512x128xbf16>
    %cst_71 = arith.constant dense<0.000000e+00> : vector<16x128xf32>
    %188 = tpu.matmul %185, %187, %cst_71 {dimension_numbers = #tpu.dot_dimension_numbers<[1], [0], [0], [1], [0, 0, 1, 1], [], []>} : vector<16x512xbf16>, vector<512x128xbf16>, vector<16x128xf32> -> vector<16x128xf32>
    %c0_72 = arith.constant 0 : index
    %c0_73 = arith.constant 0 : index
    %c0_74 = arith.constant 0 : index
    %189 = vector.load %arg16[%c0_72, %c0_73, %c0_74] : memref<1x1x128xf32, #tpu.memory_space<vmem>>, vector<1x1x128xf32>
    %190 = vector.shape_cast %189 : vector<1x1x128xf32> to vector<1x128xf32>
    %191 = vector.broadcast %190 : vector<1x128xf32> to vector<16x128xf32>
    %192 = arith.addf %188, %191 : vector<16x128xf32>
    %193 = vector.shape_cast %192 : vector<16x128xf32> to vector<2x8x128xf32>
    %194 = arith.addf %136, %193 : vector<2x8x128xf32>
    %c0_75 = arith.constant 0 : index
    %c0_76 = arith.constant 0 : index
    %c0_77 = arith.constant 0 : index
    %195 = vector.load %arg20[%c0_75, %c0_76, %c0_77] : memref<2x8x128xf32, #tpu.memory_space<vmem>>, vector<2x8x128xf32>
    tpu.vector_store %arg20[%c0_75, %c0_76, %c0_77], %194 {strides = array<i32>} : memref<2x8x128xf32, #tpu.memory_space<vmem>>, vector<2x8x128xf32>,
    %c2_i32 = arith.constant 2 : i32
    %196 = arith.cmpi eq, %arg1, %c2_i32 : i32
    %197 = arith.extui %196 : i1 to i32
    %c0_i32_78 = arith.constant 0 : i32
    %198 = arith.cmpi ne, %197, %c0_i32_78 : i32
    scf.if %198 {
      %c0_79 = arith.constant 0 : index
      %c0_80 = arith.constant 0 : index
      %199 = vector.load %arg17[%c0_79, %c0_80] : memref<1x128xf32, #tpu.memory_space<vmem>>, vector<1x128xf32>
      %c0_81 = arith.constant 0 : index
      %c0_82 = arith.constant 0 : index
      %200 = vector.load %arg18[%c0_81, %c0_82] : memref<1x128xf32, #tpu.memory_space<vmem>>, vector<1x128xf32>
      %cst_83 = arith.constant dense<0.000000e+00> : vector<2x8xf32>
      %201 = vector.multi_reduction <add>, %194, %cst_83 [2] : vector<2x8x128xf32> to vector<2x8xf32>
      %202 = vector.shape_cast %201 : vector<2x8xf32> to vector<2x8x1xf32>
      %cst_84 = arith.constant 1.280000e+02 : f32
      %203 = vector.broadcast %cst_84 : f32 to vector<2x8x1xf32>
      %204 = arith.divf %202, %203 : vector<2x8x1xf32>
      %205 = vector.broadcast %204 : vector<2x8x1xf32> to vector<2x8x128xf32>
      %206 = arith.subf %194, %205 : vector<2x8x128xf32>
      %207 = arith.mulf %206, %206 : vector<2x8x128xf32>
      %cst_85 = arith.constant dense<0.000000e+00> : vector<2x8xf32>
      %208 = vector.multi_reduction <add>, %207, %cst_85 [2] : vector<2x8x128xf32> to vector<2x8xf32>
      %209 = vector.shape_cast %208 : vector<2x8xf32> to vector<2x8x1xf32>
      %cst_86 = arith.constant 1.280000e+02 : f32
      %210 = vector.broadcast %cst_86 : f32 to vector<2x8x1xf32>
      %211 = arith.divf %209, %210 : vector<2x8x1xf32>
      %cst_87 = arith.constant 9.99999974E-6 : f32
      %212 = vector.broadcast %cst_87 : f32 to vector<2x8x1xf32>
      %213 = arith.addf %211, %212 : vector<2x8x1xf32>
      %214 = math.rsqrt %213 : vector<2x8x1xf32>
      %215 = vector.broadcast %214 : vector<2x8x1xf32> to vector<2x8x128xf32>
      %216 = arith.mulf %206, %215 : vector<2x8x128xf32>
      %217 = vector.shape_cast %199 : vector<1x128xf32> to vector<1x1x128xf32>
      %218 = vector.broadcast %217 : vector<1x1x128xf32> to vector<2x8x128xf32>
      %219 = arith.mulf %216, %218 : vector<2x8x128xf32>
      %220 = vector.shape_cast %200 : vector<1x128xf32> to vector<1x1x128xf32>
      %221 = vector.broadcast %220 : vector<1x1x128xf32> to vector<2x8x128xf32>
      %222 = arith.addf %219, %221 : vector<2x8x128xf32>
      %c0_88 = arith.constant 0 : index
      %c0_89 = arith.constant 0 : index
      %c0_90 = arith.constant 0 : index
      %223 = vector.load %arg4[%c0_88, %c0_89, %c0_90] : memref<2x8x1xf32, #tpu.memory_space<vmem>>, vector<2x8x1xf32>
      %224 = vector.broadcast %223 : vector<2x8x1xf32> to vector<2x8x128xf32>
      %225 = arith.mulf %222, %224 : vector<2x8x128xf32>
      %c0_91 = arith.constant 0 : index
      %c0_92 = arith.constant 0 : index
      %c0_93 = arith.constant 0 : index
      %226 = vector.load %arg19[%c0_91, %c0_92, %c0_93] : memref<2x8x128xf32, #tpu.memory_space<vmem>>, vector<2x8x128xf32>
      tpu.vector_store %arg19[%c0_91, %c0_92, %c0_93], %225 {strides = array<i32>} : memref<2x8x128xf32, #tpu.memory_space<vmem>>, vector<2x8x128xf32>,
    } else {
    }
    return
  }
  func.func @transform_0(%arg0: i32, %arg1: i32) -> (i32, i32, i32) {
    %c0_i32 = arith.constant 0 : i32
    %c0_i32_0 = arith.constant 0 : i32
    %c0_i32_1 = arith.constant 0 : i32
    return %arg0, %c0_i32, %c0_i32_0 : i32, i32, i32
  }
  func.func @transform_1(%arg0: i32, %arg1: i32) -> (i32, i32, i32) {
    %c0_i32 = arith.constant 0 : i32
    %c0_i32_0 = arith.constant 0 : i32
    %c0_i32_1 = arith.constant 0 : i32
    return %arg0, %c0_i32, %c0_i32_0 : i32, i32, i32
  }
  func.func @transform_2(%arg0: i32, %arg1: i32) -> (i32, i32, i32) {
    %c0_i32 = arith.constant 0 : i32
    %c0_i32_0 = arith.constant 0 : i32
    %c0_i32_1 = arith.constant 0 : i32
    return %arg0, %c0_i32, %c0_i32_0 : i32, i32, i32
  }
  func.func @transform_3(%arg0: i32, %arg1: i32) -> (i32, i32, i32) {
    %c0_i32 = arith.constant 0 : i32
    %c0_i32_0 = arith.constant 0 : i32
    %c0_i32_1 = arith.constant 0 : i32
    return %arg1, %c0_i32, %c0_i32_0 : i32, i32, i32
  }
  func.func @transform_4(%arg0: i32, %arg1: i32) -> (i32, i32, i32) {
    %c0_i32 = arith.constant 0 : i32
    %c0_i32_0 = arith.constant 0 : i32
    %c0_i32_1 = arith.constant 0 : i32
    return %arg1, %c0_i32, %c0_i32_0 : i32, i32, i32
  }
  func.func @transform_5(%arg0: i32, %arg1: i32) -> (i32, i32, i32) {
    %c0_i32 = arith.constant 0 : i32
    %c0_i32_0 = arith.constant 0 : i32
    %c0_i32_1 = arith.constant 0 : i32
    return %arg1, %c0_i32, %c0_i32_0 : i32, i32, i32
  }
  func.func @transform_6(%arg0: i32, %arg1: i32) -> (i32, i32, i32) {
    %c0_i32 = arith.constant 0 : i32
    %c0_i32_0 = arith.constant 0 : i32
    %c0_i32_1 = arith.constant 0 : i32
    return %arg1, %c0_i32, %c0_i32_0 : i32, i32, i32
  }
  func.func @transform_7(%arg0: i32, %arg1: i32) -> (i32, i32, i32) {
    %c0_i32 = arith.constant 0 : i32
    %c0_i32_0 = arith.constant 0 : i32
    %c0_i32_1 = arith.constant 0 : i32
    return %arg1, %c0_i32, %c0_i32_0 : i32, i32, i32
  }
  func.func @transform_8(%arg0: i32, %arg1: i32) -> (i32, i32, i32) {
    %c0_i32 = arith.constant 0 : i32
    %c0_i32_0 = arith.constant 0 : i32
    %c0_i32_1 = arith.constant 0 : i32
    return %arg1, %c0_i32, %c0_i32_0 : i32, i32, i32
  }
  func.func @transform_9(%arg0: i32, %arg1: i32) -> (i32, i32, i32) {
    %c0_i32 = arith.constant 0 : i32
    %c0_i32_0 = arith.constant 0 : i32
    %c0_i32_1 = arith.constant 0 : i32
    return %arg1, %c0_i32, %c0_i32_0 : i32, i32, i32
  }
  func.func @transform_10(%arg0: i32, %arg1: i32) -> (i32, i32, i32) {
    %c0_i32 = arith.constant 0 : i32
    %c0_i32_0 = arith.constant 0 : i32
    %c0_i32_1 = arith.constant 0 : i32
    return %arg1, %c0_i32, %c0_i32_0 : i32, i32, i32
  }
  func.func @transform_11(%arg0: i32, %arg1: i32) -> (i32, i32, i32) {
    %c0_i32 = arith.constant 0 : i32
    %c0_i32_0 = arith.constant 0 : i32
    %c0_i32_1 = arith.constant 0 : i32
    return %arg1, %c0_i32, %c0_i32_0 : i32, i32, i32
  }
  func.func @transform_12(%arg0: i32, %arg1: i32) -> (i32, i32, i32) {
    %c0_i32 = arith.constant 0 : i32
    %c0_i32_0 = arith.constant 0 : i32
    %c0_i32_1 = arith.constant 0 : i32
    return %arg1, %c0_i32, %c0_i32_0 : i32, i32, i32
  }
  func.func @transform_13(%arg0: i32, %arg1: i32) -> (i32, i32, i32) {
    %c0_i32 = arith.constant 0 : i32
    %c0_i32_0 = arith.constant 0 : i32
    %c0_i32_1 = arith.constant 0 : i32
    return %arg1, %c0_i32, %c0_i32_0 : i32, i32, i32
  }
  func.func @transform_14(%arg0: i32, %arg1: i32) -> (i32, i32, i32) {
    %c0_i32 = arith.constant 0 : i32
    %c0_i32_0 = arith.constant 0 : i32
    %c0_i32_1 = arith.constant 0 : i32
    return %arg1, %c0_i32, %c0_i32_0 : i32, i32, i32
  }
  func.func @transform_15(%arg0: i32, %arg1: i32) -> (i32, i32) {
    %c0_i32 = arith.constant 0 : i32
    %c0_i32_0 = arith.constant 0 : i32
    %c0_i32_1 = arith.constant 0 : i32
    return %c0_i32, %c0_i32_0 : i32, i32
  }
  func.func @transform_16(%arg0: i32, %arg1: i32) -> (i32, i32) {
    %c0_i32 = arith.constant 0 : i32
    %c0_i32_0 = arith.constant 0 : i32
    %c0_i32_1 = arith.constant 0 : i32
    return %c0_i32, %c0_i32_0 : i32, i32
  }
  func.func @transform_17(%arg0: i32, %arg1: i32) -> (i32, i32, i32) {
    %c0_i32 = arith.constant 0 : i32
    %c0_i32_0 = arith.constant 0 : i32
    %c0_i32_1 = arith.constant 0 : i32
    return %arg0, %c0_i32, %c0_i32_0 : i32, i32, i32
  }
}

</mosaic_0001>

<llo_original>
// kernel: embed_part_forward.2
$region0: #{embed_part_forward.2}
  #allocation0 [shape = 'u32[]', space=smem, size = 0x4, offset = 0x4, fixed_abs, tag = 'smem constant byte address 0x4 - core index']
  #allocation1 [shape = 'u32[144,128]{1,0:T(1,128)}', space=vmem, size = 0x12000, scoped, tag = 'internal scratch']
  %s0 = inlined_call_operand.vmem [shape: f32[2,8,4], index: 0, kind: input, shape index: {}]
  %s1 = inlined_call_operand.hbm [shape: bf16[4,64], index: 1, kind: input, shape index: {}]
  %s2 = inlined_call_operand.hbm [shape: f32[1,64], index: 2, kind: input, shape index: {}]
  %s3 = inlined_call_operand.vmem [shape: bf16[64,128], index: 3, kind: input, shape index: {}]
  %s4 = inlined_call_operand.hbm [shape: f32[1,128], index: 4, kind: input, shape index: {}]
  %s5 = inlined_call_operand.hbm [shape: bf16[128,128], index: 5, kind: input, shape index: {}]
  %s6 = inlined_call_operand.hbm [shape: f32[1,128], index: 6, kind: input, shape index: {}]
  %s7 = inlined_call_operand.vmem [shape: f32[8,128], index: 7, kind: input, shape index: {}]
  %s8 = inlined_call_operand.vmem [shape: f32[2,8,128], index: 8, kind: output, shape index: {}]
  %s9 = sld [smem:[#allocation0]]
  $region62: #{embed_part_forward.2} parent=0
    _
  %s11 = ssub.s32 1, %s9
  %s12 = scalar_select 0, %s11, %s9
  $region1: #{embed_part_forward.2} parent=0
    #allocation2 [shape = 'u8[1024]{0}', space=vmem, size = 0x400, scoped, tag = 'input window, operand 1, single buffered']
    #allocation3 [shape = 's32[1]{0}', space=sflag, size = 0x4, scoped, tag = 'scoped memory for embed_part_forward.2']
    #allocation4 [shape = 'u8[512]{0}', space=vmem, size = 0x400, scoped, tag = 'input window, operand 2, single buffered']
    #allocation5 [shape = 's32[1]{0}', space=sflag, size = 0x4, scoped, tag = 'scoped memory for embed_part_forward.2']
    #allocation6 [shape = 'u8[512]{0}', space=vmem, size = 0x400, scoped, tag = 'input window, operand 4, single buffered']
    #allocation7 [shape = 'u8[32768]{0}', space=vmem, size = 0x8000, scoped, tag = 'input window, operand 5, single buffered']
    #allocation8 [shape = 's32[1]{0}', space=sflag, size = 0x4, scoped, tag = 'scoped memory for embed_part_forward.2']
    #allocation9 [shape = 'u8[512]{0}', space=vmem, size = 0x400, scoped, tag = 'input window, operand 6, single buffered']
    %13 = vsyncpa [#allocation3], 0
    %14 = vsyncpa [#allocation5], 0
    %15 = vsyncpa [#allocation8], 0
    // Predicated region
    $region2: #{embed_part_forward.2} parent=1 // pred_check
      _
    $region3: #{embed_part_forward.2} parent=1 // pred_check_branch
      %17 = sbr.rel (0) target = $region5
    $region4: #{embed_part_forward.2} parent=1 // pred_region
      _
    $region5: #{embed_part_forward.2} parent=1 // pred_fallthru
      _
    // Predicated region
    $region6: #{embed_part_forward.2} parent=1 // pred_check
      _
    $region7: #{embed_part_forward.2} parent=1 // pred_check_branch
      %19 = sbr.rel (0) target = $region9
    $region8: #{embed_part_forward.2} parent=1 // pred_region
      %s21 = ssub.s32 32, 32
      %22 = vsyncadd [#allocation3], %s21
      %s24 = sshll.u32 [#allocation2], 4
      %s25 = int_to_ptr.vmem [resolvable:$true] %s24
      %27 = dma.hbm_to_vmem [thread:$0]  %s1, 32, %s25, [#allocation3]
    $region9: #{embed_part_forward.2} parent=1 // pred_fallthru
      _
    // Predicated region
    $region10: #{embed_part_forward.2} parent=1 // pred_check
      _
    $region11: #{embed_part_forward.2} parent=1 // pred_check_branch
      %29 = sbr.rel (0) target = $region13
    $region12: #{embed_part_forward.2} parent=1 // pred_region
      %s31 = ssub.s32 16, 16
      %32 = vsyncadd [#allocation5], %s31
      %s34 = sshll.u32 [#allocation4], 4
      %s35 = int_to_ptr.vmem [resolvable:$true] %s34
      %37 = dma.hbm_to_vmem [thread:$0]  %s2, 16, %s35, [#allocation5]
    $region13: #{embed_part_forward.2} parent=1 // pred_fallthru
      _
    // Predicated region
    $region14: #{embed_part_forward.2} parent=1 // pred_check
      _
    $region15: #{embed_part_forward.2} parent=1 // pred_check_branch
      %39 = sbr.rel (0) target = $region17
    $region16: #{embed_part_forward.2} parent=1 // pred_region
      _
    $region17: #{embed_part_forward.2} parent=1 // pred_fallthru
      _
    // Predicated region
    $region18: #{embed_part_forward.2} parent=1 // pred_check
      _
    $region19: #{embed_part_forward.2} parent=1 // pred_check_branch
      %41 = sbr.rel (0) target = $region21
    $region20: #{embed_part_forward.2} parent=1 // pred_region
      %s43 = ssub.s32 16, 16
      %44 = vsyncadd [#allocation5], %s43
      %s46 = sshll.u32 [#allocation6], 4
      %s47 = int_to_ptr.vmem [resolvable:$true] %s46
      %49 = dma.hbm_to_vmem [thread:$0]  %s4, 16, %s47, [#allocation5]
    $region21: #{embed_part_forward.2} parent=1 // pred_fallthru
      _
    // Predicated region
    $region22: #{embed_part_forward.2} parent=1 // pred_check
      _
    $region23: #{embed_part_forward.2} parent=1 // pred_check_branch
      %51 = sbr.rel (0) target = $region25
    $region24: #{embed_part_forward.2} parent=1 // pred_region
      %s53 = ssub.s32 1024, 1024
      %54 = vsyncadd [#allocation8], %s53
      %s55 = sshll.u32 [#allocation7], 4
      %s56 = int_to_ptr.vmem [resolvable:$true] %s55
      %61 = dma.hbm_to_vmem [thread:$0]  %s5, 1024, %s56, [#allocation8], 64, 64, 4
    $region25: #{embed_part_forward.2} parent=1 // pred_fallthru
      _
    // Predicated region
    $region26: #{embed_part_forward.2} parent=1 // pred_check
      _
    $region27: #{embed_part_forward.2} parent=1 // pred_check_branch
      %63 = sbr.rel (0) target = $region29
    $region28: #{embed_part_forward.2} parent=1 // pred_region
      %s65 = ssub.s32 16, 16
      %66 = vsyncadd [#allocation8], %s65
      %s68 = sshll.u32 [#allocation9], 4
      %s69 = int_to_ptr.vmem [resolvable:$true] %s68
      %71 = dma.hbm_to_vmem [thread:$0]  %s6, 16, %s69, [#allocation8]
    $region29: #{embed_part_forward.2} parent=1 // pred_fallthru
      _
    // Predicated region
    $region30: #{embed_part_forward.2} parent=1 // pred_check
      _
    $region31: #{embed_part_forward.2} parent=1 // pred_check_branch
      %73 = sbr.rel (0) target = $region33
    $region32: #{embed_part_forward.2} parent=1 // pred_region
      _
    $region33: #{embed_part_forward.2} parent=1 // pred_fallthru
      _
    // Predicated region
    $region34: #{embed_part_forward.2} parent=1 // pred_check
      _
    $region35: #{embed_part_forward.2} parent=1 // pred_check_branch
      %75 = sbr.rel (0) target = $region37
    $region36: #{embed_part_forward.2} parent=1 // pred_region
      %76 = dma.done [#allocation3], 32
    $region37: #{embed_part_forward.2} parent=1 // pred_fallthru
      _
    // Predicated region
    $region38: #{embed_part_forward.2} parent=1 // pred_check
      _
    $region39: #{embed_part_forward.2} parent=1 // pred_check_branch
      %78 = sbr.rel (0) target = $region41
    $region40: #{embed_part_forward.2} parent=1 // pred_region
      %79 = dma.done [#allocation5], 16
    $region41: #{embed_part_forward.2} parent=1 // pred_fallthru
      _
    // Predicated region
    $region42: #{embed_part_forward.2} parent=1 // pred_check
      _
    $region43: #{embed_part_forward.2} parent=1 // pred_check_branch
      %81 = sbr.rel (0) target = $region45
    $region44: #{embed_part_forward.2} parent=1 // pred_region
      %82 = dma.done [#allocation5], 16
    $region45: #{embed_part_forward.2} parent=1 // pred_fallthru
      _
    // Predicated region
    $region46: #{embed_part_forward.2} parent=1 // pred_check
      _
    $region47: #{embed_part_forward.2} parent=1 // pred_check_branch
      %84 = sbr.rel (0) target = $region49
    $region48: #{embed_part_forward.2} parent=1 // pred_region
      %85 = dma.done [#allocation8], 1024
    $region49: #{embed_part_forward.2} parent=1 // pred_fallthru
      _
    // Predicated region
    $region50: #{embed_part_forward.2} parent=1 // pred_check
      _
    $region51: #{embed_part_forward.2} parent=1 // pred_check_branch
      %87 = sbr.rel (0) target = $region53
    $region52: #{embed_part_forward.2} parent=1 // pred_region
      %88 = dma.done [#allocation8], 16
    $region53: #{embed_part_forward.2} parent=1 // pred_fallthru
      _
    %v90 = vld [vmem:[%s0] sm:$0xff]
    %v91 = vld [vmem:[%s0 + $0x8] sm:$0xff]
    %v92 = vlog2.pop %v90
    %v93 = vmul.f32 %v92, 0.6931472
    %v94 = vlog2.pop %v91
    %v95 = vmul.f32 %v94, 0.6931472
    %v96 = vsub.f32 %v93, 1.19
    %v97 = vsub.f32 %v95, 1.19
    %v98 = vand.u32 2147483647, %v96
    %v99 = vand.u32 2147483647, %v97
    %vm100 = vcmp.lt.f32.partialorder %v98, inf
    %vm101 = vcmp.lt.f32.partialorder %v99, inf
    %v102 = vsel %vm100, %v96, 0.0
    %v103 = vsel %vm101, %v97, 0.0
    %v104 = vlaneseq
    %v105 = vand.u32 %v104, 127
    %vm106 = vcmp.eq.s32.totalorder %v105, 0
    %108 = vset.pattern.permute.xlu0 0
    %109 = vperm.xlu0 %108, %v102
    %v110 = vpop.permute.xlu0 %109
    %113 = vset.pattern.permute.xlu0 0
    %114 = vperm.xlu0 %113, %v103
    %v115 = vpop.permute.xlu0 %114
    %v117 = vsel %vm106, %v110, %v90
    %v118 = vsel %vm106, %v115, %v91
    %v119 = vpack.c.bf16 %v118, %v117
    %v120 = vld [vmem:[#allocation2] sm:$0x3]
    %v121 = vld [vmem:[#allocation4] sm:$0x1]
    %v123 = vlaneseq
    %v124 = vshrl.u32 %v123, 7
    %v125 = vsub.s32 0, %v124
    %v126 = vrot.slane %v121, %v125
    %vm128 = vcmask 31744
    %v130 = vsel %vm128, %v119, 0
    %vm132 = vcmask 1041408
    %v134 = vsel %vm132, %v120, 0
    %136 = vmatprep.subr.bf16.mxu0 0
    %137 = vmatpush1.bf16.msra.mxu0 0
    %138 = vmatprep.subr.bf16.mxu0 0
    %139 = vmatpush1.bf16.msra.mxu0 0
    %140 = vmatprep.subr.bf16.mxu0 0
    %141 = vmatpush1.bf16.msra.mxu0 0
    %142 = vmatprep.subr.bf16.mxu0 0
    %143 = vmatpush1.bf16.msra.mxu0 0
    %144 = vmatprep.subr.bf16.mxu0 0
    %145 = vmatpush1.bf16.msra.mxu0 0
    %146 = vmatprep.subr.bf16.mxu0 0
    %147 = vmatpush1.bf16.msra.mxu0 0
    %148 = vmatprep.subr.bf16.mxu0 0
    %149 = vmatpush1.bf16.msra.mxu0 0
    %150 = vmatprep.subr.bf16.mxu0 0
    %151 = vmatpush1.bf16.msra.mxu0 %v134
    %152 = vmatprep.subr.bf16.mxu0 0
    %153 = vmatpush2.bf16.msra.mxu0 0
    %154 = vmatprep.subr.bf16.mxu0 0
    %155 = vmatpush2.bf16.msra.mxu0 0
    %156 = vmatprep.subr.bf16.mxu0 0
    %157 = vmatpush2.bf16.msra.mxu0 0
    %158 = vmatprep.subr.bf16.mxu0 0
    %159 = vmatpush2.bf16.msra.mxu0 0
    %160 = vmatprep.subr.bf16.mxu0 0
    %161 = vmatpush2.bf16.msra.mxu0 0
    %162 = vmatprep.subr.bf16.mxu0 0
    %163 = vmatpush2.bf16.msra.mxu0 0
    %164 = vmatprep.subr.bf16.mxu0 0
    %165 = vmatpush2.bf16.msra.mxu0 0
    %166 = vmatprep.subr.bf16.mxu0 0
    %167 = vmatpush2.bf16.msra.mxu0 0
    %168 = vmatprep.mubr.bf16.mxu0 0
    %169 = vmatmul.mubr.bf16.gmra.mxu0 %v130
    %v170 = vpop.f32.mrf.mxu0
    %v171 = vadd.f32 %v126, %v170
    %v172 = vpop.f32.mrf.mxu0
    %v173 = vpop.f32.mrf.mxu0
    %v174 = vadd.f32 %v126, %v173
    %v175 = vpop.f32.mrf.mxu0
    %176 = vdwg.mxu0
    %v177 = vmul.f32 %v171, %v171
    %v178 = vmul.f32 %v174, %v174
    %v179 = vmul.f32 %v171, %v177
    %v180 = vmul.f32 %v174, %v178
    %v181 = vmul.f32 %v179, 0.044715
    %v182 = vmul.f32 %v180, 0.044715
    %v183 = vadd.f32 %v171, %v181
    %v184 = vadd.f32 %v174, %v182
    %v185 = vmul.f32 %v183, 0.7978846
    %v186 = vmul.f32 %v184, 0.7978846
    %v187 = vtanh.pop %v185
    %v188 = vtanh.pop %v186
    %v189 = vadd.f32 %v187, 1.0
    %v190 = vadd.f32 %v188, 1.0
    %v191 = vmul.f32 %v189, 0.5
    %v192 = vmul.f32 %v190, 0.5
    %v193 = vmul.f32 %v171, %v191
    %v194 = vmul.f32 %v174, %v192
    %v195 = vpack.c.bf16 %v194, %v193
    %v196 = vld [vmem:[%s3] sm:$0xf]
    %v197 = vld [vmem:[%s3 + $0x4] sm:$0xf]
    %v198 = vld [vmem:[%s3 + $0x8] sm:$0xf]
    %v199 = vld [vmem:[%s3 + $0xc] sm:$0xf]
    %v200 = vld [vmem:[%s3 + $0x10] sm:$0xf]
    %v201 = vld [vmem:[%s3 + $0x14] sm:$0xf]
    %v202 = vld [vmem:[%s3 + $0x18] sm:$0xf]
    %v203 = vld [vmem:[%s3 + $0x1c] sm:$0xf]
    %v204 = vld [vmem:[#allocation6] sm:$0x1]
    %v206 = vlaneseq
    %v207 = vshrl.u32 %v206, 7
    %v208 = vsub.s32 0, %v207
    %v209 = vrot.slane %v204, %v208
    %v219 = vunpack.c.l.b16 %v196
    %v220 = vunpack.c.l.b16 %v197
    %v221 = vunpack.c.l.b16 %v198
    %v222 = vunpack.c.l.b16 %v199
    %v223 = vunpack.c.l.b16 %v200
    %v224 = vunpack.c.l.b16 %v201
    %v225 = vunpack.c.l.b16 %v202
    %v226 = vunpack.c.l.b16 %v203
    %v227 = vpack.c.b16 %v220, %v219
    %v228 = vpack.c.b16 %v222, %v221
    %v229 = vpack.c.b16 %v224, %v223
    %v230 = vpack.c.b16 %v226, %v225
    %vm235 = vcmask 523264
    %v237 = vsel %vm235, %v195, 0
    %239 = vmatprep.subr.bf16.mxu0 0
    %240 = vmatpush1.bf16.msra.mxu0 0
    %241 = vmatprep.subr.bf16.mxu0 0
    %242 = vmatpush1.bf16.msra.mxu0 0
    %243 = vmatprep.subr.bf16.mxu0 0
    %244 = vmatpush1.bf16.msra.mxu0 0
    %245 = vmatprep.subr.bf16.mxu0 0
    %246 = vmatpush1.bf16.msra.mxu0 0
    %247 = vmatprep.subr.bf16.mxu0 0
    %248 = vmatpush1.bf16.msra.mxu0 %v230
    %249 = vmatprep.subr.bf16.mxu0 0
    %250 = vmatpush1.bf16.msra.mxu0 %v229
    %251 = vmatprep.subr.bf16.mxu0 0
    %252 = vmatpush1.bf16.msra.mxu0 %v228
    %253 = vmatprep.subr.bf16.mxu0 0
    %254 = vmatpush1.bf16.msra.mxu0 %v227
    %255 = vmatprep.subr.bf16.mxu0 0
    %256 = vmatpush2.bf16.msra.mxu0 0
    %257 = vmatprep.subr.bf16.mxu0 0
    %258 = vmatpush2.bf16.msra.mxu0 0
    %259 = vmatprep.subr.bf16.mxu0 0
    %260 = vmatpush2.bf16.msra.mxu0 0
    %261 = vmatprep.subr.bf16.mxu0 0
    %262 = vmatpush2.bf16.msra.mxu0 0
    %263 = vmatprep.subr.bf16.mxu0 0
    %264 = vmatpush2.bf16.msra.mxu0 0
    %265 = vmatprep.subr.bf16.mxu0 0
    %266 = vmatpush2.bf16.msra.mxu0 0
    %267 = vmatprep.subr.bf16.mxu0 0
    %268 = vmatpush2.bf16.msra.mxu0 0
    %269 = vmatprep.subr.bf16.mxu0 0
    %270 = vmatpush2.bf16.msra.mxu0 0
    %271 = vmatprep.mubr.bf16.mxu0 0
    %272 = vmatmul.mubr.bf16.gmra.mxu0 %v237
    %v273 = vpop.f32.mrf.mxu0
    %v274 = vadd.f32 %v209, %v273
    %v275 = vpop.f32.mrf.mxu0
    %v276 = vpop.f32.mrf.mxu0
    %v277 = vadd.f32 %v209, %v276
    %v278 = vpop.f32.mrf.mxu0
    %279 = vdwg.mxu0
    %v280 = vld [vmem:[#allocation7] sm:$0xf]
    %v281 = vld [vmem:[#allocation7 + $0x4] sm:$0xf]
    %v282 = vld [vmem:[#allocation7 + $0x8] sm:$0xf]
    %v283 = vld [vmem:[#allocation7 + $0xc] sm:$0xf]
    %v284 = vld [vmem:[#allocation7 + $0x10] sm:$0xf]
    %v285 = vld [vmem:[#allocation7 + $0x14] sm:$0xf]
    %v286 = vld [vmem:[#allocation7 + $0x18] sm:$0xf]
    %v287 = vld [vmem:[#allocation7 + $0x1c] sm:$0xf]
    %v288 = vld [vmem:[#allocation7 + $0x20] sm:$0xf]
    %v289 = vld [vmem:[#allocation7 + $0x24] sm:$0xf]
    %v290 = vld [vmem:[#allocation7 + $0x28] sm:$0xf]
    %v291 = vld [vmem:[#allocation7 + $0x2c] sm:$0xf]
    %v292 = vld [vmem:[#allocation7 + $0x30] sm:$0xf]
    %v293 = vld [vmem:[#allocation7 + $0x34] sm:$0xf]
    %v294 = vld [vmem:[#allocation7 + $0x38] sm:$0xf]
    %v295 = vld [vmem:[#allocation7 + $0x3c] sm:$0xf]
    %v296 = vpack.c.bf16 %v277, %v274
    %v313 = vunpack.c.l.b16 %v280
    %v314 = vunpack.c.l.b16 %v281
    %v315 = vunpack.c.l.b16 %v282
    %v316 = vunpack.c.l.b16 %v283
    %v317 = vunpack.c.l.b16 %v284
    %v318 = vunpack.c.l.b16 %v285
    %v319 = vunpack.c.l.b16 %v286
    %v320 = vunpack.c.l.b16 %v287
    %v321 = vunpack.c.l.b16 %v288
    %v322 = vunpack.c.l.b16 %v289
    %v323 = vunpack.c.l.b16 %v290
    %v324 = vunpack.c.l.b16 %v291
    %v325 = vunpack.c.l.b16 %v292
    %v326 = vunpack.c.l.b16 %v293
    %v327 = vunpack.c.l.b16 %v294
    %v328 = vunpack.c.l.b16 %v295
    %v329 = vpack.c.b16 %v314, %v313
    %v330 = vpack.c.b16 %v316, %v315
    %v331 = vpack.c.b16 %v318, %v317
    %v332 = vpack.c.b16 %v320, %v319
    %v333 = vpack.c.b16 %v322, %v321
    %v334 = vpack.c.b16 %v324, %v323
    %v335 = vpack.c.b16 %v326, %v325
    %v336 = vpack.c.b16 %v328, %v327
    %345 = vmatprep.subr.bf16.mxu0 0
    %346 = vmatpush1.bf16.xpose.msra.mxu0 %v336
    %347 = vmatprep.subr.bf16.mxu0 0
    %348 = vmatpush1.bf16.xpose.msra.mxu0 %v335
    %349 = vmatprep.subr.bf16.mxu0 0
    %350 = vmatpush1.bf16.xpose.msra.mxu0 %v334
    %351 = vmatprep.subr.bf16.mxu0 0
    %352 = vmatpush1.bf16.xpose.msra.mxu0 %v333
    %353 = vmatprep.subr.bf16.mxu0 0
    %354 = vmatpush1.bf16.xpose.msra.mxu0 %v332
    %355 = vmatprep.subr.bf16.mxu0 0
    %356 = vmatpush1.bf16.xpose.msra.mxu0 %v331
    %357 = vmatprep.subr.bf16.mxu0 0
    %358 = vmatpush1.bf16.xpose.msra.mxu0 %v330
    %359 = vmatprep.subr.bf16.mxu0 0
    %360 = vmatpush1.bf16.xpose.msra.mxu0 %v329
    %361 = vmatprep.subr.bf16.mxu0 0
    %362 = vmatpush2.bf16.xpose.msra.mxu0 0
    %363 = vmatprep.subr.bf16.mxu0 0
    %364 = vmatpush2.bf16.xpose.msra.mxu0 0
    %365 = vmatprep.subr.bf16.mxu0 0
    %366 = vmatpush2.bf16.xpose.msra.mxu0 0
    %367 = vmatprep.subr.bf16.mxu0 0
    %368 = vmatpush2.bf16.xpose.msra.mxu0 0
    %369 = vmatprep.subr.bf16.mxu0 0
    %370 = vmatpush2.bf16.xpose.msra.mxu0 0
    %371 = vmatprep.subr.bf16.mxu0 0
    %372 = vmatpush2.bf16.xpose.msra.mxu0 0
    %373 = vmatprep.subr.bf16.mxu0 0
    %374 = vmatpush2.bf16.xpose.msra.mxu0 0
    %375 = vmatprep.subr.bf16.mxu0 0
    %376 = vmatpush2.bf16.xpose.msra.mxu0 0
    %377 = vmatprep.mubr.bf16.mxu0 0
    %378 = vmatmul.mubr.bf16.gmra.mxu0 %v296
    %v379 = vpop.f32.mrf.mxu0
    %v380 = vadd.f32 0.0, %v379
    %v381 = vpop.f32.mrf.mxu0
    %v382 = vpop.f32.mrf.mxu0
    %v383 = vadd.f32 0.0, %v382
    %v384 = vpop.f32.mrf.mxu0
    %385 = vdwg.mxu0
    %v386 = vld [vmem:[#allocation9] sm:$0x1]
    %v387 = vmul.f32 %v380, 2.0
    %v388 = vmul.f32 %v383, 2.0
    %v390 = vlaneseq
    %v391 = vshrl.u32 %v390, 7
    %v392 = vsub.s32 0, %v391
    %v393 = vrot.slane %v386, %v392
    %v395 = vsub.f32 %v393, %v387
    %v396 = vsub.f32 %v393, %v388
    %397 = vmin.xlane.f32.xlu0 %v395
    %v398 = vpop.xlane.xlu0 %397
    %399 = vmin.xlane.f32.xlu0 %v396
    %v400 = vpop.xlane.xlu0 %399
    %vm401 = vcmp.le.f32.partialorder %v395, %v398
    %vm402 = vcmp.le.f32.partialorder %v396, %v400
    %v403 = vsel %vm401, %v105, 128
    %v404 = vsel %vm402, %v105, 128
    %v405 = vand.u32 %v403, 65535
    %v406 = vshra.s32 %v403, 16
    %v407 = vcvt.s32.f32 %v405
    %v408 = vcvt.s32.f32 %v406
    %409 = vmin.xlane.f32.xlu0 %v408
    %v410 = vpop.xlane.xlu0 %409
    %vm411 = vcmp.eq.f32.partialorder %v408, %v410
    %v412 = vsel %vm411, %v407, inf
    %413 = vmin.xlane.f32.xlu0 %v412
    %v414 = vpop.xlane.xlu0 %413
    %v415 = vcvt.f32.s32 %v414
    %v416 = vcvt.f32.s32 %v410
    %v417 = vshll.u32 %v416, 16
    %v418 = vadd.s32 %v417, %v415
    %v419 = vand.u32 %v404, 65535
    %v420 = vshra.s32 %v404, 16
    %v421 = vcvt.s32.f32 %v419
    %v422 = vcvt.s32.f32 %v420
    %423 = vmin.xlane.f32.xlu0 %v422
    %v424 = vpop.xlane.xlu0 %423
    %vm425 = vcmp.eq.f32.partialorder %v422, %v424
    %v426 = vsel %vm425, %v421, inf
    %427 = vmin.xlane.f32.xlu0 %v426
    %v428 = vpop.xlane.xlu0 %427
    %v429 = vcvt.f32.s32 %v428
    %v430 = vcvt.f32.s32 %v424
    %v431 = vshll.u32 %v430, 16
    %v432 = vadd.s32 %v431, %v429
    %vm433 = vcmp.eq.s32.totalorder %v105, %v418
    %vm434 = vcmp.eq.s32.totalorder %v105, %v432
    %v435 = vsel %vm433, 1, 0
    %v436 = vsel %vm434, 1, 0
    %v437 = vcvt.s32.f32 %v435
    %v438 = vcvt.s32.f32 %v436
    %v439 = vpack.c.bf16 %v438, %v437
    %440 = vmatprep.subr.bf16.mxu0 0
    %441 = vmatpush1.bf16.msra.mxu0 %v336
    %442 = vmatprep.subr.bf16.mxu0 0
    %443 = vmatpush1.bf16.msra.mxu0 %v335
    %444 = vmatprep.subr.bf16.mxu0 0
    %445 = vmatpush1.bf16.msra.mxu0 %v334
    %446 = vmatprep.subr.bf16.mxu0 0
    %447 = vmatpush1.bf16.msra.mxu0 %v333
    %448 = vmatprep.subr.bf16.mxu0 0
    %449 = vmatpush1.bf16.msra.mxu0 %v332
    %450 = vmatprep.subr.bf16.mxu0 0
    %451 = vmatpush1.bf16.msra.mxu0 %v331
    %452 = vmatprep.subr.bf16.mxu0 0
    %453 = vmatpush1.bf16.msra.mxu0 %v330
    %454 = vmatprep.subr.bf16.mxu0 0
    %455 = vmatpush1.bf16.msra.mxu0 %v329
    %456 = vmatprep.subr.bf16.mxu0 0
    %457 = vmatpush2.bf16.msra.mxu0 0
    %458 = vmatprep.subr.bf16.mxu0 0
    %459 = vmatpush2.bf16.msra.mxu0 0
    %460 = vmatprep.subr.bf16.mxu0 0
    %461 = vmatpush2.bf16.msra.mxu0 0
    %462 = vmatprep.subr.bf16.mxu0 0
    %463 = vmatpush2.bf16.msra.mxu0 0
    %464 = vmatprep.subr.bf16.mxu0 0
    %465 = vmatpush2.bf16.msra.mxu0 0
    %466 = vmatprep.subr.bf16.mxu0 0
    %467 = vmatpush2.bf16.msra.mxu0 0
    %468 = vmatprep.subr.bf16.mxu0 0
    %469 = vmatpush2.bf16.msra.mxu0 0
    %470 = vmatprep.subr.bf16.mxu0 0
    %471 = vmatpush2.bf16.msra.mxu0 0
    %472 = vmatprep.mubr.bf16.mxu0 0
    %473 = vmatmul.mubr.bf16.gmra.mxu0 %v439
    %v474 = vpop.f32.mrf.mxu0
    %v475 = vadd.f32 0.0, %v474
    %v476 = vpop.f32.mrf.mxu0
    %v477 = vpop.f32.mrf.mxu0
    %v478 = vadd.f32 0.0, %v477
    %v479 = vpop.f32.mrf.mxu0
    %480 = vdwg.mxu0
    %v481 = vld [vmem:[%s7] sm:$0xff]
    %v482 = vadd.f32 %v475, %v481
    %v483 = vadd.f32 %v478, %v481
    %484 = vst [vmem:[%s8] sm:$0xff] %v482
    %485 = vst [vmem:[%s8 + $0x8] sm:$0xff] %v483
    // Predicated region
    $region54: #{embed_part_forward.2} parent=1 // pred_check
      _
    $region55: #{embed_part_forward.2} parent=1 // pred_check_branch
      %487 = sbr.rel (0) target = $region57
    $region56: #{embed_part_forward.2} parent=1 // pred_region
      _
    $region57: #{embed_part_forward.2} parent=1 // pred_fallthru
      _
    // Predicated region
    $region58: #{embed_part_forward.2} parent=1 // pred_check
      _
    $region59: #{embed_part_forward.2} parent=1 // pred_check_branch
      %489 = sbr.rel (0) target = $region61
    $region60: #{embed_part_forward.2} parent=1 // pred_region
      _
    $region61: #{embed_part_forward.2} parent=1 // pred_fallthru
      _
    %490 = vsyncpa [#allocation3], 1
    %491 = vsyncpa [#allocation5], 1
    %492 = vsyncpa [#allocation8], 1

// kernel: embed_part_forward.3
$region0: #{embed_part_forward.3}
  #allocation0 [shape = 'u32[]', space=smem, size = 0x4, offset = 0x4, fixed_abs, tag = 'smem constant byte address 0x4 - core index']
  #allocation1 [shape = 'u32[144,128]{1,0:T(1,128)}', space=vmem, size = 0x12000, scoped, tag = 'internal scratch']
  #allocation2 [shape = 'f32[2,8,128]{2,1,0:T(8,128)}', space=vmem, size = 0x2000, scoped, tag = 'scratch operand']
  %s0 = inlined_call_operand.vmem [shape: f32[2,8,128], index: 0, kind: input, shape index: {}]
  %s1 = inlined_call_operand.vmem [shape: f32[2,1,8], index: 1, kind: input, shape index: {}]
  %s2 = inlined_call_operand.vmem [shape: f32[2,8,1], index: 2, kind: input, shape index: {}]
  %s3 = inlined_call_operand.hbm [shape: f32[3,1,128], index: 3, kind: input, shape index: {}]
  %s4 = inlined_call_operand.hbm [shape: f32[3,1,128], index: 4, kind: input, shape index: {}]
  %s5 = inlined_call_operand.hbm [shape: bf16[3,128,384], index: 5, kind: input, shape index: {}]
  %s6 = inlined_call_operand.hbm [shape: f32[3,1,384], index: 6, kind: input, shape index: {}]
  %s7 = inlined_call_operand.vmem [shape: bf16[3,128,128], index: 7, kind: input, shape index: {}]
  %s8 = inlined_call_operand.hbm [shape: f32[3,1,128], index: 8, kind: input, shape index: {}]
  %s9 = inlined_call_operand.hbm [shape: f32[3,1,128], index: 9, kind: input, shape index: {}]
  %s10 = inlined_call_operand.hbm [shape: f32[3,1,128], index: 10, kind: input, shape index: {}]
  %s11 = inlined_call_operand.hbm [shape: bf16[3,128,512], index: 11, kind: input, shape index: {}]
  %s12 = inlined_call_operand.hbm [shape: f32[3,1,512], index: 12, kind: input, shape index: {}]
  %s13 = inlined_call_operand.hbm [shape: bf16[3,512,128], index: 13, kind: input, shape index: {}]
  %s14 = inlined_call_operand.hbm [shape: f32[3,1,128], index: 14, kind: input, shape index: {}]
  %s15 = inlined_call_operand.vmem [shape: f32[1,128], index: 15, kind: input, shape index: {}]
  %s16 = inlined_call_operand.hbm [shape: f32[1,128], index: 16, kind: input, shape index: {}]
  %s17 = inlined_call_operand.hbm [shape: f32[2,8,128], index: 17, kind: output, shape index: {}]
  %s18 = sld [smem:[#allocation0]]
  $region157: #{embed_part_forward.3} parent=0
    _
  %s20 = ssub.s32 1, %s18
  %s21 = scalar_select 0, %s20, %s18
  $region1: #{embed_part_forward.3} parent=0
    #allocation3 [shape = 'u8[1024]{0}', space=vmem, size = 0x400, scoped, tag = 'input window, operand 3']
    #allocation4 [shape = 's32[2]{0}', space=sflag, size = 0x8, scoped, tag = 'scoped memory for embed_part_forward.3']
    #allocation5 [shape = 's32[2]{0}', space=sflag, size = 0x8, scoped, tag = 'scoped memory for embed_part_forward.3']
    #allocation6 [shape = 'u8[1024]{0}', space=vmem, size = 0x400, scoped, tag = 'input window, operand 4']
    #allocation7 [shape = 's32[2]{0}', space=sflag, size = 0x8, scoped, tag = 'scoped memory for embed_part_forward.3']
    #allocation8 [shape = 'u8[196608]{0}', space=vmem, size = 0x30000, scoped, tag = 'input window, operand 5']
    #allocation9 [shape = 'u8[3072]{0}', space=vmem, size = 0xc00, scoped, tag = 'input window, operand 6']
    #allocation10 [shape = 's32[2]{0}', space=sflag, size = 0x8, scoped, tag = 'scoped memory for embed_part_forward.3']
    #allocation11 [shape = 'u8[1024]{0}', space=vmem, size = 0x400, scoped, tag = 'input window, operand 8']
    #allocation12 [shape = 'u8[1024]{0}', space=vmem, size = 0x400, scoped, tag = 'input window, operand 9']
    #allocation13 [shape = 's32[2]{0}', space=sflag, size = 0x8, scoped, tag = 'scoped memory for embed_part_forward.3']
    #allocation14 [shape = 'u8[1024]{0}', space=vmem, size = 0x400, scoped, tag = 'input window, operand 10']
    #allocation15 [shape = 'u8[262144]{0}', space=vmem, size = 0x40000, scoped, tag = 'input window, operand 11']
    #allocation16 [shape = 's32[2]{0}', space=sflag, size = 0x8, scoped, tag = 'scoped memory for embed_part_forward.3']
    #allocation17 [shape = 'u8[4096]{0}', space=vmem, size = 0x1000, scoped, tag = 'input window, operand 12']
    #allocation18 [shape = 'u8[262144]{0}', space=vmem, size = 0x40000, scoped, tag = 'input window, operand 13']
    #allocation19 [shape = 's32[2]{0}', space=sflag, size = 0x8, scoped, tag = 'scoped memory for embed_part_forward.3']
    #allocation20 [shape = 'u8[1024]{0}', space=vmem, size = 0x400, scoped, tag = 'input window, operand 14']
    #allocation21 [shape = 'u8[512]{0}', space=vmem, size = 0x400, scoped, tag = 'input window, operand 16, single buffered']
    #allocation22 [shape = 's32[1]{0}', space=sflag, size = 0x4, scoped, tag = 'scoped memory for embed_part_forward.3']
    #allocation23 [shape = 'u8[8192]{0}', space=vmem, size = 0x2000, scoped, tag = 'output window, operand 0, single buffered']
    %22 = vsyncpa [#allocation4], 0
    %s23 = scalar_lea.sflag [#allocation4], 1
    %24 = vsyncpa %s23, 0
    %25 = vsyncpa [#allocation7], 0
    %s26 = scalar_lea.sflag [#allocation7], 1
    %27 = vsyncpa %s26, 0
    %28 = vsyncpa [#allocation10], 0
    %s29 = scalar_lea.sflag [#allocation10], 1
    %30 = vsyncpa %s29, 0
    %31 = vsyncpa [#allocation13], 0
    %s32 = scalar_lea.sflag [#allocation13], 1
    %33 = vsyncpa %s32, 0
    %34 = vsyncpa [#allocation16], 0
    %s35 = scalar_lea.sflag [#allocation16], 1
    %36 = vsyncpa %s35, 0
    %37 = vsyncpa [#allocation19], 0
    %s38 = scalar_lea.sflag [#allocation19], 1
    %39 = vsyncpa %s38, 0
    %40 = vsyncpa [#allocation22], 0
    %41 = vsyncpa [#allocation5], 0
    loop: start=0, step=1, limit=5
    $region2: #{embed_part_forward.3} parent=1 // loop_pre_header
      _
    $region3: #{embed_part_forward.3} parent=1 // loop_header
      %s43 = sphi 0, %s47
      %p44 = scmp.ge.s32.totalorder %s43, 5
      %s50 = sphi 0, %s62
      %s51 = sphi 0, %s58
      %s52 = sphi 0, %s50
      %s53 = sphi 0, %s51
      %s54 = sphi 0, %s52
      %s55 = sphi 0, %s53
      %s65 = sphi 0, %s67
      %s68 = sphi 0, %s65
      %s69 = sphi 0, %s68
      %s85 = sphi 0, %s69
      %s91 = sphi 0, %s93
      %s94 = sphi 0, %s91
      %s95 = sphi 0, %s94
      %s111 = sphi 0, %s95
      %s117 = sphi 0, %s119
      %s120 = sphi 0, %s117
      %s121 = sphi 0, %s120
      %s137 = sphi 0, %s121
      %s143 = sphi 0, %s145
      %s146 = sphi 0, %s143
      %s147 = sphi 0, %s146
      %s163 = sphi 0, %s147
      %s169 = sphi 0, %s171
      %s172 = sphi 0, %s169
      %s173 = sphi 0, %s172
      %s189 = sphi 0, %s173
      %s195 = sphi 0, %s197
      %s198 = sphi 0, %s195
      %s199 = sphi 0, %s198
      %s215 = sphi 0, %s199
      %s221 = sphi 0, %s223
      %s224 = sphi 0, %s221
      %s225 = sphi 0, %s224
      %s241 = sphi 0, %s225
      %s247 = sphi 0, %s249
      %s250 = sphi 0, %s247
      %s251 = sphi 0, %s250
      %s267 = sphi 0, %s251
      %s273 = sphi 0, %s275
      %s276 = sphi 0, %s273
      %s277 = sphi 0, %s276
      %s293 = sphi 0, %s277
      %s299 = sphi 0, %s301
      %s302 = sphi 0, %s299
      %s303 = sphi 0, %s302
      %s319 = sphi 0, %s303
      %s325 = sphi 0, %s327
      %s328 = sphi 0, %s325
      %s329 = sphi 0, %s328
      %s345 = sphi 0, %s329
      %s351 = sphi 0, %s353
      %s354 = sphi 0, %s351
      %s355 = sphi 0, %s354
      %s371 = sphi 0, %s355
      %s377 = sphi 0, %s379
      %s380 = sphi 0, %s377
      %s381 = sphi 0, %s380
      %s397 = sphi 0, %s381
      %s403 = sphi 0, %s405
      %s406 = sphi 0, %s403
      %s407 = sphi 0, %s406
      %s423 = sphi 0, %s407
      %s429 = sphi 0, %s431
      %s432 = sphi 0, %s429
      %s433 = sphi 0, %s432
      %s449 = sphi 0, %s433
      %s453 = sphi 0, %s453
      %s455 = sphi 0, %s453
      %s456 = sphi 0, %s455
      %s470 = sphi 0, %s456
      %s474 = sphi 0, %s474
      %s476 = sphi 0, %s474
      %s477 = sphi 0, %s476
      %s491 = sphi 0, %s477
      %s497 = sphi 0, %s499
      %s500 = sphi 0, %s497
      %s501 = sphi 0, %s500
      %s517 = sphi 0, %s501
    $region4: #{embed_part_forward.3} parent=1 // loop_header_branch
      %46 = sbr.rel (%p44) target = $region8
    $region5: #{embed_part_forward.3} parent=1 // loop_body
      %s48 = ssub.s32 %s43, 1
      %s49 = ssub.s32 %s43, 2
      %s56 = sadd.s32 1, %s51
      %p57 = scmp.ge.s32.totalorder %s56, 3
      %s58 = scalar_select %p57, 0, %s56
      %s59 = sadd.s32 1, %s50
      %s60 = scalar_select %p57, %s59, %s50
      %p61 = scmp.ge.s32.totalorder %s60, 1
      %s62 = scalar_select %p61, 0, %s60
      %s63 = ssub.s32 %s50, %s62
      %p64 = scmp.eq.s32.totalorder %s63, 0
      %s66 = sadd.s32 %s65, 1
      %s67 = scalar_select %p64, %s65, %s66
      %p70 = pneg %p64
      %p71 = scmp.eq.s32.totalorder %s43, 2
      %p72 = por %p70, %p71
      %p73 = scmp.ne.s32.totalorder %s65, %s68
      %p74 = scmp.eq.s32.totalorder %s43, 0
      %p75 = por %p73, %p74
      %p76 = scmp.ne.s32.totalorder %s65, %s68
      %p77 = scmp.eq.s32.totalorder %s48, 2
      %p78 = por %p76, %p77
      %p79 = scmp.ne.s32.totalorder %s68, %s69
      %p80 = scmp.eq.s32.totalorder %s48, 0
      %p81 = por %p79, %p80
      %p82 = scmp.ne.s32.totalorder %s68, %s69
      %p83 = scmp.eq.s32.totalorder %s49, 2
      %p84 = por %p82, %p83
      %p86 = scmp.ne.s32.totalorder %s69, %s85
      %p87 = scmp.eq.s32.totalorder %s49, 0
      %p88 = por %p86, %p87
      %s89 = ssub.s32 %s50, %s62
      %p90 = scmp.eq.s32.totalorder %s89, 0
      %s92 = sadd.s32 %s91, 1
      %s93 = scalar_select %p90, %s91, %s92
      %p96 = pneg %p90
      %p97 = scmp.eq.s32.totalorder %s43, 2
      %p98 = por %p96, %p97
      %p99 = scmp.ne.s32.totalorder %s91, %s94
      %p100 = scmp.eq.s32.totalorder %s43, 0
      %p101 = por %p99, %p100
      %p102 = scmp.ne.s32.totalorder %s91, %s94
      %p103 = scmp.eq.s32.totalorder %s48, 2
      %p104 = por %p102, %p103
      %p105 = scmp.ne.s32.totalorder %s94, %s95
      %p106 = scmp.eq.s32.totalorder %s48, 0
      %p107 = por %p105, %p106
      %p108 = scmp.ne.s32.totalorder %s94, %s95
      %p109 = scmp.eq.s32.totalorder %s49, 2
      %p110 = por %p108, %p109
      %p112 = scmp.ne.s32.totalorder %s95, %s111
      %p113 = scmp.eq.s32.totalorder %s49, 0
      %p114 = por %p112, %p113
      %s115 = ssub.s32 %s50, %s62
      %p116 = scmp.eq.s32.totalorder %s115, 0
      %s118 = sadd.s32 %s117, 1
      %s119 = scalar_select %p116, %s117, %s118
      %p122 = pneg %p116
      %p123 = scmp.eq.s32.totalorder %s43, 2
      %p124 = por %p122, %p123
      %p125 = scmp.ne.s32.totalorder %s117, %s120
      %p126 = scmp.eq.s32.totalorder %s43, 0
      %p127 = por %p125, %p126
      %p128 = scmp.ne.s32.totalorder %s117, %s120
      %p129 = scmp.eq.s32.totalorder %s48, 2
      %p130 = por %p128, %p129
      %p131 = scmp.ne.s32.totalorder %s120, %s121
      %p132 = scmp.eq.s32.totalorder %s48, 0
      %p133 = por %p131, %p132
      %p134 = scmp.ne.s32.totalorder %s120, %s121
      %p135 = scmp.eq.s32.totalorder %s49, 2
      %p136 = por %p134, %p135
      %p138 = scmp.ne.s32.totalorder %s121, %s137
      %p139 = scmp.eq.s32.totalorder %s49, 0
      %p140 = por %p138, %p139
      %s141 = ssub.s32 %s51, %s58
      %p142 = scmp.eq.s32.totalorder %s141, 0
      %s144 = sadd.s32 %s143, 1
      %s145 = scalar_select %p142, %s143, %s144
      %p148 = pneg %p142
      %p149 = scmp.eq.s32.totalorder %s43, 2
      %p150 = por %p148, %p149
      %p151 = scmp.ne.s32.totalorder %s143, %s146
      %p152 = scmp.eq.s32.totalorder %s43, 0
      %p153 = por %p151, %p152
      %p154 = scmp.ne.s32.totalorder %s143, %s146
      %p155 = scmp.eq.s32.totalorder %s48, 2
      %p156 = por %p154, %p155
      %p157 = scmp.ne.s32.totalorder %s146, %s147
      %p158 = scmp.eq.s32.totalorder %s48, 0
      %p159 = por %p157, %p158
      %p160 = scmp.ne.s32.totalorder %s146, %s147
      %p161 = scmp.eq.s32.totalorder %s49, 2
      %p162 = por %p160, %p161
      %p164 = scmp.ne.s32.totalorder %s147, %s163
      %p165 = scmp.eq.s32.totalorder %s49, 0
      %p166 = por %p164, %p165
      %s167 = ssub.s32 %s51, %s58
      %p168 = scmp.eq.s32.totalorder %s167, 0
      %s170 = sadd.s32 %s169, 1
      %s171 = scalar_select %p168, %s169, %s170
      %p174 = pneg %p168
      %p175 = scmp.eq.s32.totalorder %s43, 2
      %p176 = por %p174, %p175
      %p177 = scmp.ne.s32.totalorder %s169, %s172
      %p178 = scmp.eq.s32.totalorder %s43, 0
      %p179 = por %p177, %p178
      %p180 = scmp.ne.s32.totalorder %s169, %s172
      %p181 = scmp.eq.s32.totalorder %s48, 2
      %p182 = por %p180, %p181
      %p183 = scmp.ne.s32.totalorder %s172, %s173
      %p184 = scmp.eq.s32.totalorder %s48, 0
      %p185 = por %p183, %p184
      %p186 = scmp.ne.s32.totalorder %s172, %s173
      %p187 = scmp.eq.s32.totalorder %s49, 2
      %p188 = por %p186, %p187
      %p190 = scmp.ne.s32.totalorder %s173, %s189
      %p191 = scmp.eq.s32.totalorder %s49, 0
      %p192 = por %p190, %p191
      %s193 = ssub.s32 %s51, %s58
      %p194 = scmp.eq.s32.totalorder %s193, 0
      %s196 = sadd.s32 %s195, 1
      %s197 = scalar_select %p194, %s195, %s196
      %p200 = pneg %p194
      %p201 = scmp.eq.s32.totalorder %s43, 2
      %p202 = por %p200, %p201
      %p203 = scmp.ne.s32.totalorder %s195, %s198
      %p204 = scmp.eq.s32.totalorder %s43, 0
      %p205 = por %p203, %p204
      %p206 = scmp.ne.s32.totalorder %s195, %s198
      %p207 = scmp.eq.s32.totalorder %s48, 2
      %p208 = por %p206, %p207
      %p209 = scmp.ne.s32.totalorder %s198, %s199
      %p210 = scmp.eq.s32.totalorder %s48, 0
      %p211 = por %p209, %p210
      %p212 = scmp.ne.s32.totalorder %s198, %s199
      %p213 = scmp.eq.s32.totalorder %s49, 2
      %p214 = por %p212, %p213
      %p216 = scmp.ne.s32.totalorder %s199, %s215
      %p217 = scmp.eq.s32.totalorder %s49, 0
      %p218 = por %p216, %p217
      %s219 = ssub.s32 %s51, %s58
      %p220 = scmp.eq.s32.totalorder %s219, 0
      %s222 = sadd.s32 %s221, 1
      %s223 = scalar_select %p220, %s221, %s222
      %p226 = pneg %p220
      %p227 = scmp.eq.s32.totalorder %s43, 2
      %p228 = por %p226, %p227
      %p229 = scmp.ne.s32.totalorder %s221, %s224
      %p230 = scmp.eq.s32.totalorder %s43, 0
      %p231 = por %p229, %p230
      %p232 = scmp.ne.s32.totalorder %s221, %s224
      %p233 = scmp.eq.s32.totalorder %s48, 2
      %p234 = por %p232, %p233
      %p235 = scmp.ne.s32.totalorder %s224, %s225
      %p236 = scmp.eq.s32.totalorder %s48, 0
      %p237 = por %p235, %p236
      %p238 = scmp.ne.s32.totalorder %s224, %s225
      %p239 = scmp.eq.s32.totalorder %s49, 2
      %p240 = por %p238, %p239
      %p242 = scmp.ne.s32.totalorder %s225, %s241
      %p243 = scmp.eq.s32.totalorder %s49, 0
      %p244 = por %p242, %p243
      %s245 = ssub.s32 %s51, %s58
      %p246 = scmp.eq.s32.totalorder %s245, 0
      %s248 = sadd.s32 %s247, 1
      %s249 = scalar_select %p246, %s247, %s248
      %p252 = pneg %p246
      %p253 = scmp.eq.s32.totalorder %s43, 2
      %p254 = por %p252, %p253
      %p255 = scmp.ne.s32.totalorder %s247, %s250
      %p256 = scmp.eq.s32.totalorder %s43, 0
      %p257 = por %p255, %p256
      %p258 = scmp.ne.s32.totalorder %s247, %s250
      %p259 = scmp.eq.s32.totalorder %s48, 2
      %p260 = por %p258, %p259
      %p261 = scmp.ne.s32.totalorder %s250, %s251
      %p262 = scmp.eq.s32.totalorder %s48, 0
      %p263 = por %p261, %p262
      %p264 = scmp.ne.s32.totalorder %s250, %s251
      %p265 = scmp.eq.s32.totalorder %s49, 2
      %p266 = por %p264, %p265
      %p268 = scmp.ne.s32.totalorder %s251, %s267
      %p269 = scmp.eq.s32.totalorder %s49, 0
      %p270 = por %p268, %p269
      %s271 = ssub.s32 %s51, %s58
      %p272 = scmp.eq.s32.totalorder %s271, 0
      %s274 = sadd.s32 %s273, 1
      %s275 = scalar_select %p272, %s273, %s274
      %p278 = pneg %p272
      %p279 = scmp.eq.s32.totalorder %s43, 2
      %p280 = por %p278, %p279
      %p281 = scmp.ne.s32.totalorder %s273, %s276
      %p282 = scmp.eq.s32.totalorder %s43, 0
      %p283 = por %p281, %p282
      %p284 = scmp.ne.s32.totalorder %s273, %s276
      %p285 = scmp.eq.s32.totalorder %s48, 2
      %p286 = por %p284, %p285
      %p287 = scmp.ne.s32.totalorder %s276, %s277
      %p288 = scmp.eq.s32.totalorder %s48, 0
      %p289 = por %p287, %p288
      %p290 = scmp.ne.s32.totalorder %s276, %s277
      %p291 = scmp.eq.s32.totalorder %s49, 2
      %p292 = por %p290, %p291
      %p294 = scmp.ne.s32.totalorder %s277, %s293
      %p295 = scmp.eq.s32.totalorder %s49, 0
      %p296 = por %p294, %p295
      %s297 = ssub.s32 %s51, %s58
      %p298 = scmp.eq.s32.totalorder %s297, 0
      %s300 = sadd.s32 %s299, 1
      %s301 = scalar_select %p298, %s299, %s300
      %p304 = pneg %p298
      %p305 = scmp.eq.s32.totalorder %s43, 2
      %p306 = por %p304, %p305
      %p307 = scmp.ne.s32.totalorder %s299, %s302
      %p308 = scmp.eq.s32.totalorder %s43, 0
      %p309 = por %p307, %p308
      %p310 = scmp.ne.s32.totalorder %s299, %s302
      %p311 = scmp.eq.s32.totalorder %s48, 2
      %p312 = por %p310, %p311
      %p313 = scmp.ne.s32.totalorder %s302, %s303
      %p314 = scmp.eq.s32.totalorder %s48, 0
      %p315 = por %p313, %p314
      %p316 = scmp.ne.s32.totalorder %s302, %s303
      %p317 = scmp.eq.s32.totalorder %s49, 2
      %p318 = por %p316, %p317
      %p320 = scmp.ne.s32.totalorder %s303, %s319
      %p321 = scmp.eq.s32.totalorder %s49, 0
      %p322 = por %p320, %p321
      %s323 = ssub.s32 %s51, %s58
      %p324 = scmp.eq.s32.totalorder %s323, 0
      %s326 = sadd.s32 %s325, 1
      %s327 = scalar_select %p324, %s325, %s326
      %p330 = pneg %p324
      %p331 = scmp.eq.s32.totalorder %s43, 2
      %p332 = por %p330, %p331
      %p333 = scmp.ne.s32.totalorder %s325, %s328
      %p334 = scmp.eq.s32.totalorder %s43, 0
      %p335 = por %p333, %p334
      %p336 = scmp.ne.s32.totalorder %s325, %s328
      %p337 = scmp.eq.s32.totalorder %s48, 2
      %p338 = por %p336, %p337
      %p339 = scmp.ne.s32.totalorder %s328, %s329
      %p340 = scmp.eq.s32.totalorder %s48, 0
      %p341 = por %p339, %p340
      %p342 = scmp.ne.s32.totalorder %s328, %s329
      %p343 = scmp.eq.s32.totalorder %s49, 2
      %p344 = por %p342, %p343
      %p346 = scmp.ne.s32.totalorder %s329, %s345
      %p347 = scmp.eq.s32.totalorder %s49, 0
      %p348 = por %p346, %p347
      %s349 = ssub.s32 %s51, %s58
      %p350 = scmp.eq.s32.totalorder %s349, 0
      %s352 = sadd.s32 %s351, 1
      %s353 = scalar_select %p350, %s351, %s352
      %p356 = pneg %p350
      %p357 = scmp.eq.s32.totalorder %s43, 2
      %p358 = por %p356, %p357
      %p359 = scmp.ne.s32.totalorder %s351, %s354
      %p360 = scmp.eq.s32.totalorder %s43, 0
      %p361 = por %p359, %p360
      %p362 = scmp.ne.s32.totalorder %s351, %s354
      %p363 = scmp.eq.s32.totalorder %s48, 2
      %p364 = por %p362, %p363
      %p365 = scmp.ne.s32.totalorder %s354, %s355
      %p366 = scmp.eq.s32.totalorder %s48, 0
      %p367 = por %p365, %p366
      %p368 = scmp.ne.s32.totalorder %s354, %s355
      %p369 = scmp.eq.s32.totalorder %s49, 2
      %p370 = por %p368, %p369
      %p372 = scmp.ne.s32.totalorder %s355, %s371
      %p373 = scmp.eq.s32.totalorder %s49, 0
      %p374 = por %p372, %p373
      %s375 = ssub.s32 %s51, %s58
      %p376 = scmp.eq.s32.totalorder %s375, 0
      %s378 = sadd.s32 %s377, 1
      %s379 = scalar_select %p376, %s377, %s378
      %p382 = pneg %p376
      %p383 = scmp.eq.s32.totalorder %s43, 2
      %p384 = por %p382, %p383
      %p385 = scmp.ne.s32.totalorder %s377, %s380
      %p386 = scmp.eq.s32.totalorder %s43, 0
      %p387 = por %p385, %p386
      %p388 = scmp.ne.s32.totalorder %s377, %s380
      %p389 = scmp.eq.s32.totalorder %s48, 2
      %p390 = por %p388, %p389
      %p391 = scmp.ne.s32.totalorder %s380, %s381
      %p392 = scmp.eq.s32.totalorder %s48, 0
      %p393 = por %p391, %p392
      %p394 = scmp.ne.s32.totalorder %s380, %s381
      %p395 = scmp.eq.s32.totalorder %s49, 2
      %p396 = por %p394, %p395
      %p398 = scmp.ne.s32.totalorder %s381, %s397
      %p399 = scmp.eq.s32.totalorder %s49, 0
      %p400 = por %p398, %p399
      %s401 = ssub.s32 %s51, %s58
      %p402 = scmp.eq.s32.totalorder %s401, 0
      %s404 = sadd.s32 %s403, 1
      %s405 = scalar_select %p402, %s403, %s404
      %p408 = pneg %p402
      %p409 = scmp.eq.s32.totalorder %s43, 2
      %p410 = por %p408, %p409
      %p411 = scmp.ne.s32.totalorder %s403, %s406
      %p412 = scmp.eq.s32.totalorder %s43, 0
      %p413 = por %p411, %p412
      %p414 = scmp.ne.s32.totalorder %s403, %s406
      %p415 = scmp.eq.s32.totalorder %s48, 2
      %p416 = por %p414, %p415
      %p417 = scmp.ne.s32.totalorder %s406, %s407
      %p418 = scmp.eq.s32.totalorder %s48, 0
      %p419 = por %p417, %p418
      %p420 = scmp.ne.s32.totalorder %s406, %s407
      %p421 = scmp.eq.s32.totalorder %s49, 2
      %p422 = por %p420, %p421
      %p424 = scmp.ne.s32.totalorder %s407, %s423
      %p425 = scmp.eq.s32.totalorder %s49, 0
      %p426 = por %p424, %p425
      %s427 = ssub.s32 %s51, %s58
      %p428 = scmp.eq.s32.totalorder %s427, 0
      %s430 = sadd.s32 %s429, 1
      %s431 = scalar_select %p428, %s429, %s430
      %p434 = pneg %p428
      %p435 = scmp.eq.s32.totalorder %s43, 2
      %p436 = por %p434, %p435
      %p437 = scmp.ne.s32.totalorder %s429, %s432
      %p438 = scmp.eq.s32.totalorder %s43, 0
      %p439 = por %p437, %p438
      %p440 = scmp.ne.s32.totalorder %s429, %s432
      %p441 = scmp.eq.s32.totalorder %s48, 2
      %p442 = por %p440, %p441
      %p443 = scmp.ne.s32.totalorder %s432, %s433
      %p444 = scmp.eq.s32.totalorder %s48, 0
      %p445 = por %p443, %p444
      %p446 = scmp.ne.s32.totalorder %s432, %s433
      %p447 = scmp.eq.s32.totalorder %s49, 2
      %p448 = por %p446, %p447
      %p450 = scmp.ne.s32.totalorder %s433, %s449
      %p451 = scmp.eq.s32.totalorder %s49, 0
      %p452 = por %p450, %p451
      %s454 = sadd.s32 %s453, 1
      %p457 = scmp.eq.s32.totalorder %s43, 2
      %p458 = scmp.ne.s32.totalorder %s453, %s455
      %p459 = scmp.eq.s32.totalorder %s43, 0
      %p460 = por %p458, %p459
      %p461 = scmp.ne.s32.totalorder %s453, %s455
      %p462 = scmp.eq.s32.totalorder %s48, 2
      %p463 = por %p461, %p462
      %p464 = scmp.ne.s32.totalorder %s455, %s456
      %p465 = scmp.eq.s32.totalorder %s48, 0
      %p466 = por %p464, %p465
      %p467 = scmp.ne.s32.totalorder %s455, %s456
      %p468 = scmp.eq.s32.totalorder %s49, 2
      %p469 = por %p467, %p468
      %p471 = scmp.ne.s32.totalorder %s456, %s470
      %p472 = scmp.eq.s32.totalorder %s49, 0
      %p473 = por %p471, %p472
      %s475 = sadd.s32 %s474, 1
      %p478 = scmp.eq.s32.totalorder %s43, 2
      %p479 = scmp.ne.s32.totalorder %s474, %s476
      %p480 = scmp.eq.s32.totalorder %s43, 0
      %p481 = por %p479, %p480
      %p482 = scmp.ne.s32.totalorder %s474, %s476
      %p483 = scmp.eq.s32.totalorder %s48, 2
      %p484 = por %p482, %p483
      %p485 = scmp.ne.s32.totalorder %s476, %s477
      %p486 = scmp.eq.s32.totalorder %s48, 0
      %p487 = por %p485, %p486
      %p488 = scmp.ne.s32.totalorder %s476, %s477
      %p489 = scmp.eq.s32.totalorder %s49, 2
      %p490 = por %p488, %p489
      %p492 = scmp.ne.s32.totalorder %s477, %s491
      %p493 = scmp.eq.s32.totalorder %s49, 0
      %p494 = por %p492, %p493
      %s495 = ssub.s32 %s50, %s62
      %p496 = scmp.eq.s32.totalorder %s495, 0
      %s498 = sadd.s32 %s497, 1
      %s499 = scalar_select %p496, %s497, %s498
      %p502 = pneg %p496
      %p503 = scmp.eq.s32.totalorder %s43, 2
      %p504 = por %p502, %p503
      %p505 = scmp.ne.s32.totalorder %s497, %s500
      %p506 = scmp.eq.s32.totalorder %s43, 0
      %p507 = por %p505, %p506
      %p508 = scmp.ne.s32.totalorder %s497, %s500
      %p509 = scmp.eq.s32.totalorder %s48, 2
      %p510 = por %p508, %p509
      %p511 = scmp.ne.s32.totalorder %s500, %s501
      %p512 = scmp.eq.s32.totalorder %s48, 0
      %p513 = por %p511, %p512
      %p514 = scmp.ne.s32.totalorder %s500, %s501
      %p515 = scmp.eq.s32.totalorder %s49, 2
      %p516 = por %p514, %p515
      %p518 = scmp.ne.s32.totalorder %s501, %s517
      %p519 = scmp.eq.s32.totalorder %s49, 0
      %p520 = por %p518, %p519
      %p521 = scmp.le.s32.totalorder 1, %s43
      %p522 = scmp.lt.s32.totalorder %s43, 4
      %p523 = pnand %p521, %p522
      %p524 = pneg %p523
      // Predicated region
      $region9: #{embed_part_forward.3} parent=5 // pred_check
        _
      $region10: #{embed_part_forward.3} parent=5 // pred_check_branch
        %526 = sbr.rel (%p523) target = $region12
      $region11: #{embed_part_forward.3} parent=5 // pred_region
        %s527 = ssub.s32 %s43, 1
        // Predicated region
        $region13: #{embed_part_forward.3} parent=11 // pred_check
          %p528 = pneg %p81
        $region14: #{embed_part_forward.3} parent=11 // pred_check_branch
          %530 = sbr.rel (%p528) target = $region16
        $region15: #{embed_part_forward.3} parent=11 // pred_region
          %s531 = smul.u32 2, %s52
          %p532 = scmp.lt.s32.totalorder %s531, 1
          %s533 = scalar_select %p532, %s531, 1
          %s534 = smul.addr %s533, 8
          %s535 = scalar_lea.vmem %s0, %s534
          %s536 = smul.u32 2, %s52
        $region16: #{embed_part_forward.3} parent=11 // pred_fallthru
          _
        // Predicated region
        $region17: #{embed_part_forward.3} parent=11 // pred_check
          %p537 = pneg %p107
        $region18: #{embed_part_forward.3} parent=11 // pred_check_branch
          %539 = sbr.rel (%p537) target = $region20
        $region19: #{embed_part_forward.3} parent=11 // pred_region
          %s540 = smul.u32 2, %s52
          %p541 = scmp.lt.s32.totalorder %s540, 1
          %s542 = scalar_select %p541, %s540, 1
          %s543 = scalar_lea.vmem %s1, %s542
          %s544 = smul.u32 2, %s52
        $region20: #{embed_part_forward.3} parent=11 // pred_fallthru
          _
        // Predicated region
        $region21: #{embed_part_forward.3} parent=11 // pred_check
          %p545 = pneg %p133
        $region22: #{embed_part_forward.3} parent=11 // pred_check_branch
          %547 = sbr.rel (%p545) target = $region24
        $region23: #{embed_part_forward.3} parent=11 // pred_region
          %s548 = smul.u32 2, %s52
          %p549 = scmp.lt.s32.totalorder %s548, 1
          %s550 = scalar_select %p549, %s548, 1
          %s551 = smul.addr %s550, 8
          %s552 = scalar_lea.vmem %s2, %s551
          %s553 = smul.u32 2, %s52
        $region24: #{embed_part_forward.3} parent=11 // pred_fallthru
          _
        // Predicated region
        $region25: #{embed_part_forward.3} parent=11 // pred_check
          %p554 = pneg %p466
        $region26: #{embed_part_forward.3} parent=11 // pred_check_branch
          %556 = sbr.rel (%p554) target = $region28
        $region27: #{embed_part_forward.3} parent=11 // pred_region
          _
        $region28: #{embed_part_forward.3} parent=11 // pred_fallthru
          _
        // Predicated region
        $region29: #{embed_part_forward.3} parent=11 // pred_check
          %p557 = pneg %p487
        $region30: #{embed_part_forward.3} parent=11 // pred_check_branch
          %559 = sbr.rel (%p557) target = $region32
        $region31: #{embed_part_forward.3} parent=11 // pred_region
          %s561 = ssub.s32 16, 16
          %562 = vsyncadd [#allocation22], %s561
          %s564 = sshll.u32 [#allocation21], 4
          %s565 = int_to_ptr.vmem [resolvable:$true] %s564
          %567 = dma.hbm_to_vmem [thread:$0]  %s16, 16, %s565, [#allocation22]
        $region32: #{embed_part_forward.3} parent=11 // pred_fallthru
          _
      $region12: #{embed_part_forward.3} parent=5 // pred_fallthru
        _
      %p568 = scmp.lt.s32.totalorder %s43, 3
      // Predicated region
      $region33: #{embed_part_forward.3} parent=5 // pred_check
        %p569 = pneg %p568
      $region34: #{embed_part_forward.3} parent=5 // pred_check_branch
        %571 = sbr.rel (%p569) target = $region36
      $region35: #{embed_part_forward.3} parent=5 // pred_region
        // Predicated region
        $region37: #{embed_part_forward.3} parent=35 // pred_check
          %p572 = pneg %p153
        $region38: #{embed_part_forward.3} parent=35 // pred_check_branch
          %574 = sbr.rel (%p572) target = $region40
        $region39: #{embed_part_forward.3} parent=35 // pred_region
          %s575 = sand.u32 %s143, 1
          %s576 = scalar_lea.sflag [#allocation4], %s575
          %s577 = sand.u32 %s143, 1
          %s578 = scalar_lea.vmem [#allocation3], %s577
          %s580 = ssub.s32 16, 16
          %581 = vsyncadd %s576, %s580
          %s582 = smul.addr %s51, 16
          %s583 = scalar_lea.hbm %s3, %s582
          %s585 = sshll.u32 %s578, 4
          %s586 = int_to_ptr.vmem [resolvable:$true] %s585
          %588 = dma.hbm_to_vmem [thread:$0]  %s583, 16, %s586, %s576
        $region40: #{embed_part_forward.3} parent=35 // pred_fallthru
          _
        // Predicated region
        $region41: #{embed_part_forward.3} parent=35 // pred_check
          %p589 = pneg %p179
        $region42: #{embed_part_forward.3} parent=35 // pred_check_branch
          %591 = sbr.rel (%p589) target = $region44
        $region43: #{embed_part_forward.3} parent=35 // pred_region
          %s592 = sand.u32 %s43, 1
          %s593 = scalar_lea.sflag [#allocation7], %s592
          %s594 = sand.u32 %s169, 1
          %s595 = scalar_lea.vmem [#allocation6], %s594
          %s597 = ssub.s32 16, 16
          %598 = vsyncadd %s593, %s597
          %s599 = smul.addr %s51, 16
          %s600 = scalar_lea.hbm %s4, %s599
          %s602 = sshll.u32 %s595, 4
          %s603 = int_to_ptr.vmem [resolvable:$true] %s602
          %605 = dma.hbm_to_vmem [thread:$0]  %s600, 16, %s603, %s593
        $region44: #{embed_part_forward.3} parent=35 // pred_fallthru
          _
        // Predicated region
        $region45: #{embed_part_forward.3} parent=35 // pred_check
          %p606 = pneg %p205
        $region46: #{embed_part_forward.3} parent=35 // pred_check_branch
          %608 = sbr.rel (%p606) target = $region48
        $region47: #{embed_part_forward.3} parent=35 // pred_region
          %s609 = sand.u32 %s43, 1
          %s610 = scalar_lea.sflag [#allocation7], %s609
          %s611 = sand.u32 %s195, 1
          %s612 = smul.addr %s611, 192
          %s613 = scalar_lea.vmem [#allocation8], %s612
          %s615 = ssub.s32 3072, 3072
          %616 = vsyncadd %s610, %s615
          %s617 = smul.addr %s51, 48
          %s618 = smul.addr %s617, 64
          %s619 = scalar_lea.hbm %s5, %s618
          %s620 = sshll.u32 %s613, 4
          %s621 = int_to_ptr.vmem [resolvable:$true] %s620
          %626 = dma.hbm_to_vmem [thread:$0]  %s619, 3072, %s621, %s610, 192, 192, 12
        $region48: #{embed_part_forward.3} parent=35 // pred_fallthru
          _
        // Predicated region
        $region49: #{embed_part_forward.3} parent=35 // pred_check
          %p627 = pneg %p231
        $region50: #{embed_part_forward.3} parent=35 // pred_check_branch
          %629 = sbr.rel (%p627) target = $region52
        $region51: #{embed_part_forward.3} parent=35 // pred_region
          %s630 = sand.u32 %s43, 1
          %s631 = scalar_lea.sflag [#allocation10], %s630
          %s632 = sand.u32 %s221, 1
          %s633 = smul.addr %s632, 3
          %s634 = scalar_lea.vmem [#allocation9], %s633
          %s636 = ssub.s32 48, 48
          %637 = vsyncadd %s631, %s636
          %s638 = smul.addr %s51, 3
          %s639 = smul.addr %s638, 16
          %s640 = scalar_lea.hbm %s6, %s639
          %s642 = sshll.u32 %s634, 4
          %s643 = int_to_ptr.vmem [resolvable:$true] %s642
          %645 = dma.hbm_to_vmem [thread:$0]  %s640, 48, %s643, %s631
        $region52: #{embed_part_forward.3} parent=35 // pred_fallthru
          _
        // Predicated region
        $region53: #{embed_part_forward.3} parent=35 // pred_check
          %p646 = pneg %p257
        $region54: #{embed_part_forward.3} parent=35 // pred_check_branch
          %648 = sbr.rel (%p646) target = $region56
        $region55: #{embed_part_forward.3} parent=35 // pred_region
          %p649 = scmp.lt.s32.totalorder %s51, 2
          %s650 = scalar_select %p649, %s51, 2
          %s651 = smul.addr %s650, 16
          %s652 = smul.addr %s651, 4
          %s653 = scalar_lea.vmem %s7, %s652
        $region56: #{embed_part_forward.3} parent=35 // pred_fallthru
          _
        // Predicated region
        $region57: #{embed_part_forward.3} parent=35 // pred_check
          %p654 = pneg %p283
        $region58: #{embed_part_forward.3} parent=35 // pred_check_branch
          %656 = sbr.rel (%p654) target = $region60
        $region59: #{embed_part_forward.3} parent=35 // pred_region
          %s657 = sand.u32 %s43, 1
          %s658 = scalar_lea.sflag [#allocation10], %s657
          %s659 = sand.u32 %s273, 1
          %s660 = scalar_lea.vmem [#allocation11], %s659
          %s662 = ssub.s32 16, 16
          %663 = vsyncadd %s658, %s662
          %s664 = smul.addr %s51, 16
          %s665 = scalar_lea.hbm %s8, %s664
          %s667 = sshll.u32 %s660, 4
          %s668 = int_to_ptr.vmem [resolvable:$true] %s667
          %670 = dma.hbm_to_vmem [thread:$0]  %s665, 16, %s668, %s658
        $region60: #{embed_part_forward.3} parent=35 // pred_fallthru
          _
        // Predicated region
        $region61: #{embed_part_forward.3} parent=35 // pred_check
          %p671 = pneg %p309
        $region62: #{embed_part_forward.3} parent=35 // pred_check_branch
          %673 = sbr.rel (%p671) target = $region64
        $region63: #{embed_part_forward.3} parent=35 // pred_region
          %s674 = sand.u32 %s43, 1
          %s675 = scalar_lea.sflag [#allocation13], %s674
          %s676 = sand.u32 %s299, 1
          %s677 = scalar_lea.vmem [#allocation12], %s676
          %s679 = ssub.s32 16, 16
          %680 = vsyncadd %s675, %s679
          %s681 = smul.addr %s51, 16
          %s682 = scalar_lea.hbm %s9, %s681
          %s684 = sshll.u32 %s677, 4
          %s685 = int_to_ptr.vmem [resolvable:$true] %s684
          %687 = dma.hbm_to_vmem [thread:$0]  %s682, 16, %s685, %s675
        $region64: #{embed_part_forward.3} parent=35 // pred_fallthru
          _
        // Predicated region
        $region65: #{embed_part_forward.3} parent=35 // pred_check
          %p688 = pneg %p335
        $region66: #{embed_part_forward.3} parent=35 // pred_check_branch
          %690 = sbr.rel (%p688) target = $region68
        $region67: #{embed_part_forward.3} parent=35 // pred_region
          %s691 = sand.u32 %s43, 1
          %s692 = scalar_lea.sflag [#allocation13], %s691
          %s693 = sand.u32 %s325, 1
          %s694 = scalar_lea.vmem [#allocation14], %s693
          %s696 = ssub.s32 16, 16
          %697 = vsyncadd %s692, %s696
          %s698 = smul.addr %s51, 16
          %s699 = scalar_lea.hbm %s10, %s698
          %s701 = sshll.u32 %s694, 4
          %s702 = int_to_ptr.vmem [resolvable:$true] %s701
          %704 = dma.hbm_to_vmem [thread:$0]  %s699, 16, %s702, %s692
        $region68: #{embed_part_forward.3} parent=35 // pred_fallthru
          _
        // Predicated region
        $region69: #{embed_part_forward.3} parent=35 // pred_check
          %p705 = pneg %p361
        $region70: #{embed_part_forward.3} parent=35 // pred_check_branch
          %707 = sbr.rel (%p705) target = $region72
        $region71: #{embed_part_forward.3} parent=35 // pred_region
          %s708 = sand.u32 %s43, 1
          %s709 = scalar_lea.sflag [#allocation16], %s708
          %s710 = sand.u32 %s351, 1
          %s711 = smul.addr %s710, 256
          %s712 = scalar_lea.vmem [#allocation15], %s711
          %s714 = ssub.s32 4096, 4096
          %715 = vsyncadd %s709, %s714
          %s716 = smul.addr %s51, 64
          %s717 = smul.addr %s716, 64
          %s718 = scalar_lea.hbm %s11, %s717
          %s719 = sshll.u32 %s712, 4
          %s720 = int_to_ptr.vmem [resolvable:$true] %s719
          %725 = dma.hbm_to_vmem [thread:$0]  %s718, 4096, %s720, %s709, 256, 256, 16
        $region72: #{embed_part_forward.3} parent=35 // pred_fallthru
          _
        // Predicated region
        $region73: #{embed_part_forward.3} parent=35 // pred_check
          %p726 = pneg %p387
        $region74: #{embed_part_forward.3} parent=35 // pred_check_branch
          %728 = sbr.rel (%p726) target = $region76
        $region75: #{embed_part_forward.3} parent=35 // pred_region
          %s729 = sand.u32 %s43, 1
          %s730 = scalar_lea.sflag [#allocation16], %s729
          %s731 = sand.u32 %s377, 1
          %s732 = smul.addr %s731, 4
          %s733 = scalar_lea.vmem [#allocation17], %s732
          %s735 = ssub.s32 64, 64
          %736 = vsyncadd %s730, %s735
          %s737 = smul.addr %s51, 4
          %s738 = smul.addr %s737, 16
          %s739 = scalar_lea.hbm %s12, %s738
          %s741 = sshll.u32 %s733, 4
          %s742 = int_to_ptr.vmem [resolvable:$true] %s741
          %744 = dma.hbm_to_vmem [thread:$0]  %s739, 64, %s742, %s730
        $region76: #{embed_part_forward.3} parent=35 // pred_fallthru
          _
        // Predicated region
        $region77: #{embed_part_forward.3} parent=35 // pred_check
          %p745 = pneg %p413
        $region78: #{embed_part_forward.3} parent=35 // pred_check_branch
          %747 = sbr.rel (%p745) target = $region80
        $region79: #{embed_part_forward.3} parent=35 // pred_region
          %s748 = sand.u32 %s43, 1
          %s749 = scalar_lea.sflag [#allocation19], %s748
          %s750 = sand.u32 %s403, 1
          %s751 = smul.addr %s750, 256
          %s752 = scalar_lea.vmem [#allocation18], %s751
          %s754 = ssub.s32 4096, 4096
          %755 = vsyncadd %s749, %s754
          %s756 = smul.addr %s51, 64
          %s757 = smul.addr %s756, 64
          %s758 = scalar_lea.hbm %s13, %s757
          %s759 = sshll.u32 %s752, 4
          %s760 = int_to_ptr.vmem [resolvable:$true] %s759
          %765 = dma.hbm_to_vmem [thread:$0]  %s758, 4096, %s760, %s749, 64, 64, 4
        $region80: #{embed_part_forward.3} parent=35 // pred_fallthru
          _
        // Predicated region
        $region81: #{embed_part_forward.3} parent=35 // pred_check
          %p766 = pneg %p439
        $region82: #{embed_part_forward.3} parent=35 // pred_check_branch
          %768 = sbr.rel (%p766) target = $region84
        $region83: #{embed_part_forward.3} parent=35 // pred_region
          %s769 = sand.u32 %s43, 1
          %s770 = scalar_lea.sflag [#allocation19], %s769
          %s771 = sand.u32 %s429, 1
          %s772 = scalar_lea.vmem [#allocation20], %s771
          %s774 = ssub.s32 16, 16
          %775 = vsyncadd %s770, %s774
          %s776 = smul.addr %s51, 16
          %s777 = scalar_lea.hbm %s14, %s776
          %s779 = sshll.u32 %s772, 4
          %s780 = int_to_ptr.vmem [resolvable:$true] %s779
          %782 = dma.hbm_to_vmem [thread:$0]  %s777, 16, %s780, %s770
        $region84: #{embed_part_forward.3} parent=35 // pred_fallthru
          _
      $region36: #{embed_part_forward.3} parent=5 // pred_fallthru
        _
      %p783 = scmp.le.s32.totalorder 1, %s43
      %p784 = scmp.lt.s32.totalorder %s43, 4
      %p785 = pnand %p783, %p784
      %p786 = pneg %p785
      // Predicated region
      $region85: #{embed_part_forward.3} parent=5 // pred_check
        _
      $region86: #{embed_part_forward.3} parent=5 // pred_check_branch
        %788 = sbr.rel (%p785) target = $region88
      $region87: #{embed_part_forward.3} parent=5 // pred_region
        %s789 = ssub.s32 %s43, 1
        %s790 = sand.u32 %s146, 1
        %s791 = scalar_lea.sflag [#allocation4], %s790
        %s792 = sand.u32 %s146, 1
        %s793 = scalar_lea.vmem [#allocation3], %s792
        // Predicated region
        $region89: #{embed_part_forward.3} parent=87 // pred_check
          %p794 = pneg %p159
        $region90: #{embed_part_forward.3} parent=87 // pred_check_branch
          %796 = sbr.rel (%p794) target = $region92
        $region91: #{embed_part_forward.3} parent=87 // pred_region
          %797 = dma.done %s791, 16
        $region92: #{embed_part_forward.3} parent=87 // pred_fallthru
          _
        %s798 = sand.u32 %s48, 1
        %s799 = scalar_lea.sflag [#allocation7], %s798
        %s800 = sand.u32 %s172, 1
        %s801 = scalar_lea.vmem [#allocation6], %s800
        // Predicated region
        $region93: #{embed_part_forward.3} parent=87 // pred_check
          %p802 = pneg %p185
        $region94: #{embed_part_forward.3} parent=87 // pred_check_branch
          %804 = sbr.rel (%p802) target = $region96
        $region95: #{embed_part_forward.3} parent=87 // pred_region
          %805 = dma.done %s799, 16
        $region96: #{embed_part_forward.3} parent=87 // pred_fallthru
          _
        %s806 = sand.u32 %s48, 1
        %s807 = scalar_lea.sflag [#allocation7], %s806
        %s808 = sand.u32 %s198, 1
        %s809 = smul.addr %s808, 192
        %s810 = scalar_lea.vmem [#allocation8], %s809
        // Predicated region
        $region97: #{embed_part_forward.3} parent=87 // pred_check
          %p811 = pneg %p211
        $region98: #{embed_part_forward.3} parent=87 // pred_check_branch
          %813 = sbr.rel (%p811) target = $region100
        $region99: #{embed_part_forward.3} parent=87 // pred_region
          %814 = dma.done %s807, 3072
        $region100: #{embed_part_forward.3} parent=87 // pred_fallthru
          _
        %s815 = sand.u32 %s48, 1
        %s816 = scalar_lea.sflag [#allocation10], %s815
        %s817 = sand.u32 %s224, 1
        %s818 = smul.addr %s817, 3
        %s819 = scalar_lea.vmem [#allocation9], %s818
        // Predicated region
        $region101: #{embed_part_forward.3} parent=87 // pred_check
          %p820 = pneg %p237
        $region102: #{embed_part_forward.3} parent=87 // pred_check_branch
          %822 = sbr.rel (%p820) target = $region104
        $region103: #{embed_part_forward.3} parent=87 // pred_region
          %823 = dma.done %s816, 48
        $region104: #{embed_part_forward.3} parent=87 // pred_fallthru
          _
        %s824 = sand.u32 %s48, 1
        %s825 = scalar_lea.sflag [#allocation10], %s824
        %s826 = sand.u32 %s276, 1
        %s827 = scalar_lea.vmem [#allocation11], %s826
        // Predicated region
        $region105: #{embed_part_forward.3} parent=87 // pred_check
          %p828 = pneg %p289
        $region106: #{embed_part_forward.3} parent=87 // pred_check_branch
          %830 = sbr.rel (%p828) target = $region108
        $region107: #{embed_part_forward.3} parent=87 // pred_region
          %831 = dma.done %s825, 16
        $region108: #{embed_part_forward.3} parent=87 // pred_fallthru
          _
        %s832 = sand.u32 %s48, 1
        %s833 = scalar_lea.sflag [#allocation13], %s832
        %s834 = sand.u32 %s302, 1
        %s835 = scalar_lea.vmem [#allocation12], %s834
        // Predicated region
        $region109: #{embed_part_forward.3} parent=87 // pred_check
          %p836 = pneg %p315
        $region110: #{embed_part_forward.3} parent=87 // pred_check_branch
          %838 = sbr.rel (%p836) target = $region112
        $region111: #{embed_part_forward.3} parent=87 // pred_region
          %839 = dma.done %s833, 16
        $region112: #{embed_part_forward.3} parent=87 // pred_fallthru
          _
        %s840 = sand.u32 %s48, 1
        %s841 = scalar_lea.sflag [#allocation13], %s840
        %s842 = sand.u32 %s328, 1
        %s843 = scalar_lea.vmem [#allocation14], %s842
        // Predicated region
        $region113: #{embed_part_forward.3} parent=87 // pred_check
          %p844 = pneg %p341
        $region114: #{embed_part_forward.3} parent=87 // pred_check_branch
          %846 = sbr.rel (%p844) target = $region116
        $region115: #{embed_part_forward.3} parent=87 // pred_region
          %847 = dma.done %s841, 16
        $region116: #{embed_part_forward.3} parent=87 // pred_fallthru
          _
        %s848 = sand.u32 %s48, 1
        %s849 = scalar_lea.sflag [#allocation16], %s848
        %s850 = sand.u32 %s354, 1
        %s851 = smul.addr %s850, 256
        %s852 = scalar_lea.vmem [#allocation15], %s851
        // Predicated region
        $region117: #{embed_part_forward.3} parent=87 // pred_check
          %p853 = pneg %p367
        $region118: #{embed_part_forward.3} parent=87 // pred_check_branch
          %855 = sbr.rel (%p853) target = $region120
        $region119: #{embed_part_forward.3} parent=87 // pred_region
          %856 = dma.done %s849, 4096
        $region120: #{embed_part_forward.3} parent=87 // pred_fallthru
          _
        %s857 = sand.u32 %s48, 1
        %s858 = scalar_lea.sflag [#allocation16], %s857
        %s859 = sand.u32 %s380, 1
        %s860 = smul.addr %s859, 4
        %s861 = scalar_lea.vmem [#allocation17], %s860
        // Predicated region
        $region121: #{embed_part_forward.3} parent=87 // pred_check
          %p862 = pneg %p393
        $region122: #{embed_part_forward.3} parent=87 // pred_check_branch
          %864 = sbr.rel (%p862) target = $region124
        $region123: #{embed_part_forward.3} parent=87 // pred_region
          %865 = dma.done %s858, 64
        $region124: #{embed_part_forward.3} parent=87 // pred_fallthru
          _
        %s866 = sand.u32 %s48, 1
        %s867 = scalar_lea.sflag [#allocation19], %s866
        %s868 = sand.u32 %s406, 1
        %s869 = smul.addr %s868, 256
        %s870 = scalar_lea.vmem [#allocation18], %s869
        // Predicated region
        $region125: #{embed_part_forward.3} parent=87 // pred_check
          %p871 = pneg %p419
        $region126: #{embed_part_forward.3} parent=87 // pred_check_branch
          %873 = sbr.rel (%p871) target = $region128
        $region127: #{embed_part_forward.3} parent=87 // pred_region
          %874 = dma.done %s867, 4096
        $region128: #{embed_part_forward.3} parent=87 // pred_fallthru
          _
        %s875 = sand.u32 %s48, 1
        %s876 = scalar_lea.sflag [#allocation19], %s875
        %s877 = sand.u32 %s432, 1
        %s878 = scalar_lea.vmem [#allocation20], %s877
        // Predicated region
        $region129: #{embed_part_forward.3} parent=87 // pred_check
          %p879 = pneg %p445
        $region130: #{embed_part_forward.3} parent=87 // pred_check_branch
          %881 = sbr.rel (%p879) target = $region132
        $region131: #{embed_part_forward.3} parent=87 // pred_region
          %882 = dma.done %s876, 16
        $region132: #{embed_part_forward.3} parent=87 // pred_fallthru
          _
        // Predicated region
        $region133: #{embed_part_forward.3} parent=87 // pred_check
          %p883 = pneg %p487
        $region134: #{embed_part_forward.3} parent=87 // pred_check_branch
          %885 = sbr.rel (%p883) target = $region136
        $region135: #{embed_part_forward.3} parent=87 // pred_region
          %886 = dma.done [#allocation22], 16
        $region136: #{embed_part_forward.3} parent=87 // pred_fallthru
          _
        %s887 = smul.u32 2, %s52
        %p888 = scmp.lt.s32.totalorder %s887, 1
        %s889 = scalar_select %p888, %s887, 1
        %s890 = smul.addr %s889, 8
        %s891 = scalar_lea.vmem %s0, %s890
        %p892 = pneg %p81
        %p893 = pneg %p78
        %s894 = smul.u32 2, %s52
        %p895 = scmp.lt.s32.totalorder %s894, 1
        %s896 = scalar_select %p895, %s894, 1
        %s897 = scalar_lea.vmem %s1, %s896
        %p898 = pneg %p107
        %p899 = pneg %p104
        %s900 = smul.u32 2, %s52
        %p901 = scmp.lt.s32.totalorder %s900, 1
        %s902 = scalar_select %p901, %s900, 1
        %s903 = smul.addr %s902, 8
        %s904 = scalar_lea.vmem %s2, %s903
        %p905 = pneg %p133
        %p906 = pneg %p130
        %s907 = sand.u32 %s146, 1
        %s908 = scalar_lea.sflag [#allocation4], %s907
        %s909 = sand.u32 %s146, 1
        %s910 = scalar_lea.vmem [#allocation3], %s909
        %p911 = pneg %p159
        %p912 = pneg %p156
        %s913 = sand.u32 %s48, 1
        %s914 = scalar_lea.sflag [#allocation7], %s913
        %s915 = sand.u32 %s172, 1
        %s916 = scalar_lea.vmem [#allocation6], %s915
        %p917 = pneg %p185
        %p918 = pneg %p182
        %s919 = sand.u32 %s48, 1
        %s920 = scalar_lea.sflag [#allocation7], %s919
        %s921 = sand.u32 %s198, 1
        %s922 = smul.addr %s921, 192
        %s923 = scalar_lea.vmem [#allocation8], %s922
        %p924 = pneg %p211
        %p925 = pneg %p208
        %s926 = sand.u32 %s48, 1
        %s927 = scalar_lea.sflag [#allocation10], %s926
        %s928 = sand.u32 %s224, 1
        %s929 = smul.addr %s928, 3
        %s930 = scalar_lea.vmem [#allocation9], %s929
        %p931 = pneg %p237
        %p932 = pneg %p234
        %p933 = scmp.lt.s32.totalorder %s53, 2
        %s934 = scalar_select %p933, %s53, 2
        %s935 = smul.addr %s934, 16
        %s936 = smul.addr %s935, 4
        %s937 = scalar_lea.vmem %s7, %s936
        %p938 = pneg %p263
        %p939 = pneg %p260
        %s940 = sand.u32 %s48, 1
        %s941 = scalar_lea.sflag [#allocation10], %s940
        %s942 = sand.u32 %s276, 1
        %s943 = scalar_lea.vmem [#allocation11], %s942
        %p944 = pneg %p289
        %p945 = pneg %p286
        %s946 = sand.u32 %s48, 1
        %s947 = scalar_lea.sflag [#allocation13], %s946
        %s948 = sand.u32 %s302, 1
        %s949 = scalar_lea.vmem [#allocation12], %s948
        %p950 = pneg %p315
        %p951 = pneg %p312
        %s952 = sand.u32 %s48, 1
        %s953 = scalar_lea.sflag [#allocation13], %s952
        %s954 = sand.u32 %s328, 1
        %s955 = scalar_lea.vmem [#allocation14], %s954
        %p956 = pneg %p341
        %p957 = pneg %p338
        %s958 = sand.u32 %s48, 1
        %s959 = scalar_lea.sflag [#allocation16], %s958
        %s960 = sand.u32 %s354, 1
        %s961 = smul.addr %s960, 256
        %s962 = scalar_lea.vmem [#allocation15], %s961
        %p963 = pneg %p367
        %p964 = pneg %p364
        %s965 = sand.u32 %s48, 1
        %s966 = scalar_lea.sflag [#allocation16], %s965
        %s967 = sand.u32 %s380, 1
        %s968 = smul.addr %s967, 4
        %s969 = scalar_lea.vmem [#allocation17], %s968
        %p970 = pneg %p393
        %p971 = pneg %p390
        %s972 = sand.u32 %s48, 1
        %s973 = scalar_lea.sflag [#allocation19], %s972
        %s974 = sand.u32 %s406, 1
        %s975 = smul.addr %s974, 256
        %s976 = scalar_lea.vmem [#allocation18], %s975
        %p977 = pneg %p419
        %p978 = pneg %p416
        %s979 = sand.u32 %s48, 1
        %s980 = scalar_lea.sflag [#allocation19], %s979
        %s981 = sand.u32 %s432, 1
        %s982 = scalar_lea.vmem [#allocation20], %s981
        %p983 = pneg %p445
        %p984 = pneg %p442
        %p985 = pneg %p466
        %p986 = pneg %p463
        %p987 = pneg %p487
        %p988 = pneg %p484
        %p989 = pneg %p513
        %p990 = pneg %p510
        %s991 = smul.u32 2, %s52
        %p992 = scmp.lt.s32.totalorder %s991, 1
        %s993 = scalar_select %p992, %s991, 1
        %s994 = smul.addr %s993, 8
        %s995 = scalar_lea.vmem %s0, %s994
        %s996 = smul.u32 2, %s52
        %s997 = smul.u32 2, %s52
        %p998 = scmp.lt.s32.totalorder %s997, 1
        %s999 = scalar_select %p998, %s997, 1
        %s1000 = scalar_lea.vmem %s1, %s999
        %s1001 = smul.u32 2, %s52
        %s1002 = smul.u32 2, %s52
        %p1003 = scmp.lt.s32.totalorder %s1002, 1
        %s1004 = scalar_select %p1003, %s1002, 1
        %s1005 = smul.addr %s1004, 8
        %s1006 = scalar_lea.vmem %s2, %s1005
        %s1007 = smul.u32 2, %s52
        %p1008 = scmp.lt.s32.totalorder %s53, 2
        %s1009 = scalar_select %p1008, %s53, 2
        %s1010 = smul.addr %s1009, 16
        %s1011 = smul.addr %s1010, 4
        %s1012 = scalar_lea.vmem %s7, %s1011
        %s1013 = smul.u32 2, %s52
        %p1015 = scmp.eq.s32.totalorder %s53, 0
        // Predicated region
        $region137: #{embed_part_forward.3} parent=87 // pred_check
          %p1016 = pneg %p1015
        $region138: #{embed_part_forward.3} parent=87 // pred_check_branch
          %1018 = sbr.rel (%p1016) target = $region140
        $region139: #{embed_part_forward.3} parent=87 // pred_region
          %v1019 = vld [vmem:[%s995] sm:$0xff]
          %v1020 = vld [vmem:[%s995 + $0x8] sm:$0xff]
          %1021 = vst [vmem:[#allocation2] sm:$0xff] %v1019
          %1022 = vst [vmem:[#allocation2 + $0x8] sm:$0xff] %v1020
        $region140: #{embed_part_forward.3} parent=87 // pred_fallthru
          _
        %v1023 = vld [vmem:[#allocation2] sm:$0xff]
        %v1024 = vld [vmem:[#allocation2 + $0x8] sm:$0xff]
        %v1025 = vld [vmem:[%s793] sm:$0x1]
        %v1026 = vld [vmem:[%s801] sm:$0x1]
        %1027 = vadd.xlane.f32.xlu0 %v1023
        %v1028 = vpop.xlane.xlu0 %1027
        %1029 = vadd.xlane.f32.xlu0 %v1024
        %v1030 = vpop.xlane.xlu0 %1029
        %v1031 = vrcp.pop 128.0
        %v1032 = vmul.f32 %v1028, %v1031
        %v1033 = vmul.f32 %v1030, %v1031
        %v1034 = vsub.f32 %v1023, %v1032
        %v1035 = vsub.f32 %v1024, %v1033
        %v1036 = vmul.f32 %v1034, %v1034
        %v1037 = vmul.f32 %v1035, %v1035
        %1038 = vadd.xlane.f32.xlu0 %v1036
        %v1039 = vpop.xlane.xlu0 %1038
        %1040 = vadd.xlane.f32.xlu0 %v1037
        %v1041 = vpop.xlane.xlu0 %1040
        %v1042 = vmul.f32 %v1039, %v1031
        %v1043 = vmul.f32 %v1041, %v1031
        %v1044 = vadd.f32 %v1042, 1e-05
        %v1045 = vadd.f32 %v1043, 1e-05
        %v1046 = vrsqrt.pop %v1044
        %v1047 = vrsqrt.pop %v1045
        %v1048 = vmul.f32 %v1034, %v1046
        %v1049 = vmul.f32 %v1035, %v1047
        %v1051 = vlaneseq
        %v1052 = vshrl.u32 %v1051, 7
        %v1053 = vsub.s32 0, %v1052
        %v1054 = vrot.slane %v1025, %v1053
        %v1056 = vmul.f32 %v1048, %v1054
        %v1057 = vmul.f32 %v1049, %v1054
        %v1059 = vlaneseq
        %v1060 = vshrl.u32 %v1059, 7
        %v1061 = vsub.s32 0, %v1060
        %v1062 = vrot.slane %v1026, %v1061
        %v1064 = vadd.f32 %v1056, %v1062
        %v1065 = vadd.f32 %v1057, %v1062
        %v1066 = vpack.c.bf16 %v1065, %v1064
        %v1067 = vld [vmem:[%s810] sm:$0xff]
        %v1068 = vld [vmem:[%s810 + $0x8] sm:$0xf]
        %v1069 = vld [vmem:[%s810 + $0xc] sm:$0xff]
        %v1070 = vld [vmem:[%s810 + $0x14] sm:$0xf]
        %v1071 = vld [vmem:[%s810 + $0x18] sm:$0xff]
        %v1072 = vld [vmem:[%s810 + $0x20] sm:$0xf]
        %v1073 = vld [vmem:[%s810 + $0x24] sm:$0xff]
        %v1074 = vld [vmem:[%s810 + $0x2c] sm:$0xf]
        %v1075 = vld [vmem:[%s810 + $0x30] sm:$0xff]
        %v1076 = vld [vmem:[%s810 + $0x38] sm:$0xf]
        %v1077 = vld [vmem:[%s810 + $0x3c] sm:$0xff]
        %v1078 = vld [vmem:[%s810 + $0x44] sm:$0xf]
        %v1079 = vld [vmem:[%s810 + $0x48] sm:$0xff]
        %v1080 = vld [vmem:[%s810 + $0x50] sm:$0xf]
        %v1081 = vld [vmem:[%s810 + $0x54] sm:$0xff]
        %v1082 = vld [vmem:[%s810 + $0x5c] sm:$0xf]
        %v1083 = vld [vmem:[%s810 + $0x60] sm:$0xff]
        %v1084 = vld [vmem:[%s810 + $0x68] sm:$0xf]
        %v1085 = vld [vmem:[%s810 + $0x6c] sm:$0xff]
        %v1086 = vld [vmem:[%s810 + $0x74] sm:$0xf]
        %v1087 = vld [vmem:[%s810 + $0x78] sm:$0xff]
        %v1088 = vld [vmem:[%s810 + $0x80] sm:$0xf]
        %v1089 = vld [vmem:[%s810 + $0x84] sm:$0xff]
        %v1090 = vld [vmem:[%s810 + $0x8c] sm:$0xf]
        %v1091 = vld [vmem:[%s810 + $0x90] sm:$0xff]
        %v1092 = vld [vmem:[%s810 + $0x98] sm:$0xf]
        %v1093 = vld [vmem:[%s810 + $0x9c] sm:$0xff]
        %v1094 = vld [vmem:[%s810 + $0xa4] sm:$0xf]
        %v1095 = vld [vmem:[%s810 + $0xa8] sm:$0xff]
        %v1096 = vld [vmem:[%s810 + $0xb0] sm:$0xf]
        %v1097 = vld [vmem:[%s810 + $0xb4] sm:$0xff]
        %v1098 = vld [vmem:[%s810 + $0xbc] sm:$0xf]
        %v1099 = vld [vmem:[%s819] sm:$0x7]
        %v1101 = vlaneseq
        %v1102 = vshrl.u32 %v1101, 7
        %v1103 = vsub.s32 0, %v1102
        %v1104 = vrot.slane %v1099, %v1103
        %v1105 = vlaneseq
        %v1106 = vshrl.u32 %v1105, 7
        %v1107 = vsub.s32 1, %v1106
        %v1108 = vrot.slane %v1099, %v1107
        %v1109 = vlaneseq
        %v1110 = vshrl.u32 %v1109, 7
        %v1111 = vsub.s32 2, %v1110
        %v1112 = vrot.slane %v1099, %v1111
        %v1148 = vunpack.c.l.b16 %v1067
        %v1149 = vunpack.c.h.b16 %v1067
        %v1150 = vunpack.c.l.b16 %v1068
        %v1151 = vunpack.c.l.b16 %v1069
        %v1152 = vunpack.c.h.b16 %v1069
        %v1153 = vunpack.c.l.b16 %v1070
        %v1154 = vunpack.c.l.b16 %v1071
        %v1155 = vunpack.c.h.b16 %v1071
        %v1156 = vunpack.c.l.b16 %v1072
        %v1157 = vunpack.c.l.b16 %v1073
        %v1158 = vunpack.c.h.b16 %v1073
        %v1159 = vunpack.c.l.b16 %v1074
        %v1160 = vunpack.c.l.b16 %v1075
        %v1161 = vunpack.c.h.b16 %v1075
        %v1162 = vunpack.c.l.b16 %v1076
        %v1163 = vunpack.c.l.b16 %v1077
        %v1164 = vunpack.c.h.b16 %v1077
        %v1165 = vunpack.c.l.b16 %v1078
        %v1166 = vunpack.c.l.b16 %v1079
        %v1167 = vunpack.c.h.b16 %v1079
        %v1168 = vunpack.c.l.b16 %v1080
        %v1169 = vunpack.c.l.b16 %v1081
        %v1170 = vunpack.c.h.b16 %v1081
        %v1171 = vunpack.c.l.b16 %v1082
        %v1172 = vunpack.c.l.b16 %v1083
        %v1173 = vunpack.c.h.b16 %v1083
        %v1174 = vunpack.c.l.b16 %v1084
        %v1175 = vunpack.c.l.b16 %v1085
        %v1176 = vunpack.c.h.b16 %v1085
        %v1177 = vunpack.c.l.b16 %v1086
        %v1178 = vunpack.c.l.b16 %v1087
        %v1179 = vunpack.c.h.b16 %v1087
        %v1180 = vunpack.c.l.b16 %v1088
        %v1181 = vunpack.c.l.b16 %v1089
        %v1182 = vunpack.c.h.b16 %v1089
        %v1183 = vunpack.c.l.b16 %v1090
        %v1184 = vunpack.c.l.b16 %v1091
        %v1185 = vunpack.c.h.b16 %v1091
        %v1186 = vunpack.c.l.b16 %v1092
        %v1187 = vunpack.c.l.b16 %v1093
        %v1188 = vunpack.c.h.b16 %v1093
        %v1189 = vunpack.c.l.b16 %v1094
        %v1190 = vunpack.c.l.b16 %v1095
        %v1191 = vunpack.c.h.b16 %v1095
        %v1192 = vunpack.c.l.b16 %v1096
        %v1193 = vunpack.c.l.b16 %v1097
        %v1194 = vunpack.c.h.b16 %v1097
        %v1195 = vunpack.c.l.b16 %v1098
        %v1196 = vpack.c.b16 %v1151, %v1148
        %v1197 = vpack.c.b16 %v1152, %v1149
        %v1198 = vpack.c.b16 %v1153, %v1150
        %v1199 = vpack.c.b16 %v1157, %v1154
        %v1200 = vpack.c.b16 %v1158, %v1155
        %v1201 = vpack.c.b16 %v1159, %v1156
        %v1202 = vpack.c.b16 %v1163, %v1160
        %v1203 = vpack.c.b16 %v1164, %v1161
        %v1204 = vpack.c.b16 %v1165, %v1162
        %v1205 = vpack.c.b16 %v1169, %v1166
        %v1206 = vpack.c.b16 %v1170, %v1167
        %v1207 = vpack.c.b16 %v1171, %v1168
        %v1208 = vpack.c.b16 %v1175, %v1172
        %v1209 = vpack.c.b16 %v1176, %v1173
        %v1210 = vpack.c.b16 %v1177, %v1174
        %v1211 = vpack.c.b16 %v1181, %v1178
        %v1212 = vpack.c.b16 %v1182, %v1179
        %v1213 = vpack.c.b16 %v1183, %v1180
        %v1214 = vpack.c.b16 %v1187, %v1184
        %v1215 = vpack.c.b16 %v1188, %v1185
        %v1216 = vpack.c.b16 %v1189, %v1186
        %v1217 = vpack.c.b16 %v1193, %v1190
        %v1218 = vpack.c.b16 %v1194, %v1191
        %v1219 = vpack.c.b16 %v1195, %v1192
        %1244 = vmatprep.subr.bf16.mxu0 %v1218
        %1245 = vmatpush1.bf16.msra.mxu0 %v1217
        %1246 = vmatprep.subr.bf16.mxu0 %v1215
        %1247 = vmatpush1.bf16.msra.mxu0 %v1214
        %1248 = vmatprep.subr.bf16.mxu0 %v1212
        %1249 = vmatpush1.bf16.msra.mxu0 %v1211
        %1250 = vmatprep.subr.bf16.mxu0 %v1209
        %1251 = vmatpush1.bf16.msra.mxu0 %v1208
        %1252 = vmatprep.subr.bf16.mxu0 %v1206
        %1253 = vmatpush1.bf16.msra.mxu0 %v1205
        %1254 = vmatprep.subr.bf16.mxu0 %v1203
        %1255 = vmatpush1.bf16.msra.mxu0 %v1202
        %1256 = vmatprep.subr.bf16.mxu0 %v1200
        %1257 = vmatpush1.bf16.msra.mxu0 %v1199
        %1258 = vmatprep.subr.bf16.mxu0 %v1197
        %1259 = vmatpush1.bf16.msra.mxu0 %v1196
        %1260 = vmatprep.subr.bf16.mxu0 0
        %1261 = vmatpush2.bf16.msra.mxu0 0
        %1262 = vmatprep.subr.bf16.mxu0 0
        %1263 = vmatpush2.bf16.msra.mxu0 0
        %1264 = vmatprep.subr.bf16.mxu0 0
        %1265 = vmatpush2.bf16.msra.mxu0 0
        %1266 = vmatprep.subr.bf16.mxu0 0
        %1267 = vmatpush2.bf16.msra.mxu0 0
        %1268 = vmatprep.subr.bf16.mxu0 0
        %1269 = vmatpush2.bf16.msra.mxu0 0
        %1270 = vmatprep.subr.bf16.mxu0 0
        %1271 = vmatpush2.bf16.msra.mxu0 0
        %1272 = vmatprep.subr.bf16.mxu0 0
        %1273 = vmatpush2.bf16.msra.mxu0 0
        %1274 = vmatprep.subr.bf16.mxu0 0
        %1275 = vmatpush2.bf16.msra.mxu0 0
        %1276 = vmatprep.mubr.bf16.mxu0 0
        %1277 = vmatmul.mubr.bf16.gmra.mxu0 %v1066
        %v1278 = vpop.f32.mrf.mxu0
        %v1279 = vadd.f32 %v1104, %v1278
        %v1280 = vpop.f32.mrf.mxu0
        %v1281 = vadd.f32 %v1108, %v1280
        %v1282 = vpop.f32.mrf.mxu0
        %v1283 = vadd.f32 %v1104, %v1282
        %v1284 = vpop.f32.mrf.mxu0
        %v1285 = vadd.f32 %v1108, %v1284
        %1286 = vdwg.mxu0
        %1287 = vmatprep.subr.bf16.mxu0 0
        %1288 = vmatpush1.bf16.msra.mxu0 %v1219
        %1289 = vmatprep.subr.bf16.mxu0 0
        %1290 = vmatpush1.bf16.msra.mxu0 %v1216
        %1291 = vmatprep.subr.bf16.mxu0 0
        %1292 = vmatpush1.bf16.msra.mxu0 %v1213
        %1293 = vmatprep.subr.bf16.mxu0 0
        %1294 = vmatpush1.bf16.msra.mxu0 %v1210
        %1295 = vmatprep.subr.bf16.mxu0 0
        %1296 = vmatpush1.bf16.msra.mxu0 %v1207
        %1297 = vmatprep.subr.bf16.mxu0 0
        %1298 = vmatpush1.bf16.msra.mxu0 %v1204
        %1299 = vmatprep.subr.bf16.mxu0 0
        %1300 = vmatpush1.bf16.msra.mxu0 %v1201
        %1301 = vmatprep.subr.bf16.mxu0 0
        %1302 = vmatpush1.bf16.msra.mxu0 %v1198
        %1303 = vmatprep.subr.bf16.mxu0 0
        %1304 = vmatpush2.bf16.msra.mxu0 0
        %1305 = vmatprep.subr.bf16.mxu0 0
        %1306 = vmatpush2.bf16.msra.mxu0 0
        %1307 = vmatprep.subr.bf16.mxu0 0
        %1308 = vmatpush2.bf16.msra.mxu0 0
        %1309 = vmatprep.subr.bf16.mxu0 0
        %1310 = vmatpush2.bf16.msra.mxu0 0
        %1311 = vmatprep.subr.bf16.mxu0 0
        %1312 = vmatpush2.bf16.msra.mxu0 0
        %1313 = vmatprep.subr.bf16.mxu0 0
        %1314 = vmatpush2.bf16.msra.mxu0 0
        %1315 = vmatprep.subr.bf16.mxu0 0
        %1316 = vmatpush2.bf16.msra.mxu0 0
        %1317 = vmatprep.subr.bf16.mxu0 0
        %1318 = vmatpush2.bf16.msra.mxu0 0
        %1319 = vmatprep.mubr.bf16.mxu0 0
        %1320 = vmatmul.mubr.bf16.gmra.mxu0 %v1066
        %v1321 = vpop.f32.mrf.mxu0
        %v1322 = vadd.f32 %v1112, %v1321
        %v1323 = vpop.f32.mrf.mxu0
        %v1324 = vpop.f32.mrf.mxu0
        %v1325 = vadd.f32 %v1112, %v1324
        %v1326 = vpop.f32.mrf.mxu0
        %1327 = vdwg.mxu0
        %v1328 = vld [vmem:[%s1000] sm:$0x1]
        %v1329 = vld [vmem:[%s1000 + $0x1] sm:$0x1]
        %v1330 = vpack.c.bf16 %v1279, %v1279
        %v1331 = vpack.c.bf16 %v1283, %v1283
        %v1332 = vpack.c.bf16 %v1281, %v1281
        %v1333 = vpack.c.bf16 %v1285, %v1285
        %v1334 = vpack.c.bf16 %v1322, %v1322
        %v1335 = vpack.c.bf16 %v1325, %v1325
        %v1338 = vlaneseq
        %v1339 = vshrl.u32 %v1338, 7
        %v1340 = vsub.s32 0, %v1339
        %v1341 = vrot.slane %v1328, %v1340
        %v1342 = vlaneseq
        %v1343 = vshrl.u32 %v1342, 7
        %v1344 = vsub.s32 0, %v1343
        %v1345 = vrot.slane %v1329, %v1344
        %vm1348 = vcmask 261120
        %v1350 = vsel %vm1348, %v1330, 0
        %v1353 = vsel %vm1348, %v1332, 0
        %1355 = vmatprep.subr.bf16.mxu0 0
        %1356 = vmatpush1.bf16.xpose.msra.mxu0 0
        %1357 = vmatprep.subr.bf16.mxu0 0
        %1358 = vmatpush1.bf16.xpose.msra.mxu0 0
        %1359 = vmatprep.subr.bf16.mxu0 0
        %1360 = vmatpush1.bf16.xpose.msra.mxu0 0
        %1361 = vmatprep.subr.bf16.mxu0 0
        %1362 = vmatpush1.bf16.xpose.msra.mxu0 0
        %1363 = vmatprep.subr.bf16.mxu0 0
        %1364 = vmatpush1.bf16.xpose.msra.mxu0 0
        %1365 = vmatprep.subr.bf16.mxu0 0
        %1366 = vmatpush1.bf16.xpose.msra.mxu0 0
        %1367 = vmatprep.subr.bf16.mxu0 0
        %1368 = vmatpush1.bf16.xpose.msra.mxu0 0
        %1369 = vmatprep.subr.bf16.mxu0 0
        %1370 = vmatpush1.bf16.xpose.msra.mxu0 %v1353
        %1371 = vmatprep.subr.bf16.mxu0 0
        %1372 = vmatpush2.bf16.xpose.msra.mxu0 0
        %1373 = vmatprep.subr.bf16.mxu0 0
        %1374 = vmatpush2.bf16.xpose.msra.mxu0 0
        %1375 = vmatprep.subr.bf16.mxu0 0
        %1376 = vmatpush2.bf16.xpose.msra.mxu0 0
        %1377 = vmatprep.subr.bf16.mxu0 0
        %1378 = vmatpush2.bf16.xpose.msra.mxu0 0
        %1379 = vmatprep.subr.bf16.mxu0 0
        %1380 = vmatpush2.bf16.xpose.msra.mxu0 0
        %1381 = vmatprep.subr.bf16.mxu0 0
        %1382 = vmatpush2.bf16.xpose.msra.mxu0 0
        %1383 = vmatprep.subr.bf16.mxu0 0
        %1384 = vmatpush2.bf16.xpose.msra.mxu0 0
        %1385 = vmatprep.subr.bf16.mxu0 0
        %1386 = vmatpush2.bf16.xpose.msra.mxu0 0
        %1387 = vmatprep.mubr.bf16.mxu0 0
        %1388 = vmatmul.mubr.bf16.gmra.mxu0 %v1350
        %v1389 = vpop.f32.mrf.mxu0
        %v1390 = vadd.f32 %v1341, %v1389
        %v1391 = vpop.f32.mrf.mxu0
        %v1392 = vpop.f32.mrf.mxu0
        %v1393 = vpop.f32.mrf.mxu0
        %1394 = vdwg.mxu0
        %v1396 = vsel %vm1348, %v1331, 0
        %v1399 = vsel %vm1348, %v1333, 0
        %1401 = vmatprep.subr.bf16.mxu0 0
        %1402 = vmatpush1.bf16.xpose.msra.mxu0 0
        %1403 = vmatprep.subr.bf16.mxu0 0
        %1404 = vmatpush1.bf16.xpose.msra.mxu0 0
        %1405 = vmatprep.subr.bf16.mxu0 0
        %1406 = vmatpush1.bf16.xpose.msra.mxu0 0
        %1407 = vmatprep.subr.bf16.mxu0 0
        %1408 = vmatpush1.bf16.xpose.msra.mxu0 0
        %1409 = vmatprep.subr.bf16.mxu0 0
        %1410 = vmatpush1.bf16.xpose.msra.mxu0 0
        %1411 = vmatprep.subr.bf16.mxu0 0
        %1412 = vmatpush1.bf16.xpose.msra.mxu0 0
        %1413 = vmatprep.subr.bf16.mxu0 0
        %1414 = vmatpush1.bf16.xpose.msra.mxu0 0
        %1415 = vmatprep.subr.bf16.mxu0 0
        %1416 = vmatpush1.bf16.xpose.msra.mxu0 %v1399
        %1417 = vmatprep.subr.bf16.mxu0 0
        %1418 = vmatpush2.bf16.xpose.msra.mxu0 0
        %1419 = vmatprep.subr.bf16.mxu0 0
        %1420 = vmatpush2.bf16.xpose.msra.mxu0 0
        %1421 = vmatprep.subr.bf16.mxu0 0
        %1422 = vmatpush2.bf16.xpose.msra.mxu0 0
        %1423 = vmatprep.subr.bf16.mxu0 0
        %1424 = vmatpush2.bf16.xpose.msra.mxu0 0
        %1425 = vmatprep.subr.bf16.mxu0 0
        %1426 = vmatpush2.bf16.xpose.msra.mxu0 0
        %1427 = vmatprep.subr.bf16.mxu0 0
        %1428 = vmatpush2.bf16.xpose.msra.mxu0 0
        %1429 = vmatprep.subr.bf16.mxu0 0
        %1430 = vmatpush2.bf16.xpose.msra.mxu0 0
        %1431 = vmatprep.subr.bf16.mxu0 0
        %1432 = vmatpush2.bf16.xpose.msra.mxu0 0
        %1433 = vmatprep.mubr.bf16.mxu0 0
        %1434 = vmatmul.mubr.bf16.gmra.mxu0 %v1396
        %v1435 = vpop.f32.mrf.mxu0
        %v1436 = vadd.f32 %v1345, %v1435
        %v1437 = vpop.f32.mrf.mxu0
        %v1438 = vpop.f32.mrf.mxu0
        %v1439 = vpop.f32.mrf.mxu0
        %1440 = vdwg.mxu0
        %vm1441 = vcmask 64512
        %v1442 = vsel %vm1441, %v1390, -inf
        %1443 = vmax.xlane.f32.xlu0 %v1442
        %v1444 = vpop.xlane.xlu0 %1443
        %v1445 = vsel %vm1441, %v1436, -inf
        %1446 = vmax.xlane.f32.xlu0 %v1445
        %v1447 = vpop.xlane.xlu0 %1446
        %v1448 = vsub.f32 %v1390, %v1444
        %v1449 = vsub.f32 %v1436, %v1447
        %v1450 = vmul.f32 %v1448, 1.442695
        %v1451 = vpow.pop %v1450
        %v1452 = vmul.f32 %v1449, 1.442695
        %v1453 = vpow.pop %v1452
        %v1454 = vsel %vm1441, %v1451, 0.0
        %1455 = vadd.xlane.f32.xlu0 %v1454
        %v1456 = vpop.xlane.xlu0 %1455
        %v1457 = vsel %vm1441, %v1453, 0.0
        %1458 = vadd.xlane.f32.xlu0 %v1457
        %v1459 = vpop.xlane.xlu0 %1458
        %v1460 = vrcp.pop %v1456
        %v1461 = vrcp.pop %v1459
        %v1462 = vmul.f32 %v1451, %v1460
        %v1463 = vmul.f32 %v1453, %v1461
        %v1464 = vpack.c.bf16 %v1462, %v1462
        %v1465 = vpack.c.bf16 %v1463, %v1463
        %v1467 = vsel %vm1441, %v1464, 0
        %vm1469 = vcmask 1043456
        %v1471 = vsel %vm1469, %v1334, 0
        %1473 = vmatprep.subr.bf16.mxu0 0
        %1474 = vmatpush1.bf16.msra.mxu0 0
        %1475 = vmatprep.subr.bf16.mxu0 0
        %1476 = vmatpush1.bf16.msra.mxu0 0
        %1477 = vmatprep.subr.bf16.mxu0 0
        %1478 = vmatpush1.bf16.msra.mxu0 0
        %1479 = vmatprep.subr.bf16.mxu0 0
        %1480 = vmatpush1.bf16.msra.mxu0 0
        %1481 = vmatprep.subr.bf16.mxu0 0
        %1482 = vmatpush1.bf16.msra.mxu0 0
        %1483 = vmatprep.subr.bf16.mxu0 0
        %1484 = vmatpush1.bf16.msra.mxu0 0
        %1485 = vmatprep.subr.bf16.mxu0 0
        %1486 = vmatpush1.bf16.msra.mxu0 0
        %1487 = vmatprep.subr.bf16.mxu0 0
        %1488 = vmatpush1.bf16.msra.mxu0 %v1471
        %1489 = vmatprep.subr.bf16.mxu0 0
        %1490 = vmatpush2.bf16.msra.mxu0 0
        %1491 = vmatprep.subr.bf16.mxu0 0
        %1492 = vmatpush2.bf16.msra.mxu0 0
        %1493 = vmatprep.subr.bf16.mxu0 0
        %1494 = vmatpush2.bf16.msra.mxu0 0
        %1495 = vmatprep.subr.bf16.mxu0 0
        %1496 = vmatpush2.bf16.msra.mxu0 0
        %1497 = vmatprep.subr.bf16.mxu0 0
        %1498 = vmatpush2.bf16.msra.mxu0 0
        %1499 = vmatprep.subr.bf16.mxu0 0
        %1500 = vmatpush2.bf16.msra.mxu0 0
        %1501 = vmatprep.subr.bf16.mxu0 0
        %1502 = vmatpush2.bf16.msra.mxu0 0
        %1503 = vmatprep.subr.bf16.mxu0 0
        %1504 = vmatpush2.bf16.msra.mxu0 0
        %1505 = vmatprep.mubr.bf16.mxu0 0
        %1506 = vmatmul.mubr.bf16.gmra.mxu0 %v1467
        %v1507 = vpop.f32.mrf.mxu0
        %v1508 = vadd.f32 0.0, %v1507
        %v1509 = vpop.f32.mrf.mxu0
        %v1510 = vpop.f32.mrf.mxu0
        %v1511 = vpop.f32.mrf.mxu0
        %1512 = vdwg.mxu0
        %v1514 = vsel %vm1441, %v1465, 0
        %v1517 = vsel %vm1469, %v1335, 0
        %1519 = vmatprep.subr.bf16.mxu0 0
        %1520 = vmatpush1.bf16.msra.mxu0 0
        %1521 = vmatprep.subr.bf16.mxu0 0
        %1522 = vmatpush1.bf16.msra.mxu0 0
        %1523 = vmatprep.subr.bf16.mxu0 0
        %1524 = vmatpush1.bf16.msra.mxu0 0
        %1525 = vmatprep.subr.bf16.mxu0 0
        %1526 = vmatpush1.bf16.msra.mxu0 0
        %1527 = vmatprep.subr.bf16.mxu0 0
        %1528 = vmatpush1.bf16.msra.mxu0 0
        %1529 = vmatprep.subr.bf16.mxu0 0
        %1530 = vmatpush1.bf16.msra.mxu0 0
        %1531 = vmatprep.subr.bf16.mxu0 0
        %1532 = vmatpush1.bf16.msra.mxu0 0
        %1533 = vmatprep.subr.bf16.mxu0 0
        %1534 = vmatpush1.bf16.msra.mxu0 %v1517
        %1535 = vmatprep.subr.bf16.mxu0 0
        %1536 = vmatpush2.bf16.msra.mxu0 0
        %1537 = vmatprep.subr.bf16.mxu0 0
        %1538 = vmatpush2.bf16.msra.mxu0 0
        %1539 = vmatprep.subr.bf16.mxu0 0
        %1540 = vmatpush2.bf16.msra.mxu0 0
        %1541 = vmatprep.subr.bf16.mxu0 0
        %1542 = vmatpush2.bf16.msra.mxu0 0
        %1543 = vmatprep.subr.bf16.mxu0 0
        %1544 = vmatpush2.bf16.msra.mxu0 0
        %1545 = vmatprep.subr.bf16.mxu0 0
        %1546 = vmatpush2.bf16.msra.mxu0 0
        %1547 = vmatprep.subr.bf16.mxu0 0
        %1548 = vmatpush2.bf16.msra.mxu0 0
        %1549 = vmatprep.subr.bf16.mxu0 0
        %1550 = vmatpush2.bf16.msra.mxu0 0
        %1551 = vmatprep.mubr.bf16.mxu0 0
        %1552 = vmatmul.mubr.bf16.gmra.mxu0 %v1514
        %v1553 = vpop.f32.mrf.mxu0
        %v1554 = vadd.f32 0.0, %v1553
        %v1555 = vpop.f32.mrf.mxu0
        %v1556 = vpop.f32.mrf.mxu0
        %v1557 = vpop.f32.mrf.mxu0
        %1558 = vdwg.mxu0
        %1560 = vrot.lane.b32.xlu0 %v1330, 96
        %v1561 = vpop.permute.xlu0 %1560
        %1563 = vrot.lane.b32.xlu0 %v1332, 96
        %v1564 = vpop.permute.xlu0 %1563
        %v1566 = vsel %vm1348, %v1561, 0
        %v1569 = vsel %vm1348, %v1564, 0
        %1571 = vmatprep.subr.bf16.mxu0 0
        %1572 = vmatpush1.bf16.xpose.msra.mxu0 0
        %1573 = vmatprep.subr.bf16.mxu0 0
        %1574 = vmatpush1.bf16.xpose.msra.mxu0 0
        %1575 = vmatprep.subr.bf16.mxu0 0
        %1576 = vmatpush1.bf16.xpose.msra.mxu0 0
        %1577 = vmatprep.subr.bf16.mxu0 0
        %1578 = vmatpush1.bf16.xpose.msra.mxu0 0
        %1579 = vmatprep.subr.bf16.mxu0 0
        %1580 = vmatpush1.bf16.xpose.msra.mxu0 0
        %1581 = vmatprep.subr.bf16.mxu0 0
        %1582 = vmatpush1.bf16.xpose.msra.mxu0 0
        %1583 = vmatprep.subr.bf16.mxu0 0
        %1584 = vmatpush1.bf16.xpose.msra.mxu0 0
        %1585 = vmatprep.subr.bf16.mxu0 0
        %1586 = vmatpush1.bf16.xpose.msra.mxu0 %v1569
        %1587 = vmatprep.subr.bf16.mxu0 0
        %1588 = vmatpush2.bf16.xpose.msra.mxu0 0
        %1589 = vmatprep.subr.bf16.mxu0 0
        %1590 = vmatpush2.bf16.xpose.msra.mxu0 0
        %1591 = vmatprep.subr.bf16.mxu0 0
        %1592 = vmatpush2.bf16.xpose.msra.mxu0 0
        %1593 = vmatprep.subr.bf16.mxu0 0
        %1594 = vmatpush2.bf16.xpose.msra.mxu0 0
        %1595 = vmatprep.subr.bf16.mxu0 0
        %1596 = vmatpush2.bf16.xpose.msra.mxu0 0
        %1597 = vmatprep.subr.bf16.mxu0 0
        %1598 = vmatpush2.bf16.xpose.msra.mxu0 0
        %1599 = vmatprep.subr.bf16.mxu0 0
        %1600 = vmatpush2.bf16.xpose.msra.mxu0 0
        %1601 = vmatprep.subr.bf16.mxu0 0
        %1602 = vmatpush2.bf16.xpose.msra.mxu0 0
        %1603 = vmatprep.mubr.bf16.mxu0 0
        %1604 = vmatmul.mubr.bf16.gmra.mxu0 %v1566
        %v1605 = vpop.f32.mrf.mxu0
        %v1606 = vadd.f32 %v1341, %v1605
        %v1607 = vpop.f32.mrf.mxu0
        %v1608 = vpop.f32.mrf.mxu0
        %v1609 = vpop.f32.mrf.mxu0
        %1610 = vdwg.mxu0
        %1612 = vrot.lane.b32.xlu0 %v1331, 96
        %v1613 = vpop.permute.xlu0 %1612
        %1615 = vrot.lane.b32.xlu0 %v1333, 96
        %v1616 = vpop.permute.xlu0 %1615
        %v1618 = vsel %vm1348, %v1613, 0
        %v1621 = vsel %vm1348, %v1616, 0
        %1623 = vmatprep.subr.bf16.mxu0 0
        %1624 = vmatpush1.bf16.xpose.msra.mxu0 0
        %1625 = vmatprep.subr.bf16.mxu0 0
        %1626 = vmatpush1.bf16.xpose.msra.mxu0 0
        %1627 = vmatprep.subr.bf16.mxu0 0
        %1628 = vmatpush1.bf16.xpose.msra.mxu0 0
        %1629 = vmatprep.subr.bf16.mxu0 0
        %1630 = vmatpush1.bf16.xpose.msra.mxu0 0
        %1631 = vmatprep.subr.bf16.mxu0 0
        %1632 = vmatpush1.bf16.xpose.msra.mxu0 0
        %1633 = vmatprep.subr.bf16.mxu0 0
        %1634 = vmatpush1.bf16.xpose.msra.mxu0 0
        %1635 = vmatprep.subr.bf16.mxu0 0
        %1636 = vmatpush1.bf16.xpose.msra.mxu0 0
        %1637 = vmatprep.subr.bf16.mxu0 0
        %1638 = vmatpush1.bf16.xpose.msra.mxu0 %v1621
        %1639 = vmatprep.subr.bf16.mxu0 0
        %1640 = vmatpush2.bf16.xpose.msra.mxu0 0
        %1641 = vmatprep.subr.bf16.mxu0 0
        %1642 = vmatpush2.bf16.xpose.msra.mxu0 0
        %1643 = vmatprep.subr.bf16.mxu0 0
        %1644 = vmatpush2.bf16.xpose.msra.mxu0 0
        %1645 = vmatprep.subr.bf16.mxu0 0
        %1646 = vmatpush2.bf16.xpose.msra.mxu0 0
        %1647 = vmatprep.subr.bf16.mxu0 0
        %1648 = vmatpush2.bf16.xpose.msra.mxu0 0
        %1649 = vmatprep.subr.bf16.mxu0 0
        %1650 = vmatpush2.bf16.xpose.msra.mxu0 0
        %1651 = vmatprep.subr.bf16.mxu0 0
        %1652 = vmatpush2.bf16.xpose.msra.mxu0 0
        %1653 = vmatprep.subr.bf16.mxu0 0
        %1654 = vmatpush2.bf16.xpose.msra.mxu0 0
        %1655 = vmatprep.mubr.bf16.mxu0 0
        %1656 = vmatmul.mubr.bf16.gmra.mxu0 %v1618
        %v1657 = vpop.f32.mrf.mxu0
        %v1658 = vadd.f32 %v1345, %v1657
        %v1659 = vpop.f32.mrf.mxu0
        %v1660 = vpop.f32.mrf.mxu0
        %v1661 = vpop.f32.mrf.mxu0
        %1662 = vdwg.mxu0
        %v1663 = vsel %vm1441, %v1606, -inf
        %1664 = vmax.xlane.f32.xlu0 %v1663
        %v1665 = vpop.xlane.xlu0 %1664
        %v1666 = vsel %vm1441, %v1658, -inf
        %1667 = vmax.xlane.f32.xlu0 %v1666
        %v1668 = vpop.xlane.xlu0 %1667
        %v1669 = vsub.f32 %v1606, %v1665
        %v1670 = vsub.f32 %v1658, %v1668
        %v1671 = vmul.f32 %v1669, 1.442695
        %v1672 = vpow.pop %v1671
        %v1673 = vmul.f32 %v1670, 1.442695
        %v1674 = vpow.pop %v1673
        %v1675 = vsel %vm1441, %v1672, 0.0
        %1676 = vadd.xlane.f32.xlu0 %v1675
        %v1677 = vpop.xlane.xlu0 %1676
        %v1678 = vsel %vm1441, %v1674, 0.0
        %1679 = vadd.xlane.f32.xlu0 %v1678
        %v1680 = vpop.xlane.xlu0 %1679
        %v1681 = vrcp.pop %v1677
        %v1682 = vrcp.pop %v1680
        %v1683 = vmul.f32 %v1672, %v1681
        %v1684 = vmul.f32 %v1674, %v1682
        %v1685 = vpack.c.bf16 %v1683, %v1683
        %v1686 = vpack.c.bf16 %v1684, %v1684
        %1688 = vrot.lane.b32.xlu0 %v1334, 96
        %v1689 = vpop.permute.xlu0 %1688
        %v1691 = vsel %vm1441, %v1685, 0
        %v1694 = vsel %vm1469, %v1689, 0
        %1696 = vmatprep.subr.bf16.mxu0 0
        %1697 = vmatpush1.bf16.msra.mxu0 0
        %1698 = vmatprep.subr.bf16.mxu0 0
        %1699 = vmatpush1.bf16.msra.mxu0 0
        %1700 = vmatprep.subr.bf16.mxu0 0
        %1701 = vmatpush1.bf16.msra.mxu0 0
        %1702 = vmatprep.subr.bf16.mxu0 0
        %1703 = vmatpush1.bf16.msra.mxu0 0
        %1704 = vmatprep.subr.bf16.mxu0 0
        %1705 = vmatpush1.bf16.msra.mxu0 0
        %1706 = vmatprep.subr.bf16.mxu0 0
        %1707 = vmatpush1.bf16.msra.mxu0 0
        %1708 = vmatprep.subr.bf16.mxu0 0
        %1709 = vmatpush1.bf16.msra.mxu0 0
        %1710 = vmatprep.subr.bf16.mxu0 0
        %1711 = vmatpush1.bf16.msra.mxu0 %v1694
        %1712 = vmatprep.subr.bf16.mxu0 0
        %1713 = vmatpush2.bf16.msra.mxu0 0
        %1714 = vmatprep.subr.bf16.mxu0 0
        %1715 = vmatpush2.bf16.msra.mxu0 0
        %1716 = vmatprep.subr.bf16.mxu0 0
        %1717 = vmatpush2.bf16.msra.mxu0 0
        %1718 = vmatprep.subr.bf16.mxu0 0
        %1719 = vmatpush2.bf16.msra.mxu0 0
        %1720 = vmatprep.subr.bf16.mxu0 0
        %1721 = vmatpush2.bf16.msra.mxu0 0
        %1722 = vmatprep.subr.bf16.mxu0 0
        %1723 = vmatpush2.bf16.msra.mxu0 0
        %1724 = vmatprep.subr.bf16.mxu0 0
        %1725 = vmatpush2.bf16.msra.mxu0 0
        %1726 = vmatprep.subr.bf16.mxu0 0
        %1727 = vmatpush2.bf16.msra.mxu0 0
        %1728 = vmatprep.mubr.bf16.mxu0 0
        %1729 = vmatmul.mubr.bf16.gmra.mxu0 %v1691
        %v1730 = vpop.f32.mrf.mxu0
        %v1731 = vadd.f32 0.0, %v1730
        %v1732 = vpop.f32.mrf.mxu0
        %v1733 = vpop.f32.mrf.mxu0
        %v1734 = vpop.f32.mrf.mxu0
        %1735 = vdwg.mxu0
        %1737 = vrot.lane.b32.xlu0 %v1335, 96
        %v1738 = vpop.permute.xlu0 %1737
        %v1740 = vsel %vm1441, %v1686, 0
        %v1743 = vsel %vm1469, %v1738, 0
        %1745 = vmatprep.subr.bf16.mxu0 0
        %1746 = vmatpush1.bf16.msra.mxu0 0
        %1747 = vmatprep.subr.bf16.mxu0 0
        %1748 = vmatpush1.bf16.msra.mxu0 0
        %1749 = vmatprep.subr.bf16.mxu0 0
        %1750 = vmatpush1.bf16.msra.mxu0 0
        %1751 = vmatprep.subr.bf16.mxu0 0
        %1752 = vmatpush1.bf16.msra.mxu0 0
        %1753 = vmatprep.subr.bf16.mxu0 0
        %1754 = vmatpush1.bf16.msra.mxu0 0
        %1755 = vmatprep.subr.bf16.mxu0 0
        %1756 = vmatpush1.bf16.msra.mxu0 0
        %1757 = vmatprep.subr.bf16.mxu0 0
        %1758 = vmatpush1.bf16.msra.mxu0 0
        %1759 = vmatprep.subr.bf16.mxu0 0
        %1760 = vmatpush1.bf16.msra.mxu0 %v1743
        %1761 = vmatprep.subr.bf16.mxu0 0
        %1762 = vmatpush2.bf16.msra.mxu0 0
        %1763 = vmatprep.subr.bf16.mxu0 0
        %1764 = vmatpush2.bf16.msra.mxu0 0
        %1765 = vmatprep.subr.bf16.mxu0 0
        %1766 = vmatpush2.bf16.msra.mxu0 0
        %1767 = vmatprep.subr.bf16.mxu0 0
        %1768 = vmatpush2.bf16.msra.mxu0 0
        %1769 = vmatprep.subr.bf16.mxu0 0
        %1770 = vmatpush2.bf16.msra.mxu0 0
        %1771 = vmatprep.subr.bf16.mxu0 0
        %1772 = vmatpush2.bf16.msra.mxu0 0
        %1773 = vmatprep.subr.bf16.mxu0 0
        %1774 = vmatpush2.bf16.msra.mxu0 0
        %1775 = vmatprep.subr.bf16.mxu0 0
        %1776 = vmatpush2.bf16.msra.mxu0 0
        %1777 = vmatprep.mubr.bf16.mxu0 0
        %1778 = vmatmul.mubr.bf16.gmra.mxu0 %v1740
        %v1779 = vpop.f32.mrf.mxu0
        %v1780 = vadd.f32 0.0, %v1779
        %v1781 = vpop.f32.mrf.mxu0
        %v1782 = vpop.f32.mrf.mxu0
        %v1783 = vpop.f32.mrf.mxu0
        %1784 = vdwg.mxu0
        %1785 = vrot.lane.b32.xlu0 %v1330, 64
        %v1786 = vpop.permute.xlu0 %1785
        %1787 = vrot.lane.b32.xlu0 %v1332, 64
        %v1788 = vpop.permute.xlu0 %1787
        %v1790 = vsel %vm1348, %v1786, 0
        %v1793 = vsel %vm1348, %v1788, 0
        %1795 = vmatprep.subr.bf16.mxu0 0
        %1796 = vmatpush1.bf16.xpose.msra.mxu0 0
        %1797 = vmatprep.subr.bf16.mxu0 0
        %1798 = vmatpush1.bf16.xpose.msra.mxu0 0
        %1799 = vmatprep.subr.bf16.mxu0 0
        %1800 = vmatpush1.bf16.xpose.msra.mxu0 0
        %1801 = vmatprep.subr.bf16.mxu0 0
        %1802 = vmatpush1.bf16.xpose.msra.mxu0 0
        %1803 = vmatprep.subr.bf16.mxu0 0
        %1804 = vmatpush1.bf16.xpose.msra.mxu0 0
        %1805 = vmatprep.subr.bf16.mxu0 0
        %1806 = vmatpush1.bf16.xpose.msra.mxu0 0
        %1807 = vmatprep.subr.bf16.mxu0 0
        %1808 = vmatpush1.bf16.xpose.msra.mxu0 0
        %1809 = vmatprep.subr.bf16.mxu0 0
        %1810 = vmatpush1.bf16.xpose.msra.mxu0 %v1793
        %1811 = vmatprep.subr.bf16.mxu0 0
        %1812 = vmatpush2.bf16.xpose.msra.mxu0 0
        %1813 = vmatprep.subr.bf16.mxu0 0
        %1814 = vmatpush2.bf16.xpose.msra.mxu0 0
        %1815 = vmatprep.subr.bf16.mxu0 0
        %1816 = vmatpush2.bf16.xpose.msra.mxu0 0
        %1817 = vmatprep.subr.bf16.mxu0 0
        %1818 = vmatpush2.bf16.xpose.msra.mxu0 0
        %1819 = vmatprep.subr.bf16.mxu0 0
        %1820 = vmatpush2.bf16.xpose.msra.mxu0 0
        %1821 = vmatprep.subr.bf16.mxu0 0
        %1822 = vmatpush2.bf16.xpose.msra.mxu0 0
        %1823 = vmatprep.subr.bf16.mxu0 0
        %1824 = vmatpush2.bf16.xpose.msra.mxu0 0
        %1825 = vmatprep.subr.bf16.mxu0 0
        %1826 = vmatpush2.bf16.xpose.msra.mxu0 0
        %1827 = vmatprep.mubr.bf16.mxu0 0
        %1828 = vmatmul.mubr.bf16.gmra.mxu0 %v1790
        %v1829 = vpop.f32.mrf.mxu0
        %v1830 = vadd.f32 %v1341, %v1829
        %v1831 = vpop.f32.mrf.mxu0
        %v1832 = vpop.f32.mrf.mxu0
        %v1833 = vpop.f32.mrf.mxu0
        %1834 = vdwg.mxu0
        %1835 = vrot.lane.b32.xlu0 %v1331, 64
        %v1836 = vpop.permute.xlu0 %1835
        %1837 = vrot.lane.b32.xlu0 %v1333, 64
        %v1838 = vpop.permute.xlu0 %1837
        %v1840 = vsel %vm1348, %v1836, 0
        %v1843 = vsel %vm1348, %v1838, 0
        %1845 = vmatprep.subr.bf16.mxu0 0
        %1846 = vmatpush1.bf16.xpose.msra.mxu0 0
        %1847 = vmatprep.subr.bf16.mxu0 0
        %1848 = vmatpush1.bf16.xpose.msra.mxu0 0
        %1849 = vmatprep.subr.bf16.mxu0 0
        %1850 = vmatpush1.bf16.xpose.msra.mxu0 0
        %1851 = vmatprep.subr.bf16.mxu0 0
        %1852 = vmatpush1.bf16.xpose.msra.mxu0 0
        %1853 = vmatprep.subr.bf16.mxu0 0
        %1854 = vmatpush1.bf16.xpose.msra.mxu0 0
        %1855 = vmatprep.subr.bf16.mxu0 0
        %1856 = vmatpush1.bf16.xpose.msra.mxu0 0
        %1857 = vmatprep.subr.bf16.mxu0 0
        %1858 = vmatpush1.bf16.xpose.msra.mxu0 0
        %1859 = vmatprep.subr.bf16.mxu0 0
        %1860 = vmatpush1.bf16.xpose.msra.mxu0 %v1843
        %1861 = vmatprep.subr.bf16.mxu0 0
        %1862 = vmatpush2.bf16.xpose.msra.mxu0 0
        %1863 = vmatprep.subr.bf16.mxu0 0
        %1864 = vmatpush2.bf16.xpose.msra.mxu0 0
        %1865 = vmatprep.subr.bf16.mxu0 0
        %1866 = vmatpush2.bf16.xpose.msra.mxu0 0
        %1867 = vmatprep.subr.bf16.mxu0 0
        %1868 = vmatpush2.bf16.xpose.msra.mxu0 0
        %1869 = vmatprep.subr.bf16.mxu0 0
        %1870 = vmatpush2.bf16.xpose.msra.mxu0 0
        %1871 = vmatprep.subr.bf16.mxu0 0
        %1872 = vmatpush2.bf16.xpose.msra.mxu0 0
        %1873 = vmatprep.subr.bf16.mxu0 0
        %1874 = vmatpush2.bf16.xpose.msra.mxu0 0
        %1875 = vmatprep.subr.bf16.mxu0 0
        %1876 = vmatpush2.bf16.xpose.msra.mxu0 0
        %1877 = vmatprep.mubr.bf16.mxu0 0
        %1878 = vmatmul.mubr.bf16.gmra.mxu0 %v1840
        %v1879 = vpop.f32.mrf.mxu0
        %v1880 = vadd.f32 %v1345, %v1879
        %v1881 = vpop.f32.mrf.mxu0
        %v1882 = vpop.f32.mrf.mxu0
        %v1883 = vpop.f32.mrf.mxu0
        %1884 = vdwg.mxu0
        %v1885 = vsel %vm1441, %v1830, -inf
        %1886 = vmax.xlane.f32.xlu0 %v1885
        %v1887 = vpop.xlane.xlu0 %1886
        %v1888 = vsel %vm1441, %v1880, -inf
        %1889 = vmax.xlane.f32.xlu0 %v1888
        %v1890 = vpop.xlane.xlu0 %1889
        %v1891 = vsub.f32 %v1830, %v1887
        %v1892 = vsub.f32 %v1880, %v1890
        %v1893 = vmul.f32 %v1891, 1.442695
        %v1894 = vpow.pop %v1893
        %v1895 = vmul.f32 %v1892, 1.442695
        %v1896 = vpow.pop %v1895
        %v1897 = vsel %vm1441, %v1894, 0.0
        %1898 = vadd.xlane.f32.xlu0 %v1897
        %v1899 = vpop.xlane.xlu0 %1898
        %v1900 = vsel %vm1441, %v1896, 0.0
        %1901 = vadd.xlane.f32.xlu0 %v1900
        %v1902 = vpop.xlane.xlu0 %1901
        %v1903 = vrcp.pop %v1899
        %v1904 = vrcp.pop %v1902
        %v1905 = vmul.f32 %v1894, %v1903
        %v1906 = vmul.f32 %v1896, %v1904
        %v1907 = vpack.c.bf16 %v1905, %v1905
        %v1908 = vpack.c.bf16 %v1906, %v1906
        %1909 = vrot.lane.b32.xlu0 %v1334, 64
        %v1910 = vpop.permute.xlu0 %1909
        %v1912 = vsel %vm1441, %v1907, 0
        %v1915 = vsel %vm1469, %v1910, 0
        %1917 = vmatprep.subr.bf16.mxu0 0
        %1918 = vmatpush1.bf16.msra.mxu0 0
        %1919 = vmatprep.subr.bf16.mxu0 0
        %1920 = vmatpush1.bf16.msra.mxu0 0
        %1921 = vmatprep.subr.bf16.mxu0 0
        %1922 = vmatpush1.bf16.msra.mxu0 0
        %1923 = vmatprep.subr.bf16.mxu0 0
        %1924 = vmatpush1.bf16.msra.mxu0 0
        %1925 = vmatprep.subr.bf16.mxu0 0
        %1926 = vmatpush1.bf16.msra.mxu0 0
        %1927 = vmatprep.subr.bf16.mxu0 0
        %1928 = vmatpush1.bf16.msra.mxu0 0
        %1929 = vmatprep.subr.bf16.mxu0 0
        %1930 = vmatpush1.bf16.msra.mxu0 0
        %1931 = vmatprep.subr.bf16.mxu0 0
        %1932 = vmatpush1.bf16.msra.mxu0 %v1915
        %1933 = vmatprep.subr.bf16.mxu0 0
        %1934 = vmatpush2.bf16.msra.mxu0 0
        %1935 = vmatprep.subr.bf16.mxu0 0
        %1936 = vmatpush2.bf16.msra.mxu0 0
        %1937 = vmatprep.subr.bf16.mxu0 0
        %1938 = vmatpush2.bf16.msra.mxu0 0
        %1939 = vmatprep.subr.bf16.mxu0 0
        %1940 = vmatpush2.bf16.msra.mxu0 0
        %1941 = vmatprep.subr.bf16.mxu0 0
        %1942 = vmatpush2.bf16.msra.mxu0 0
        %1943 = vmatprep.subr.bf16.mxu0 0
        %1944 = vmatpush2.bf16.msra.mxu0 0
        %1945 = vmatprep.subr.bf16.mxu0 0
        %1946 = vmatpush2.bf16.msra.mxu0 0
        %1947 = vmatprep.subr.bf16.mxu0 0
        %1948 = vmatpush2.bf16.msra.mxu0 0
        %1949 = vmatprep.mubr.bf16.mxu0 0
        %1950 = vmatmul.mubr.bf16.gmra.mxu0 %v1912
        %v1951 = vpop.f32.mrf.mxu0
        %v1952 = vadd.f32 0.0, %v1951
        %v1953 = vpop.f32.mrf.mxu0
        %v1954 = vpop.f32.mrf.mxu0
        %v1955 = vpop.f32.mrf.mxu0
        %1956 = vdwg.mxu0
        %1957 = vrot.lane.b32.xlu0 %v1335, 64
        %v1958 = vpop.permute.xlu0 %1957
        %v1960 = vsel %vm1441, %v1908, 0
        %v1963 = vsel %vm1469, %v1958, 0
        %1965 = vmatprep.subr.bf16.mxu0 0
        %1966 = vmatpush1.bf16.msra.mxu0 0
        %1967 = vmatprep.subr.bf16.mxu0 0
        %1968 = vmatpush1.bf16.msra.mxu0 0
        %1969 = vmatprep.subr.bf16.mxu0 0
        %1970 = vmatpush1.bf16.msra.mxu0 0
        %1971 = vmatprep.subr.bf16.mxu0 0
        %1972 = vmatpush1.bf16.msra.mxu0 0
        %1973 = vmatprep.subr.bf16.mxu0 0
        %1974 = vmatpush1.bf16.msra.mxu0 0
        %1975 = vmatprep.subr.bf16.mxu0 0
        %1976 = vmatpush1.bf16.msra.mxu0 0
        %1977 = vmatprep.subr.bf16.mxu0 0
        %1978 = vmatpush1.bf16.msra.mxu0 0
        %1979 = vmatprep.subr.bf16.mxu0 0
        %1980 = vmatpush1.bf16.msra.mxu0 %v1963
        %1981 = vmatprep.subr.bf16.mxu0 0
        %1982 = vmatpush2.bf16.msra.mxu0 0
        %1983 = vmatprep.subr.bf16.mxu0 0
        %1984 = vmatpush2.bf16.msra.mxu0 0
        %1985 = vmatprep.subr.bf16.mxu0 0
        %1986 = vmatpush2.bf16.msra.mxu0 0
        %1987 = vmatprep.subr.bf16.mxu0 0
        %1988 = vmatpush2.bf16.msra.mxu0 0
        %1989 = vmatprep.subr.bf16.mxu0 0
        %1990 = vmatpush2.bf16.msra.mxu0 0
        %1991 = vmatprep.subr.bf16.mxu0 0
        %1992 = vmatpush2.bf16.msra.mxu0 0
        %1993 = vmatprep.subr.bf16.mxu0 0
        %1994 = vmatpush2.bf16.msra.mxu0 0
        %1995 = vmatprep.subr.bf16.mxu0 0
        %1996 = vmatpush2.bf16.msra.mxu0 0
        %1997 = vmatprep.mubr.bf16.mxu0 0
        %1998 = vmatmul.mubr.bf16.gmra.mxu0 %v1960
        %v1999 = vpop.f32.mrf.mxu0
        %v2000 = vadd.f32 0.0, %v1999
        %v2001 = vpop.f32.mrf.mxu0
        %v2002 = vpop.f32.mrf.mxu0
        %v2003 = vpop.f32.mrf.mxu0
        %2004 = vdwg.mxu0
        %2005 = vrot.lane.b32.xlu0 %v1330, 32
        %v2006 = vpop.permute.xlu0 %2005
        %2007 = vrot.lane.b32.xlu0 %v1332, 32
        %v2008 = vpop.permute.xlu0 %2007
        %v2010 = vsel %vm1348, %v2006, 0
        %v2013 = vsel %vm1348, %v2008, 0
        %2015 = vmatprep.subr.bf16.mxu0 0
        %2016 = vmatpush1.bf16.xpose.msra.mxu0 0
        %2017 = vmatprep.subr.bf16.mxu0 0
        %2018 = vmatpush1.bf16.xpose.msra.mxu0 0
        %2019 = vmatprep.subr.bf16.mxu0 0
        %2020 = vmatpush1.bf16.xpose.msra.mxu0 0
        %2021 = vmatprep.subr.bf16.mxu0 0
        %2022 = vmatpush1.bf16.xpose.msra.mxu0 0
        %2023 = vmatprep.subr.bf16.mxu0 0
        %2024 = vmatpush1.bf16.xpose.msra.mxu0 0
        %2025 = vmatprep.subr.bf16.mxu0 0
        %2026 = vmatpush1.bf16.xpose.msra.mxu0 0
        %2027 = vmatprep.subr.bf16.mxu0 0
        %2028 = vmatpush1.bf16.xpose.msra.mxu0 0
        %2029 = vmatprep.subr.bf16.mxu0 0
        %2030 = vmatpush1.bf16.xpose.msra.mxu0 %v2013
        %2031 = vmatprep.subr.bf16.mxu0 0
        %2032 = vmatpush2.bf16.xpose.msra.mxu0 0
        %2033 = vmatprep.subr.bf16.mxu0 0
        %2034 = vmatpush2.bf16.xpose.msra.mxu0 0
        %2035 = vmatprep.subr.bf16.mxu0 0
        %2036 = vmatpush2.bf16.xpose.msra.mxu0 0
        %2037 = vmatprep.subr.bf16.mxu0 0
        %2038 = vmatpush2.bf16.xpose.msra.mxu0 0
        %2039 = vmatprep.subr.bf16.mxu0 0
        %2040 = vmatpush2.bf16.xpose.msra.mxu0 0
        %2041 = vmatprep.subr.bf16.mxu0 0
        %2042 = vmatpush2.bf16.xpose.msra.mxu0 0
        %2043 = vmatprep.subr.bf16.mxu0 0
        %2044 = vmatpush2.bf16.xpose.msra.mxu0 0
        %2045 = vmatprep.subr.bf16.mxu0 0
        %2046 = vmatpush2.bf16.xpose.msra.mxu0 0
        %2047 = vmatprep.mubr.bf16.mxu0 0
        %2048 = vmatmul.mubr.bf16.gmra.mxu0 %v2010
        %v2049 = vpop.f32.mrf.mxu0
        %v2050 = vadd.f32 %v1341, %v2049
        %v2051 = vpop.f32.mrf.mxu0
        %v2052 = vpop.f32.mrf.mxu0
        %v2053 = vpop.f32.mrf.mxu0
        %2054 = vdwg.mxu0
        %2055 = vrot.lane.b32.xlu0 %v1331, 32
        %v2056 = vpop.permute.xlu0 %2055
        %2057 = vrot.lane.b32.xlu0 %v1333, 32
        %v2058 = vpop.permute.xlu0 %2057
        %v2060 = vsel %vm1348, %v2056, 0
        %v2063 = vsel %vm1348, %v2058, 0
        %2065 = vmatprep.subr.bf16.mxu0 0
        %2066 = vmatpush1.bf16.xpose.msra.mxu0 0
        %2067 = vmatprep.subr.bf16.mxu0 0
        %2068 = vmatpush1.bf16.xpose.msra.mxu0 0
        %2069 = vmatprep.subr.bf16.mxu0 0
        %2070 = vmatpush1.bf16.xpose.msra.mxu0 0
        %2071 = vmatprep.subr.bf16.mxu0 0
        %2072 = vmatpush1.bf16.xpose.msra.mxu0 0
        %2073 = vmatprep.subr.bf16.mxu0 0
        %2074 = vmatpush1.bf16.xpose.msra.mxu0 0
        %2075 = vmatprep.subr.bf16.mxu0 0
        %2076 = vmatpush1.bf16.xpose.msra.mxu0 0
        %2077 = vmatprep.subr.bf16.mxu0 0
        %2078 = vmatpush1.bf16.xpose.msra.mxu0 0
        %2079 = vmatprep.subr.bf16.mxu0 0
        %2080 = vmatpush1.bf16.xpose.msra.mxu0 %v2063
        %2081 = vmatprep.subr.bf16.mxu0 0
        %2082 = vmatpush2.bf16.xpose.msra.mxu0 0
        %2083 = vmatprep.subr.bf16.mxu0 0
        %2084 = vmatpush2.bf16.xpose.msra.mxu0 0
        %2085 = vmatprep.subr.bf16.mxu0 0
        %2086 = vmatpush2.bf16.xpose.msra.mxu0 0
        %2087 = vmatprep.subr.bf16.mxu0 0
        %2088 = vmatpush2.bf16.xpose.msra.mxu0 0
        %2089 = vmatprep.subr.bf16.mxu0 0
        %2090 = vmatpush2.bf16.xpose.msra.mxu0 0
        %2091 = vmatprep.subr.bf16.mxu0 0
        %2092 = vmatpush2.bf16.xpose.msra.mxu0 0
        %2093 = vmatprep.subr.bf16.mxu0 0
        %2094 = vmatpush2.bf16.xpose.msra.mxu0 0
        %2095 = vmatprep.subr.bf16.mxu0 0
        %2096 = vmatpush2.bf16.xpose.msra.mxu0 0
        %2097 = vmatprep.mubr.bf16.mxu0 0
        %2098 = vmatmul.mubr.bf16.gmra.mxu0 %v2060
        %v2099 = vpop.f32.mrf.mxu0
        %v2100 = vadd.f32 %v1345, %v2099
        %v2101 = vpop.f32.mrf.mxu0
        %v2102 = vpop.f32.mrf.mxu0
        %v2103 = vpop.f32.mrf.mxu0
        %2104 = vdwg.mxu0
        %v2105 = vsel %vm1441, %v2050, -inf
        %2106 = vmax.xlane.f32.xlu0 %v2105
        %v2107 = vpop.xlane.xlu0 %2106
        %v2108 = vsel %vm1441, %v2100, -inf
        %2109 = vmax.xlane.f32.xlu0 %v2108
        %v2110 = vpop.xlane.xlu0 %2109
        %v2111 = vsub.f32 %v2050, %v2107
        %v2112 = vsub.f32 %v2100, %v2110
        %v2113 = vmul.f32 %v2111, 1.442695
        %v2114 = vpow.pop %v2113
        %v2115 = vmul.f32 %v2112, 1.442695
        %v2116 = vpow.pop %v2115
        %v2117 = vsel %vm1441, %v2114, 0.0
        %2118 = vadd.xlane.f32.xlu0 %v2117
        %v2119 = vpop.xlane.xlu0 %2118
        %v2120 = vsel %vm1441, %v2116, 0.0
        %2121 = vadd.xlane.f32.xlu0 %v2120
        %v2122 = vpop.xlane.xlu0 %2121
        %v2123 = vrcp.pop %v2119
        %v2124 = vrcp.pop %v2122
        %v2125 = vmul.f32 %v2114, %v2123
        %v2126 = vmul.f32 %v2116, %v2124
        %v2127 = vpack.c.bf16 %v2125, %v2125
        %v2128 = vpack.c.bf16 %v2126, %v2126
        %2129 = vrot.lane.b32.xlu0 %v1334, 32
        %v2130 = vpop.permute.xlu0 %2129
        %v2132 = vsel %vm1441, %v2127, 0
        %v2135 = vsel %vm1469, %v2130, 0
        %2137 = vmatprep.subr.bf16.mxu0 0
        %2138 = vmatpush1.bf16.msra.mxu0 0
        %2139 = vmatprep.subr.bf16.mxu0 0
        %2140 = vmatpush1.bf16.msra.mxu0 0
        %2141 = vmatprep.subr.bf16.mxu0 0
        %2142 = vmatpush1.bf16.msra.mxu0 0
        %2143 = vmatprep.subr.bf16.mxu0 0
        %2144 = vmatpush1.bf16.msra.mxu0 0
        %2145 = vmatprep.subr.bf16.mxu0 0
        %2146 = vmatpush1.bf16.msra.mxu0 0
        %2147 = vmatprep.subr.bf16.mxu0 0
        %2148 = vmatpush1.bf16.msra.mxu0 0
        %2149 = vmatprep.subr.bf16.mxu0 0
        %2150 = vmatpush1.bf16.msra.mxu0 0
        %2151 = vmatprep.subr.bf16.mxu0 0
        %2152 = vmatpush1.bf16.msra.mxu0 %v2135
        %2153 = vmatprep.subr.bf16.mxu0 0
        %2154 = vmatpush2.bf16.msra.mxu0 0
        %2155 = vmatprep.subr.bf16.mxu0 0
        %2156 = vmatpush2.bf16.msra.mxu0 0
        %2157 = vmatprep.subr.bf16.mxu0 0
        %2158 = vmatpush2.bf16.msra.mxu0 0
        %2159 = vmatprep.subr.bf16.mxu0 0
        %2160 = vmatpush2.bf16.msra.mxu0 0
        %2161 = vmatprep.subr.bf16.mxu0 0
        %2162 = vmatpush2.bf16.msra.mxu0 0
        %2163 = vmatprep.subr.bf16.mxu0 0
        %2164 = vmatpush2.bf16.msra.mxu0 0
        %2165 = vmatprep.subr.bf16.mxu0 0
        %2166 = vmatpush2.bf16.msra.mxu0 0
        %2167 = vmatprep.subr.bf16.mxu0 0
        %2168 = vmatpush2.bf16.msra.mxu0 0
        %2169 = vmatprep.mubr.bf16.mxu0 0
        %2170 = vmatmul.mubr.bf16.gmra.mxu0 %v2132
        %v2171 = vpop.f32.mrf.mxu0
        %v2172 = vadd.f32 0.0, %v2171
        %v2173 = vpop.f32.mrf.mxu0
        %v2174 = vpop.f32.mrf.mxu0
        %v2175 = vpop.f32.mrf.mxu0
        %2176 = vdwg.mxu0
        %2177 = vrot.lane.b32.xlu0 %v1335, 32
        %v2178 = vpop.permute.xlu0 %2177
        %v2180 = vsel %vm1441, %v2128, 0
        %v2183 = vsel %vm1469, %v2178, 0
        %2185 = vmatprep.subr.bf16.mxu0 0
        %2186 = vmatpush1.bf16.msra.mxu0 0
        %2187 = vmatprep.subr.bf16.mxu0 0
        %2188 = vmatpush1.bf16.msra.mxu0 0
        %2189 = vmatprep.subr.bf16.mxu0 0
        %2190 = vmatpush1.bf16.msra.mxu0 0
        %2191 = vmatprep.subr.bf16.mxu0 0
        %2192 = vmatpush1.bf16.msra.mxu0 0
        %2193 = vmatprep.subr.bf16.mxu0 0
        %2194 = vmatpush1.bf16.msra.mxu0 0
        %2195 = vmatprep.subr.bf16.mxu0 0
        %2196 = vmatpush1.bf16.msra.mxu0 0
        %2197 = vmatprep.subr.bf16.mxu0 0
        %2198 = vmatpush1.bf16.msra.mxu0 0
        %2199 = vmatprep.subr.bf16.mxu0 0
        %2200 = vmatpush1.bf16.msra.mxu0 %v2183
        %2201 = vmatprep.subr.bf16.mxu0 0
        %2202 = vmatpush2.bf16.msra.mxu0 0
        %2203 = vmatprep.subr.bf16.mxu0 0
        %2204 = vmatpush2.bf16.msra.mxu0 0
        %2205 = vmatprep.subr.bf16.mxu0 0
        %2206 = vmatpush2.bf16.msra.mxu0 0
        %2207 = vmatprep.subr.bf16.mxu0 0
        %2208 = vmatpush2.bf16.msra.mxu0 0
        %2209 = vmatprep.subr.bf16.mxu0 0
        %2210 = vmatpush2.bf16.msra.mxu0 0
        %2211 = vmatprep.subr.bf16.mxu0 0
        %2212 = vmatpush2.bf16.msra.mxu0 0
        %2213 = vmatprep.subr.bf16.mxu0 0
        %2214 = vmatpush2.bf16.msra.mxu0 0
        %2215 = vmatprep.subr.bf16.mxu0 0
        %2216 = vmatpush2.bf16.msra.mxu0 0
        %2217 = vmatprep.mubr.bf16.mxu0 0
        %2218 = vmatmul.mubr.bf16.gmra.mxu0 %v2180
        %v2219 = vpop.f32.mrf.mxu0
        %v2220 = vadd.f32 0.0, %v2219
        %v2221 = vpop.f32.mrf.mxu0
        %v2222 = vpop.f32.mrf.mxu0
        %v2223 = vpop.f32.mrf.mxu0
        %2224 = vdwg.mxu0
        %2227 = vrot.lane.b32.xlu0 %v1731, 32
        %v2228 = vpop.permute.xlu0 %2227
        %2229 = vrot.lane.b32.xlu0 %v1780, 32
        %v2230 = vpop.permute.xlu0 %2229
        %2235 = vrot.lane.b32.xlu0 %v1952, 64
        %v2236 = vpop.permute.xlu0 %2235
        %2237 = vrot.lane.b32.xlu0 %v2000, 64
        %v2238 = vpop.permute.xlu0 %2237
        %2243 = vrot.lane.b32.xlu0 %v2172, 96
        %v2244 = vpop.permute.xlu0 %2243
        %2245 = vrot.lane.b32.xlu0 %v2220, 96
        %v2246 = vpop.permute.xlu0 %2245
        %v2249 = vsel %vm1348, %v1508, %v2228
        %v2250 = vsel %vm1348, %v1554, %v2230
        %vm2251 = vcmask 523264
        %v2252 = vsel %vm2251, %v2249, %v2236
        %v2253 = vsel %vm2251, %v2250, %v2238
        %vm2254 = vcmask 785408
        %v2255 = vsel %vm2254, %v2252, %v2244
        %v2256 = vsel %vm2254, %v2253, %v2246
        %v2257 = vpack.c.bf16 %v2256, %v2255
        %v2258 = vld [vmem:[%s1012] sm:$0xf]
        %v2259 = vld [vmem:[%s1012 + $0x4] sm:$0xf]
        %v2260 = vld [vmem:[%s1012 + $0x8] sm:$0xf]
        %v2261 = vld [vmem:[%s1012 + $0xc] sm:$0xf]
        %v2262 = vld [vmem:[%s1012 + $0x10] sm:$0xf]
        %v2263 = vld [vmem:[%s1012 + $0x14] sm:$0xf]
        %v2264 = vld [vmem:[%s1012 + $0x18] sm:$0xf]
        %v2265 = vld [vmem:[%s1012 + $0x1c] sm:$0xf]
        %v2266 = vld [vmem:[%s1012 + $0x20] sm:$0xf]
        %v2267 = vld [vmem:[%s1012 + $0x24] sm:$0xf]
        %v2268 = vld [vmem:[%s1012 + $0x28] sm:$0xf]
        %v2269 = vld [vmem:[%s1012 + $0x2c] sm:$0xf]
        %v2270 = vld [vmem:[%s1012 + $0x30] sm:$0xf]
        %v2271 = vld [vmem:[%s1012 + $0x34] sm:$0xf]
        %v2272 = vld [vmem:[%s1012 + $0x38] sm:$0xf]
        %v2273 = vld [vmem:[%s1012 + $0x3c] sm:$0xf]
        %v2274 = vld [vmem:[%s827] sm:$0x1]
        %v2276 = vlaneseq
        %v2277 = vshrl.u32 %v2276, 7
        %v2278 = vsub.s32 0, %v2277
        %v2279 = vrot.slane %v2274, %v2278
        %v2297 = vunpack.c.l.b16 %v2258
        %v2298 = vunpack.c.l.b16 %v2259
        %v2299 = vunpack.c.l.b16 %v2260
        %v2300 = vunpack.c.l.b16 %v2261
        %v2301 = vunpack.c.l.b16 %v2262
        %v2302 = vunpack.c.l.b16 %v2263
        %v2303 = vunpack.c.l.b16 %v2264
        %v2304 = vunpack.c.l.b16 %v2265
        %v2305 = vunpack.c.l.b16 %v2266
        %v2306 = vunpack.c.l.b16 %v2267
        %v2307 = vunpack.c.l.b16 %v2268
        %v2308 = vunpack.c.l.b16 %v2269
        %v2309 = vunpack.c.l.b16 %v2270
        %v2310 = vunpack.c.l.b16 %v2271
        %v2311 = vunpack.c.l.b16 %v2272
        %v2312 = vunpack.c.l.b16 %v2273
        %v2313 = vpack.c.b16 %v2298, %v2297
        %v2314 = vpack.c.b16 %v2300, %v2299
        %v2315 = vpack.c.b16 %v2302, %v2301
        %v2316 = vpack.c.b16 %v2304, %v2303
        %v2317 = vpack.c.b16 %v2306, %v2305
        %v2318 = vpack.c.b16 %v2308, %v2307
        %v2319 = vpack.c.b16 %v2310, %v2309
        %v2320 = vpack.c.b16 %v2312, %v2311
        %2329 = vmatprep.subr.bf16.mxu0 0
        %2330 = vmatpush1.bf16.msra.mxu0 %v2320
        %2331 = vmatprep.subr.bf16.mxu0 0
        %2332 = vmatpush1.bf16.msra.mxu0 %v2319
        %2333 = vmatprep.subr.bf16.mxu0 0
        %2334 = vmatpush1.bf16.msra.mxu0 %v2318
        %2335 = vmatprep.subr.bf16.mxu0 0
        %2336 = vmatpush1.bf16.msra.mxu0 %v2317
        %2337 = vmatprep.subr.bf16.mxu0 0
        %2338 = vmatpush1.bf16.msra.mxu0 %v2316
        %2339 = vmatprep.subr.bf16.mxu0 0
        %2340 = vmatpush1.bf16.msra.mxu0 %v2315
        %2341 = vmatprep.subr.bf16.mxu0 0
        %2342 = vmatpush1.bf16.msra.mxu0 %v2314
        %2343 = vmatprep.subr.bf16.mxu0 0
        %2344 = vmatpush1.bf16.msra.mxu0 %v2313
        %2345 = vmatprep.subr.bf16.mxu0 0
        %2346 = vmatpush2.bf16.msra.mxu0 0
        %2347 = vmatprep.subr.bf16.mxu0 0
        %2348 = vmatpush2.bf16.msra.mxu0 0
        %2349 = vmatprep.subr.bf16.mxu0 0
        %2350 = vmatpush2.bf16.msra.mxu0 0
        %2351 = vmatprep.subr.bf16.mxu0 0
        %2352 = vmatpush2.bf16.msra.mxu0 0
        %2353 = vmatprep.subr.bf16.mxu0 0
        %2354 = vmatpush2.bf16.msra.mxu0 0
        %2355 = vmatprep.subr.bf16.mxu0 0
        %2356 = vmatpush2.bf16.msra.mxu0 0
        %2357 = vmatprep.subr.bf16.mxu0 0
        %2358 = vmatpush2.bf16.msra.mxu0 0
        %2359 = vmatprep.subr.bf16.mxu0 0
        %2360 = vmatpush2.bf16.msra.mxu0 0
        %2361 = vmatprep.mubr.bf16.mxu0 0
        %2362 = vmatmul.mubr.bf16.gmra.mxu0 %v2257
        %v2363 = vpop.f32.mrf.mxu0
        %v2364 = vadd.f32 %v2279, %v2363
        %v2365 = vpop.f32.mrf.mxu0
        %v2366 = vpop.f32.mrf.mxu0
        %v2367 = vadd.f32 %v2279, %v2366
        %v2368 = vpop.f32.mrf.mxu0
        %2369 = vdwg.mxu0
        %v2370 = vadd.f32 %v1023, %v2364
        %v2371 = vadd.f32 %v1024, %v2367
        %v2372 = vld [vmem:[%s835] sm:$0x1]
        %v2373 = vld [vmem:[%s843] sm:$0x1]
        %2374 = vadd.xlane.f32.xlu0 %v2370
        %v2375 = vpop.xlane.xlu0 %2374
        %2376 = vadd.xlane.f32.xlu0 %v2371
        %v2377 = vpop.xlane.xlu0 %2376
        %v2378 = vmul.f32 %v2375, %v1031
        %v2379 = vmul.f32 %v2377, %v1031
        %v2380 = vsub.f32 %v2370, %v2378
        %v2381 = vsub.f32 %v2371, %v2379
        %v2382 = vmul.f32 %v2380, %v2380
        %v2383 = vmul.f32 %v2381, %v2381
        %2384 = vadd.xlane.f32.xlu0 %v2382
        %v2385 = vpop.xlane.xlu0 %2384
        %2386 = vadd.xlane.f32.xlu0 %v2383
        %v2387 = vpop.xlane.xlu0 %2386
        %v2388 = vmul.f32 %v2385, %v1031
        %v2389 = vmul.f32 %v2387, %v1031
        %v2390 = vadd.f32 %v2388, 1e-05
        %v2391 = vadd.f32 %v2389, 1e-05
        %v2392 = vrsqrt.pop %v2390
        %v2393 = vrsqrt.pop %v2391
        %v2394 = vmul.f32 %v2380, %v2392
        %v2395 = vmul.f32 %v2381, %v2393
        %v2397 = vlaneseq
        %v2398 = vshrl.u32 %v2397, 7
        %v2399 = vsub.s32 0, %v2398
        %v2400 = vrot.slane %v2372, %v2399
        %v2402 = vmul.f32 %v2394, %v2400
        %v2403 = vmul.f32 %v2395, %v2400
        %v2405 = vlaneseq
        %v2406 = vshrl.u32 %v2405, 7
        %v2407 = vsub.s32 0, %v2406
        %v2408 = vrot.slane %v2373, %v2407
        %v2410 = vadd.f32 %v2402, %v2408
        %v2411 = vadd.f32 %v2403, %v2408
        %v2412 = vpack.c.bf16 %v2411, %v2410
        %v2413 = vld [vmem:[%s852] sm:$0xff]
        %v2414 = vld [vmem:[%s852 + $0x8] sm:$0xff]
        %v2415 = vld [vmem:[%s852 + $0x10] sm:$0xff]
        %v2416 = vld [vmem:[%s852 + $0x18] sm:$0xff]
        %v2417 = vld [vmem:[%s852 + $0x20] sm:$0xff]
        %v2418 = vld [vmem:[%s852 + $0x28] sm:$0xff]
        %v2419 = vld [vmem:[%s852 + $0x30] sm:$0xff]
        %v2420 = vld [vmem:[%s852 + $0x38] sm:$0xff]
        %v2421 = vld [vmem:[%s852 + $0x40] sm:$0xff]
        %v2422 = vld [vmem:[%s852 + $0x48] sm:$0xff]
        %v2423 = vld [vmem:[%s852 + $0x50] sm:$0xff]
        %v2424 = vld [vmem:[%s852 + $0x58] sm:$0xff]
        %v2425 = vld [vmem:[%s852 + $0x60] sm:$0xff]
        %v2426 = vld [vmem:[%s852 + $0x68] sm:$0xff]
        %v2427 = vld [vmem:[%s852 + $0x70] sm:$0xff]
        %v2428 = vld [vmem:[%s852 + $0x78] sm:$0xff]
        %v2429 = vld [vmem:[%s852 + $0x80] sm:$0xff]
        %v2430 = vld [vmem:[%s852 + $0x88] sm:$0xff]
        %v2431 = vld [vmem:[%s852 + $0x90] sm:$0xff]
        %v2432 = vld [vmem:[%s852 + $0x98] sm:$0xff]
        %v2433 = vld [vmem:[%s852 + $0xa0] sm:$0xff]
        %v2434 = vld [vmem:[%s852 + $0xa8] sm:$0xff]
        %v2435 = vld [vmem:[%s852 + $0xb0] sm:$0xff]
        %v2436 = vld [vmem:[%s852 + $0xb8] sm:$0xff]
        %v2437 = vld [vmem:[%s852 + $0xc0] sm:$0xff]
        %v2438 = vld [vmem:[%s852 + $0xc8] sm:$0xff]
        %v2439 = vld [vmem:[%s852 + $0xd0] sm:$0xff]
        %v2440 = vld [vmem:[%s852 + $0xd8] sm:$0xff]
        %v2441 = vld [vmem:[%s852 + $0xe0] sm:$0xff]
        %v2442 = vld [vmem:[%s852 + $0xe8] sm:$0xff]
        %v2443 = vld [vmem:[%s852 + $0xf0] sm:$0xff]
        %v2444 = vld [vmem:[%s852 + $0xf8] sm:$0xff]
        %v2445 = vld [vmem:[%s861] sm:$0xf]
        %v2447 = vlaneseq
        %v2448 = vshrl.u32 %v2447, 7
        %v2449 = vsub.s32 0, %v2448
        %v2450 = vrot.slane %v2445, %v2449
        %v2451 = vlaneseq
        %v2452 = vshrl.u32 %v2451, 7
        %v2453 = vsub.s32 1, %v2452
        %v2454 = vrot.slane %v2445, %v2453
        %v2455 = vlaneseq
        %v2456 = vshrl.u32 %v2455, 7
        %v2457 = vsub.s32 2, %v2456
        %v2458 = vrot.slane %v2445, %v2457
        %v2459 = vlaneseq
        %v2460 = vshrl.u32 %v2459, 7
        %v2461 = vsub.s32 3, %v2460
        %v2462 = vrot.slane %v2445, %v2461
        %v2499 = vunpack.c.l.b16 %v2413
        %v2500 = vunpack.c.h.b16 %v2413
        %v2501 = vunpack.c.l.b16 %v2414
        %v2502 = vunpack.c.h.b16 %v2414
        %v2503 = vunpack.c.l.b16 %v2415
        %v2504 = vunpack.c.h.b16 %v2415
        %v2505 = vunpack.c.l.b16 %v2416
        %v2506 = vunpack.c.h.b16 %v2416
        %v2507 = vunpack.c.l.b16 %v2417
        %v2508 = vunpack.c.h.b16 %v2417
        %v2509 = vunpack.c.l.b16 %v2418
        %v2510 = vunpack.c.h.b16 %v2418
        %v2511 = vunpack.c.l.b16 %v2419
        %v2512 = vunpack.c.h.b16 %v2419
        %v2513 = vunpack.c.l.b16 %v2420
        %v2514 = vunpack.c.h.b16 %v2420
        %v2515 = vunpack.c.l.b16 %v2421
        %v2516 = vunpack.c.h.b16 %v2421
        %v2517 = vunpack.c.l.b16 %v2422
        %v2518 = vunpack.c.h.b16 %v2422
        %v2519 = vunpack.c.l.b16 %v2423
        %v2520 = vunpack.c.h.b16 %v2423
        %v2521 = vunpack.c.l.b16 %v2424
        %v2522 = vunpack.c.h.b16 %v2424
        %v2523 = vunpack.c.l.b16 %v2425
        %v2524 = vunpack.c.h.b16 %v2425
        %v2525 = vunpack.c.l.b16 %v2426
        %v2526 = vunpack.c.h.b16 %v2426
        %v2527 = vunpack.c.l.b16 %v2427
        %v2528 = vunpack.c.h.b16 %v2427
        %v2529 = vunpack.c.l.b16 %v2428
        %v2530 = vunpack.c.h.b16 %v2428
        %v2531 = vunpack.c.l.b16 %v2429
        %v2532 = vunpack.c.h.b16 %v2429
        %v2533 = vunpack.c.l.b16 %v2430
        %v2534 = vunpack.c.h.b16 %v2430
        %v2535 = vunpack.c.l.b16 %v2431
        %v2536 = vunpack.c.h.b16 %v2431
        %v2537 = vunpack.c.l.b16 %v2432
        %v2538 = vunpack.c.h.b16 %v2432
        %v2539 = vunpack.c.l.b16 %v2433
        %v2540 = vunpack.c.h.b16 %v2433
        %v2541 = vunpack.c.l.b16 %v2434
        %v2542 = vunpack.c.h.b16 %v2434
        %v2543 = vunpack.c.l.b16 %v2435
        %v2544 = vunpack.c.h.b16 %v2435
        %v2545 = vunpack.c.l.b16 %v2436
        %v2546 = vunpack.c.h.b16 %v2436
        %v2547 = vunpack.c.l.b16 %v2437
        %v2548 = vunpack.c.h.b16 %v2437
        %v2549 = vunpack.c.l.b16 %v2438
        %v2550 = vunpack.c.h.b16 %v2438
        %v2551 = vunpack.c.l.b16 %v2439
        %v2552 = vunpack.c.h.b16 %v2439
        %v2553 = vunpack.c.l.b16 %v2440
        %v2554 = vunpack.c.h.b16 %v2440
        %v2555 = vunpack.c.l.b16 %v2441
        %v2556 = vunpack.c.h.b16 %v2441
        %v2557 = vunpack.c.l.b16 %v2442
        %v2558 = vunpack.c.h.b16 %v2442
        %v2559 = vunpack.c.l.b16 %v2443
        %v2560 = vunpack.c.h.b16 %v2443
        %v2561 = vunpack.c.l.b16 %v2444
        %v2562 = vunpack.c.h.b16 %v2444
        %v2563 = vpack.c.b16 %v2503, %v2499
        %v2564 = vpack.c.b16 %v2504, %v2500
        %v2565 = vpack.c.b16 %v2505, %v2501
        %v2566 = vpack.c.b16 %v2506, %v2502
        %v2567 = vpack.c.b16 %v2511, %v2507
        %v2568 = vpack.c.b16 %v2512, %v2508
        %v2569 = vpack.c.b16 %v2513, %v2509
        %v2570 = vpack.c.b16 %v2514, %v2510
        %v2571 = vpack.c.b16 %v2519, %v2515
        %v2572 = vpack.c.b16 %v2520, %v2516
        %v2573 = vpack.c.b16 %v2521, %v2517
        %v2574 = vpack.c.b16 %v2522, %v2518
        %v2575 = vpack.c.b16 %v2527, %v2523
        %v2576 = vpack.c.b16 %v2528, %v2524
        %v2577 = vpack.c.b16 %v2529, %v2525
        %v2578 = vpack.c.b16 %v2530, %v2526
        %v2579 = vpack.c.b16 %v2535, %v2531
        %v2580 = vpack.c.b16 %v2536, %v2532
        %v2581 = vpack.c.b16 %v2537, %v2533
        %v2582 = vpack.c.b16 %v2538, %v2534
        %v2583 = vpack.c.b16 %v2543, %v2539
        %v2584 = vpack.c.b16 %v2544, %v2540
        %v2585 = vpack.c.b16 %v2545, %v2541
        %v2586 = vpack.c.b16 %v2546, %v2542
        %v2587 = vpack.c.b16 %v2551, %v2547
        %v2588 = vpack.c.b16 %v2552, %v2548
        %v2589 = vpack.c.b16 %v2553, %v2549
        %v2590 = vpack.c.b16 %v2554, %v2550
        %v2591 = vpack.c.b16 %v2559, %v2555
        %v2592 = vpack.c.b16 %v2560, %v2556
        %v2593 = vpack.c.b16 %v2561, %v2557
        %v2594 = vpack.c.b16 %v2562, %v2558
        %2627 = vmatprep.subr.bf16.mxu0 %v2592
        %2628 = vmatpush1.bf16.msra.mxu0 %v2591
        %2629 = vmatprep.subr.bf16.mxu0 %v2588
        %2630 = vmatpush1.bf16.msra.mxu0 %v2587
        %2631 = vmatprep.subr.bf16.mxu0 %v2584
        %2632 = vmatpush1.bf16.msra.mxu0 %v2583
        %2633 = vmatprep.subr.bf16.mxu0 %v2580
        %2634 = vmatpush1.bf16.msra.mxu0 %v2579
        %2635 = vmatprep.subr.bf16.mxu0 %v2576
        %2636 = vmatpush1.bf16.msra.mxu0 %v2575
        %2637 = vmatprep.subr.bf16.mxu0 %v2572
        %2638 = vmatpush1.bf16.msra.mxu0 %v2571
        %2639 = vmatprep.subr.bf16.mxu0 %v2568
        %2640 = vmatpush1.bf16.msra.mxu0 %v2567
        %2641 = vmatprep.subr.bf16.mxu0 %v2564
        %2642 = vmatpush1.bf16.msra.mxu0 %v2563
        %2643 = vmatprep.subr.bf16.mxu0 0
        %2644 = vmatpush2.bf16.msra.mxu0 0
        %2645 = vmatprep.subr.bf16.mxu0 0
        %2646 = vmatpush2.bf16.msra.mxu0 0
        %2647 = vmatprep.subr.bf16.mxu0 0
        %2648 = vmatpush2.bf16.msra.mxu0 0
        %2649 = vmatprep.subr.bf16.mxu0 0
        %2650 = vmatpush2.bf16.msra.mxu0 0
        %2651 = vmatprep.subr.bf16.mxu0 0
        %2652 = vmatpush2.bf16.msra.mxu0 0
        %2653 = vmatprep.subr.bf16.mxu0 0
        %2654 = vmatpush2.bf16.msra.mxu0 0
        %2655 = vmatprep.subr.bf16.mxu0 0
        %2656 = vmatpush2.bf16.msra.mxu0 0
        %2657 = vmatprep.subr.bf16.mxu0 0
        %2658 = vmatpush2.bf16.msra.mxu0 0
        %2659 = vmatprep.mubr.bf16.mxu0 0
        %2660 = vmatmul.mubr.bf16.gmra.mxu0 %v2412
        %v2661 = vpop.f32.mrf.mxu0
        %v2662 = vadd.f32 %v2450, %v2661
        %v2663 = vpop.f32.mrf.mxu0
        %v2664 = vadd.f32 %v2454, %v2663
        %v2665 = vpop.f32.mrf.mxu0
        %v2666 = vadd.f32 %v2450, %v2665
        %v2667 = vpop.f32.mrf.mxu0
        %v2668 = vadd.f32 %v2454, %v2667
        %2669 = vdwg.mxu0
        %2670 = vmatprep.subr.bf16.mxu0 %v2594
        %2671 = vmatpush1.bf16.msra.mxu0 %v2593
        %2672 = vmatprep.subr.bf16.mxu0 %v2590
        %2673 = vmatpush1.bf16.msra.mxu0 %v2589
        %2674 = vmatprep.subr.bf16.mxu0 %v2586
        %2675 = vmatpush1.bf16.msra.mxu0 %v2585
        %2676 = vmatprep.subr.bf16.mxu0 %v2582
        %2677 = vmatpush1.bf16.msra.mxu0 %v2581
        %2678 = vmatprep.subr.bf16.mxu0 %v2578
        %2679 = vmatpush1.bf16.msra.mxu0 %v2577
        %2680 = vmatprep.subr.bf16.mxu0 %v2574
        %2681 = vmatpush1.bf16.msra.mxu0 %v2573
        %2682 = vmatprep.subr.bf16.mxu0 %v2570
        %2683 = vmatpush1.bf16.msra.mxu0 %v2569
        %2684 = vmatprep.subr.bf16.mxu0 %v2566
        %2685 = vmatpush1.bf16.msra.mxu0 %v2565
        %2686 = vmatprep.subr.bf16.mxu0 0
        %2687 = vmatpush2.bf16.msra.mxu0 0
        %2688 = vmatprep.subr.bf16.mxu0 0
        %2689 = vmatpush2.bf16.msra.mxu0 0
        %2690 = vmatprep.subr.bf16.mxu0 0
        %2691 = vmatpush2.bf16.msra.mxu0 0
        %2692 = vmatprep.subr.bf16.mxu0 0
        %2693 = vmatpush2.bf16.msra.mxu0 0
        %2694 = vmatprep.subr.bf16.mxu0 0
        %2695 = vmatpush2.bf16.msra.mxu0 0
        %2696 = vmatprep.subr.bf16.mxu0 0
        %2697 = vmatpush2.bf16.msra.mxu0 0
        %2698 = vmatprep.subr.bf16.mxu0 0
        %2699 = vmatpush2.bf16.msra.mxu0 0
        %2700 = vmatprep.subr.bf16.mxu0 0
        %2701 = vmatpush2.bf16.msra.mxu0 0
        %2702 = vmatprep.mubr.bf16.mxu0 0
        %2703 = vmatmul.mubr.bf16.gmra.mxu0 %v2412
        %v2704 = vpop.f32.mrf.mxu0
        %v2705 = vadd.f32 %v2458, %v2704
        %v2706 = vpop.f32.mrf.mxu0
        %v2707 = vadd.f32 %v2462, %v2706
        %v2708 = vpop.f32.mrf.mxu0
        %v2709 = vadd.f32 %v2458, %v2708
        %v2710 = vpop.f32.mrf.mxu0
        %v2711 = vadd.f32 %v2462, %v2710
        %2712 = vdwg.mxu0
        %v2713 = vmul.f32 %v2662, %v2662
        %v2714 = vmul.f32 %v2664, %v2664
        %v2715 = vmul.f32 %v2705, %v2705
        %v2716 = vmul.f32 %v2707, %v2707
        %v2717 = vmul.f32 %v2666, %v2666
        %v2718 = vmul.f32 %v2668, %v2668
        %v2719 = vmul.f32 %v2709, %v2709
        %v2720 = vmul.f32 %v2711, %v2711
        %v2721 = vmul.f32 %v2662, %v2713
        %v2722 = vmul.f32 %v2664, %v2714
        %v2723 = vmul.f32 %v2705, %v2715
        %v2724 = vmul.f32 %v2707, %v2716
        %v2725 = vmul.f32 %v2666, %v2717
        %v2726 = vmul.f32 %v2668, %v2718
        %v2727 = vmul.f32 %v2709, %v2719
        %v2728 = vmul.f32 %v2711, %v2720
        %v2729 = vmul.f32 %v2721, 0.044715
        %v2730 = vmul.f32 %v2722, 0.044715
        %v2731 = vmul.f32 %v2723, 0.044715
        %v2732 = vmul.f32 %v2724, 0.044715
        %v2733 = vmul.f32 %v2725, 0.044715
        %v2734 = vmul.f32 %v2726, 0.044715
        %v2735 = vmul.f32 %v2727, 0.044715
        %v2736 = vmul.f32 %v2728, 0.044715
        %v2737 = vadd.f32 %v2662, %v2729
        %v2738 = vadd.f32 %v2664, %v2730
        %v2739 = vadd.f32 %v2705, %v2731
        %v2740 = vadd.f32 %v2707, %v2732
        %v2741 = vadd.f32 %v2666, %v2733
        %v2742 = vadd.f32 %v2668, %v2734
        %v2743 = vadd.f32 %v2709, %v2735
        %v2744 = vadd.f32 %v2711, %v2736
        %v2745 = vmul.f32 %v2737, 0.7978846
        %v2746 = vmul.f32 %v2738, 0.7978846
        %v2747 = vmul.f32 %v2739, 0.7978846
        %v2748 = vmul.f32 %v2740, 0.7978846
        %v2749 = vmul.f32 %v2741, 0.7978846
        %v2750 = vmul.f32 %v2742, 0.7978846
        %v2751 = vmul.f32 %v2743, 0.7978846
        %v2752 = vmul.f32 %v2744, 0.7978846
        %v2753 = vtanh.pop %v2745
        %v2754 = vtanh.pop %v2746
        %v2755 = vtanh.pop %v2747
        %v2756 = vtanh.pop %v2748
        %v2757 = vtanh.pop %v2749
        %v2758 = vtanh.pop %v2750
        %v2759 = vtanh.pop %v2751
        %v2760 = vtanh.pop %v2752
        %v2761 = vadd.f32 %v2753, 1.0
        %v2762 = vadd.f32 %v2754, 1.0
        %v2763 = vadd.f32 %v2755, 1.0
        %v2764 = vadd.f32 %v2756, 1.0
        %v2765 = vadd.f32 %v2757, 1.0
        %v2766 = vadd.f32 %v2758, 1.0
        %v2767 = vadd.f32 %v2759, 1.0
        %v2768 = vadd.f32 %v2760, 1.0
        %v2769 = vmul.f32 %v2761, 0.5
        %v2770 = vmul.f32 %v2762, 0.5
        %v2771 = vmul.f32 %v2763, 0.5
        %v2772 = vmul.f32 %v2764, 0.5
        %v2773 = vmul.f32 %v2765, 0.5
        %v2774 = vmul.f32 %v2766, 0.5
        %v2775 = vmul.f32 %v2767, 0.5
        %v2776 = vmul.f32 %v2768, 0.5
        %v2777 = vmul.f32 %v2662, %v2769
        %v2778 = vmul.f32 %v2664, %v2770
        %v2779 = vmul.f32 %v2705, %v2771
        %v2780 = vmul.f32 %v2707, %v2772
        %v2781 = vmul.f32 %v2666, %v2773
        %v2782 = vmul.f32 %v2668, %v2774
        %v2783 = vmul.f32 %v2709, %v2775
        %v2784 = vmul.f32 %v2711, %v2776
        %v2785 = vpack.c.bf16 %v2781, %v2777
        %v2786 = vpack.c.bf16 %v2782, %v2778
        %v2787 = vpack.c.bf16 %v2783, %v2779
        %v2788 = vpack.c.bf16 %v2784, %v2780
        %v2789 = vld [vmem:[%s870] sm:$0xf]
        %v2790 = vld [vmem:[%s870 + $0x4] sm:$0xf]
        %v2791 = vld [vmem:[%s870 + $0x8] sm:$0xf]
        %v2792 = vld [vmem:[%s870 + $0xc] sm:$0xf]
        %v2793 = vld [vmem:[%s870 + $0x10] sm:$0xf]
        %v2794 = vld [vmem:[%s870 + $0x14] sm:$0xf]
        %v2795 = vld [vmem:[%s870 + $0x18] sm:$0xf]
        %v2796 = vld [vmem:[%s870 + $0x1c] sm:$0xf]
        %v2797 = vld [vmem:[%s870 + $0x20] sm:$0xf]
        %v2798 = vld [vmem:[%s870 + $0x24] sm:$0xf]
        %v2799 = vld [vmem:[%s870 + $0x28] sm:$0xf]
        %v2800 = vld [vmem:[%s870 + $0x2c] sm:$0xf]
        %v2801 = vld [vmem:[%s870 + $0x30] sm:$0xf]
        %v2802 = vld [vmem:[%s870 + $0x34] sm:$0xf]
        %v2803 = vld [vmem:[%s870 + $0x38] sm:$0xf]
        %v2804 = vld [vmem:[%s870 + $0x3c] sm:$0xf]
        %v2805 = vld [vmem:[%s870 + $0x40] sm:$0xf]
        %v2806 = vld [vmem:[%s870 + $0x44] sm:$0xf]
        %v2807 = vld [vmem:[%s870 + $0x48] sm:$0xf]
        %v2808 = vld [vmem:[%s870 + $0x4c] sm:$0xf]
        %v2809 = vld [vmem:[%s870 + $0x50] sm:$0xf]
        %v2810 = vld [vmem:[%s870 + $0x54] sm:$0xf]
        %v2811 = vld [vmem:[%s870 + $0x58] sm:$0xf]
        %v2812 = vld [vmem:[%s870 + $0x5c] sm:$0xf]
        %v2813 = vld [vmem:[%s870 + $0x60] sm:$0xf]
        %v2814 = vld [vmem:[%s870 + $0x64] sm:$0xf]
        %v2815 = vld [vmem:[%s870 + $0x68] sm:$0xf]
        %v2816 = vld [vmem:[%s870 + $0x6c] sm:$0xf]
        %v2817 = vld [vmem:[%s870 + $0x70] sm:$0xf]
        %v2818 = vld [vmem:[%s870 + $0x74] sm:$0xf]
        %v2819 = vld [vmem:[%s870 + $0x78] sm:$0xf]
        %v2820 = vld [vmem:[%s870 + $0x7c] sm:$0xf]
        %v2821 = vld [vmem:[%s870 + $0x80] sm:$0xf]
        %v2822 = vld [vmem:[%s870 + $0x84] sm:$0xf]
        %v2823 = vld [vmem:[%s870 + $0x88] sm:$0xf]
        %v2824 = vld [vmem:[%s870 + $0x8c] sm:$0xf]
        %v2825 = vld [vmem:[%s870 + $0x90] sm:$0xf]
        %v2826 = vld [vmem:[%s870 + $0x94] sm:$0xf]
        %v2827 = vld [vmem:[%s870 + $0x98] sm:$0xf]
        %v2828 = vld [vmem:[%s870 + $0x9c] sm:$0xf]
        %v2829 = vld [vmem:[%s870 + $0xa0] sm:$0xf]
        %v2830 = vld [vmem:[%s870 + $0xa4] sm:$0xf]
        %v2831 = vld [vmem:[%s870 + $0xa8] sm:$0xf]
        %v2832 = vld [vmem:[%s870 + $0xac] sm:$0xf]
        %v2833 = vld [vmem:[%s870 + $0xb0] sm:$0xf]
        %v2834 = vld [vmem:[%s870 + $0xb4] sm:$0xf]
        %v2835 = vld [vmem:[%s870 + $0xb8] sm:$0xf]
        %v2836 = vld [vmem:[%s870 + $0xbc] sm:$0xf]
        %v2837 = vld [vmem:[%s870 + $0xc0] sm:$0xf]
        %v2838 = vld [vmem:[%s870 + $0xc4] sm:$0xf]
        %v2839 = vld [vmem:[%s870 + $0xc8] sm:$0xf]
        %v2840 = vld [vmem:[%s870 + $0xcc] sm:$0xf]
        %v2841 = vld [vmem:[%s870 + $0xd0] sm:$0xf]
        %v2842 = vld [vmem:[%s870 + $0xd4] sm:$0xf]
        %v2843 = vld [vmem:[%s870 + $0xd8] sm:$0xf]
        %v2844 = vld [vmem:[%s870 + $0xdc] sm:$0xf]
        %v2845 = vld [vmem:[%s870 + $0xe0] sm:$0xf]
        %v2846 = vld [vmem:[%s870 + $0xe4] sm:$0xf]
        %v2847 = vld [vmem:[%s870 + $0xe8] sm:$0xf]
        %v2848 = vld [vmem:[%s870 + $0xec] sm:$0xf]
        %v2849 = vld [vmem:[%s870 + $0xf0] sm:$0xf]
        %v2850 = vld [vmem:[%s870 + $0xf4] sm:$0xf]
        %v2851 = vld [vmem:[%s870 + $0xf8] sm:$0xf]
        %v2852 = vld [vmem:[%s870 + $0xfc] sm:$0xf]
        %v2853 = vld [vmem:[%s878] sm:$0x1]
        %v2855 = vlaneseq
        %v2856 = vshrl.u32 %v2855, 7
        %v2857 = vsub.s32 0, %v2856
        %v2858 = vrot.slane %v2853, %v2857
        %v2924 = vunpack.c.l.b16 %v2789
        %v2925 = vunpack.c.l.b16 %v2790
        %v2926 = vunpack.c.l.b16 %v2791
        %v2927 = vunpack.c.l.b16 %v2792
        %v2928 = vunpack.c.l.b16 %v2793
        %v2929 = vunpack.c.l.b16 %v2794
        %v2930 = vunpack.c.l.b16 %v2795
        %v2931 = vunpack.c.l.b16 %v2796
        %v2932 = vunpack.c.l.b16 %v2797
        %v2933 = vunpack.c.l.b16 %v2798
        %v2934 = vunpack.c.l.b16 %v2799
        %v2935 = vunpack.c.l.b16 %v2800
        %v2936 = vunpack.c.l.b16 %v2801
        %v2937 = vunpack.c.l.b16 %v2802
        %v2938 = vunpack.c.l.b16 %v2803
        %v2939 = vunpack.c.l.b16 %v2804
        %v2940 = vunpack.c.l.b16 %v2805
        %v2941 = vunpack.c.l.b16 %v2806
        %v2942 = vunpack.c.l.b16 %v2807
        %v2943 = vunpack.c.l.b16 %v2808
        %v2944 = vunpack.c.l.b16 %v2809
        %v2945 = vunpack.c.l.b16 %v2810
        %v2946 = vunpack.c.l.b16 %v2811
        %v2947 = vunpack.c.l.b16 %v2812
        %v2948 = vunpack.c.l.b16 %v2813
        %v2949 = vunpack.c.l.b16 %v2814
        %v2950 = vunpack.c.l.b16 %v2815
        %v2951 = vunpack.c.l.b16 %v2816
        %v2952 = vunpack.c.l.b16 %v2817
        %v2953 = vunpack.c.l.b16 %v2818
        %v2954 = vunpack.c.l.b16 %v2819
        %v2955 = vunpack.c.l.b16 %v2820
        %v2956 = vunpack.c.l.b16 %v2821
        %v2957 = vunpack.c.l.b16 %v2822
        %v2958 = vunpack.c.l.b16 %v2823
        %v2959 = vunpack.c.l.b16 %v2824
        %v2960 = vunpack.c.l.b16 %v2825
        %v2961 = vunpack.c.l.b16 %v2826
        %v2962 = vunpack.c.l.b16 %v2827
        %v2963 = vunpack.c.l.b16 %v2828
        %v2964 = vunpack.c.l.b16 %v2829
        %v2965 = vunpack.c.l.b16 %v2830
        %v2966 = vunpack.c.l.b16 %v2831
        %v2967 = vunpack.c.l.b16 %v2832
        %v2968 = vunpack.c.l.b16 %v2833
        %v2969 = vunpack.c.l.b16 %v2834
        %v2970 = vunpack.c.l.b16 %v2835
        %v2971 = vunpack.c.l.b16 %v2836
        %v2972 = vunpack.c.l.b16 %v2837
        %v2973 = vunpack.c.l.b16 %v2838
        %v2974 = vunpack.c.l.b16 %v2839
        %v2975 = vunpack.c.l.b16 %v2840
        %v2976 = vunpack.c.l.b16 %v2841
        %v2977 = vunpack.c.l.b16 %v2842
        %v2978 = vunpack.c.l.b16 %v2843
        %v2979 = vunpack.c.l.b16 %v2844
        %v2980 = vunpack.c.l.b16 %v2845
        %v2981 = vunpack.c.l.b16 %v2846
        %v2982 = vunpack.c.l.b16 %v2847
        %v2983 = vunpack.c.l.b16 %v2848
        %v2984 = vunpack.c.l.b16 %v2849
        %v2985 = vunpack.c.l.b16 %v2850
        %v2986 = vunpack.c.l.b16 %v2851
        %v2987 = vunpack.c.l.b16 %v2852
        %v2988 = vpack.c.b16 %v2925, %v2924
        %v2989 = vpack.c.b16 %v2927, %v2926
        %v2990 = vpack.c.b16 %v2929, %v2928
        %v2991 = vpack.c.b16 %v2931, %v2930
        %v2992 = vpack.c.b16 %v2933, %v2932
        %v2993 = vpack.c.b16 %v2935, %v2934
        %v2994 = vpack.c.b16 %v2937, %v2936
        %v2995 = vpack.c.b16 %v2939, %v2938
        %v2996 = vpack.c.b16 %v2941, %v2940
        %v2997 = vpack.c.b16 %v2943, %v2942
        %v2998 = vpack.c.b16 %v2945, %v2944
        %v2999 = vpack.c.b16 %v2947, %v2946
        %v3000 = vpack.c.b16 %v2949, %v2948
        %v3001 = vpack.c.b16 %v2951, %v2950
        %v3002 = vpack.c.b16 %v2953, %v2952
        %v3003 = vpack.c.b16 %v2955, %v2954
        %v3004 = vpack.c.b16 %v2957, %v2956
        %v3005 = vpack.c.b16 %v2959, %v2958
        %v3006 = vpack.c.b16 %v2961, %v2960
        %v3007 = vpack.c.b16 %v2963, %v2962
        %v3008 = vpack.c.b16 %v2965, %v2964
        %v3009 = vpack.c.b16 %v2967, %v2966
        %v3010 = vpack.c.b16 %v2969, %v2968
        %v3011 = vpack.c.b16 %v2971, %v2970
        %v3012 = vpack.c.b16 %v2973, %v2972
        %v3013 = vpack.c.b16 %v2975, %v2974
        %v3014 = vpack.c.b16 %v2977, %v2976
        %v3015 = vpack.c.b16 %v2979, %v2978
        %v3016 = vpack.c.b16 %v2981, %v2980
        %v3017 = vpack.c.b16 %v2983, %v2982
        %v3018 = vpack.c.b16 %v2985, %v2984
        %v3019 = vpack.c.b16 %v2987, %v2986
        %3052 = vmatprep.subr.bf16.mxu0 0
        %3053 = vmatpush1.bf16.msra.mxu0 %v2995
        %3054 = vmatprep.subr.bf16.mxu0 0
        %3055 = vmatpush1.bf16.msra.mxu0 %v2994
        %3056 = vmatprep.subr.bf16.mxu0 0
        %3057 = vmatpush1.bf16.msra.mxu0 %v2993
        %3058 = vmatprep.subr.bf16.mxu0 0
        %3059 = vmatpush1.bf16.msra.mxu0 %v2992
        %3060 = vmatprep.subr.bf16.mxu0 0
        %3061 = vmatpush1.bf16.msra.mxu0 %v2991
        %3062 = vmatprep.subr.bf16.mxu0 0
        %3063 = vmatpush1.bf16.msra.mxu0 %v2990
        %3064 = vmatprep.subr.bf16.mxu0 0
        %3065 = vmatpush1.bf16.msra.mxu0 %v2989
        %3066 = vmatprep.subr.bf16.mxu0 0
        %3067 = vmatpush1.bf16.msra.mxu0 %v2988
        %3068 = vmatprep.subr.bf16.mxu0 0
        %3069 = vmatpush2.bf16.msra.mxu0 %v3003
        %3070 = vmatprep.subr.bf16.mxu0 0
        %3071 = vmatpush2.bf16.msra.mxu0 %v3002
        %3072 = vmatprep.subr.bf16.mxu0 0
        %3073 = vmatpush2.bf16.msra.mxu0 %v3001
        %3074 = vmatprep.subr.bf16.mxu0 0
        %3075 = vmatpush2.bf16.msra.mxu0 %v3000
        %3076 = vmatprep.subr.bf16.mxu0 0
        %3077 = vmatpush2.bf16.msra.mxu0 %v2999
        %3078 = vmatprep.subr.bf16.mxu0 0
        %3079 = vmatpush2.bf16.msra.mxu0 %v2998
        %3080 = vmatprep.subr.bf16.mxu0 0
        %3081 = vmatpush2.bf16.msra.mxu0 %v2997
        %3082 = vmatprep.subr.bf16.mxu0 0
        %3083 = vmatpush2.bf16.msra.mxu0 %v2996
        %3084 = vmatprep.mubr.bf16.mxu0 %v2786
        %3085 = vmatmul.mubr.bf16.gmra.mxu0 %v2785
        %v3086 = vpop.f32.mrf.mxu0
        %v3087 = vadd.f32 %v2858, %v3086
        %v3088 = vpop.f32.mrf.mxu0
        %v3089 = vpop.f32.mrf.mxu0
        %v3090 = vadd.f32 %v2858, %v3089
        %v3091 = vpop.f32.mrf.mxu0
        %3092 = vdwg.mxu0
        %3093 = vmatprep.subr.bf16.mxu0 0
        %3094 = vmatpush1.bf16.msra.mxu0 %v3011
        %3095 = vmatprep.subr.bf16.mxu0 0
        %3096 = vmatpush1.bf16.msra.mxu0 %v3010
        %3097 = vmatprep.subr.bf16.mxu0 0
        %3098 = vmatpush1.bf16.msra.mxu0 %v3009
        %3099 = vmatprep.subr.bf16.mxu0 0
        %3100 = vmatpush1.bf16.msra.mxu0 %v3008
        %3101 = vmatprep.subr.bf16.mxu0 0
        %3102 = vmatpush1.bf16.msra.mxu0 %v3007
        %3103 = vmatprep.subr.bf16.mxu0 0
        %3104 = vmatpush1.bf16.msra.mxu0 %v3006
        %3105 = vmatprep.subr.bf16.mxu0 0
        %3106 = vmatpush1.bf16.msra.mxu0 %v3005
        %3107 = vmatprep.subr.bf16.mxu0 0
        %3108 = vmatpush1.bf16.msra.mxu0 %v3004
        %3109 = vmatprep.subr.bf16.mxu0 0
        %3110 = vmatpush2.bf16.msra.mxu0 %v3019
        %3111 = vmatprep.subr.bf16.mxu0 0
        %3112 = vmatpush2.bf16.msra.mxu0 %v3018
        %3113 = vmatprep.subr.bf16.mxu0 0
        %3114 = vmatpush2.bf16.msra.mxu0 %v3017
        %3115 = vmatprep.subr.bf16.mxu0 0
        %3116 = vmatpush2.bf16.msra.mxu0 %v3016
        %3117 = vmatprep.subr.bf16.mxu0 0
        %3118 = vmatpush2.bf16.msra.mxu0 %v3015
        %3119 = vmatprep.subr.bf16.mxu0 0
        %3120 = vmatpush2.bf16.msra.mxu0 %v3014
        %3121 = vmatprep.subr.bf16.mxu0 0
        %3122 = vmatpush2.bf16.msra.mxu0 %v3013
        %3123 = vmatprep.subr.bf16.mxu0 0
        %3124 = vmatpush2.bf16.msra.mxu0 %v3012
        %3125 = vmatprep.mubr.bf16.mxu0 %v2788
        %3126 = vmatmul.mubr.bf16.gmra.mxu0 %v2787
        %v3127 = vpop.f32.mrf.mxu0
        %v3128 = vadd.f32 %v3087, %v3127
        %v3129 = vpop.f32.mrf.mxu0
        %v3130 = vpop.f32.mrf.mxu0
        %v3131 = vadd.f32 %v3090, %v3130
        %v3132 = vpop.f32.mrf.mxu0
        %3133 = vdwg.mxu0
        %v3134 = vadd.f32 %v2370, %v3128
        %v3135 = vadd.f32 %v2371, %v3131
        %3136 = vst [vmem:[#allocation2] sm:$0xff] %v3134
        %3137 = vst [vmem:[#allocation2 + $0x8] sm:$0xff] %v3135
        %p3138 = scmp.eq.s32.totalorder %s53, 2
        // Predicated region
        $region141: #{embed_part_forward.3} parent=87 // pred_check
          %p3139 = pneg %p3138
        $region142: #{embed_part_forward.3} parent=87 // pred_check_branch
          %3141 = sbr.rel (%p3139) target = $region144
        $region143: #{embed_part_forward.3} parent=87 // pred_region
          %v3142 = vld [vmem:[%s15] sm:$0x1]
          %v3143 = vld [vmem:[#allocation21] sm:$0x1]
          %3144 = vadd.xlane.f32.xlu0 %v3134
          %v3145 = vpop.xlane.xlu0 %3144
          %3146 = vadd.xlane.f32.xlu0 %v3135
          %v3147 = vpop.xlane.xlu0 %3146
          %v3148 = vmul.f32 %v3145, %v1031
          %v3149 = vmul.f32 %v3147, %v1031
          %v3150 = vsub.f32 %v3134, %v3148
          %v3151 = vsub.f32 %v3135, %v3149
          %v3152 = vmul.f32 %v3150, %v3150
          %v3153 = vmul.f32 %v3151, %v3151
          %3154 = vadd.xlane.f32.xlu0 %v3152
          %v3155 = vpop.xlane.xlu0 %3154
          %3156 = vadd.xlane.f32.xlu0 %v3153
          %v3157 = vpop.xlane.xlu0 %3156
          %v3158 = vmul.f32 %v3155, %v1031
          %v3159 = vmul.f32 %v3157, %v1031
          %v3160 = vadd.f32 %v3158, 1e-05
          %v3161 = vadd.f32 %v3159, 1e-05
          %v3162 = vrsqrt.pop %v3160
          %v3163 = vrsqrt.pop %v3161
          %v3164 = vmul.f32 %v3150, %v3162
          %v3165 = vmul.f32 %v3151, %v3163
          %v3167 = vlaneseq
          %v3168 = vshrl.u32 %v3167, 7
          %v3169 = vsub.s32 0, %v3168
          %v3170 = vrot.slane %v3142, %v3169
          %v3172 = vmul.f32 %v3164, %v3170
          %v3173 = vmul.f32 %v3165, %v3170
          %v3175 = vlaneseq
          %v3176 = vshrl.u32 %v3175, 7
          %v3177 = vsub.s32 0, %v3176
          %v3178 = vrot.slane %v3143, %v3177
          %v3180 = vadd.f32 %v3172, %v3178
          %v3181 = vadd.f32 %v3173, %v3178
          %v3182 = vld [vmem:[%s1006] sm:$0xff]
          %v3183 = vld [vmem:[%s1006 + $0x8] sm:$0xff]
          %3185 = vset.pattern.permute.xlu0 0
          %3186 = vperm.xlu0 %3185, %v3182
          %v3187 = vpop.permute.xlu0 %3186
          %3190 = vset.pattern.permute.xlu0 0
          %3191 = vperm.xlu0 %3190, %v3183
          %v3192 = vpop.permute.xlu0 %3191
          %v3194 = vmul.f32 %v3180, %v3187
          %v3195 = vmul.f32 %v3181, %v3192
          %3196 = vst [vmem:[#allocation23] sm:$0xff] %v3194
          %3197 = vst [vmem:[#allocation23 + $0x8] sm:$0xff] %v3195
        $region144: #{embed_part_forward.3} parent=87 // pred_fallthru
          _
        // Predicated region
        $region145: #{embed_part_forward.3} parent=87 // pred_check
          %p3198 = pneg %p510
        $region146: #{embed_part_forward.3} parent=87 // pred_check_branch
          %3200 = sbr.rel (%p3198) target = $region148
        $region147: #{embed_part_forward.3} parent=87 // pred_region
          %s3201 = smul.u32 2, %s52
          %s3203 = ssub.s32 256, 256
          %3204 = vsyncadd [#allocation5], %s3203
          %s3205 = smul.addr %s3201, 128
          %s3206 = scalar_lea.hbm %s17, %s3205
          %s3207 = sshll.u32 [#allocation23], 4
          %s3208 = int_to_ptr.vmem [resolvable:$true] %s3207
          %3213 = dma.vmem_to_hbm [thread:$0]  %s3208, 256, %s3206, [#allocation5], 128, 128, 8
        $region148: #{embed_part_forward.3} parent=87 // pred_fallthru
          _
        // Predicated region
        $region149: #{embed_part_forward.3} parent=87 // pred_check
          %p3214 = pneg %p510
        $region150: #{embed_part_forward.3} parent=87 // pred_check_branch
          %3216 = sbr.rel (%p3214) target = $region152
        $region151: #{embed_part_forward.3} parent=87 // pred_region
          %3217 = dma.done [#allocation5], 256
        $region152: #{embed_part_forward.3} parent=87 // pred_fallthru
          _
      $region88: #{embed_part_forward.3} parent=5 // pred_fallthru
        _
      %p3218 = scmp.le.s32.totalorder 2, %s43
      // Predicated region
      $region153: #{embed_part_forward.3} parent=5 // pred_check
        %p3219 = pneg %p3218
      $region154: #{embed_part_forward.3} parent=5 // pred_check_branch
        %3221 = sbr.rel (%p3219) target = $region156
      $region155: #{embed_part_forward.3} parent=5 // pred_region
        %s3222 = ssub.s32 %s43, 2
      $region156: #{embed_part_forward.3} parent=5 // pred_fallthru
        _
    $region6: #{embed_part_forward.3} parent=1 // loop_footer
      %s47 = sadd.s32 1, %s43
    $region7: #{embed_part_forward.3} parent=1 // loop_footer_branch
      %42 = sbr.rel target = $region3
    $region8: #{embed_part_forward.3} parent=1 // loop_exit
      _
    %3223 = vsyncpa [#allocation4], 1
    %s3224 = scalar_lea.sflag [#allocation4], 1
    %3225 = vsyncpa %s3224, 1
    %3226 = vsyncpa [#allocation7], 1
    %s3227 = scalar_lea.sflag [#allocation7], 1
    %3228 = vsyncpa %s3227, 1
    %3229 = vsyncpa [#allocation10], 1
    %s3230 = scalar_lea.sflag [#allocation10], 1
    %3231 = vsyncpa %s3230, 1
    %3232 = vsyncpa [#allocation13], 1
    %s3233 = scalar_lea.sflag [#allocation13], 1
    %3234 = vsyncpa %s3233, 1
    %3235 = vsyncpa [#allocation16], 1
    %s3236 = scalar_lea.sflag [#allocation16], 1
    %3237 = vsyncpa %s3236, 1
    %3238 = vsyncpa [#allocation19], 1
    %s3239 = scalar_lea.sflag [#allocation19], 1
    %3240 = vsyncpa %s3239, 1
    %3241 = vsyncpa [#allocation22], 1
    %3242 = vsyncpa [#allocation5], 1
    %s3243 = scalar_lea.sflag [#allocation5], 1
    %3244 = vsyncpa %s3243, 1

</llo_original>
